<compile_context>
chip_gen: v7x
topology: tpu7x:2x2x1
jax: 0.10.0
libtpu: 0.0.40
codegen_flags: <defaults>
</compile_context>

<pallas_src>
import functools
import math

import jax
import jax.numpy as jnp
from jax import lax
from jax.experimental import pallas as pl
from jax.experimental.pallas import tpu as pltpu


# ----------------------------------------------------------------------------
# Pallas kernel: both LSTM directions of one layer, streamed over time blocks.
#
# Grid = (2, num_time_blocks); axis 0 = direction (0 fwd, 1 bwd, "parallel"),
# axis 1 walks the sequence ("arbitrary": h/c carried in VMEM scratch).
#
# Refs (per grid step):
#   len_ref : (B, 1)              int32  sequence lengths (padded rows = 0)
#   x_ref   : (S, T_blk, B, Ds)   f32    input slabs (S=1 raw input, S=2 the
#                                        previous layer's fwd/bwd outputs)
#   wih_ref : (1, S, Ds, 4H)      bf16   this direction's input weights [i|f|o|g]
#   whh_ref : (1, H, 4H)          bf16   this direction's recurrent weights
#   b_ref   : (1, 1, 4H)          f32    fused bias (b_ih + b_hh)
#   out_ref : (1, T_blk, B, H)    f32    hidden states for this time block
#   hT_ref  : (1, B, H)           f32    final hidden state of this direction
#   cT_ref  : (1, B, H)           f32    final cell state of this direction
# Scratch:
#   h_sc, c_sc : (B, H)           f32    recurrent carry across time blocks
#   xw_sc      : (T_blk, B, 4H)   f32    (only for the non-unrolled path)
# ----------------------------------------------------------------------------
def _lstm_body(len_ref, x_ref, wih_ref, whh_ref, b_ref,
               out_ref, hT_ref, cT_ref, h_sc, c_sc, xw_sc, *, unrolled):
    d = pl.program_id(0)            # 0 = forward, 1 = backward
    tb = pl.program_id(1)           # grid step along the time axis
    n_tb = pl.num_programs(1)
    S, t_blk, B, Ds = x_ref.shape
    H = whh_ref.shape[1]

    # (re)initialize the recurrent carry at the start of each direction sweep
    @pl.when(tb == 0)
    def _():
        h_sc[...] = jnp.zeros_like(h_sc)
        c_sc[...] = jnp.zeros_like(c_sc)

    # Hoisted input projection + fused bias for the whole time block: one
    # lane-dense (T_blk*B, Ds) @ (Ds, 4H) bf16 MXU matmul per input slab.
    # Summing the slabs == multiplying the concatenated previous-layer
    # directions, so no (T, B, 2H) concat is ever materialized in HBM.
    x_blk = x_ref[...]
    proj = None
    for s in range(S):
        m = jnp.dot(x_blk[s].reshape(t_blk * B, Ds).astype(jnp.bfloat16),
                    wih_ref[0, s], preferred_element_type=jnp.float32)
        proj = m if proj is None else proj + m
    xw = (proj + b_ref[0]).reshape(t_blk, B, 4 * H)

    whh = whh_ref[0]                # (H, 4H) bf16, loop-invariant
    lens = len_ref[...]             # (B, 1)  int32, loop-invariant

    # Physical time block covered by this grid step (reversed sweep for bwd).
    blk = (1 - d) * tb + d * (n_tb - 1 - tb)
    t0 = blk * t_blk

    def cell(h, c, sl, zx):
        # fused pre-activations: ONE (B, H) @ (H, 4H) bf16 MXU matmul per
        # step with f32 accumulation; h/c carries stay f32.
        z = zx + jnp.dot(h.astype(jnp.bfloat16), whh,
                         preferred_element_type=jnp.float32)
        # gate order [i|f|o|g]: single sigmoid over 3H lanes, tanh over H.
        zs = jax.nn.sigmoid(z[:, :3 * H])
        i_g = zs[:, 0 * H:1 * H]
        f_g = zs[:, 1 * H:2 * H]
        o_g = zs[:, 2 * H:3 * H]
        g_g = jnp.tanh(z[:, 3 * H:])
        c_new = f_g * c + i_g * g_g
        h_new = o_g * jnp.tanh(c_new)
        # packed-sequence semantics: rows with t >= length keep their state
        # and emit exactly zero at padded positions.
        # TODO(synk): with H not a multiple of 128 (as in the small demo) these
        # stores are masked vst.msk; pad H to a lane multiple for production.
        mask = lens > (t0 + sl)
        out_ref[0, sl] = jnp.where(mask, h_new, jnp.zeros_like(h_new))
        return jnp.where(mask, h_new, h), jnp.where(mask, c_new, c)

    if unrolled:
        # Small blocks: fully static unroll per direction, so xw is sliced
        # directly out of vregs (no VMEM scratch round-trip inside the serial
        # recurrence loop).
        def sweep(reverse):
            def body():
                h, c = h_sc[...], c_sc[...]
                order = range(t_blk - 1, -1, -1) if reverse else range(t_blk)
                for sl in order:
                    h, c = cell(h, c, sl, xw[sl])
                h_sc[...] = h
                c_sc[...] = c
            return body

        pl.when(d == 0)(sweep(False))
        pl.when(d == 1)(sweep(True))
    else:
        xw_sc[...] = xw

        def step(s, carry):
            h, c = carry
            # local index inside the block; bwd direction walks it in reverse
            sl = (1 - d) * s + d * (t_blk - 1 - s)
            return cell(h, c, sl, xw_sc[sl])

        h, c = lax.fori_loop(0, t_blk, step, (h_sc[...], c_sc[...]),
                             unroll=min(8, t_blk))
        h_sc[...] = h
        c_sc[...] = c

    # Only the last time block's carry matters; gate the (B, H) stores so they
    # do not burn vst slots on every grid step.
    @pl.when(tb == n_tb - 1)
    def _():
        hT_ref[0] = h_sc[...]
        cT_ref[0] = c_sc[...]


def _make_lstm_kernel(unrolled):
    if unrolled:
        def kernel(len_ref, x_ref, wih_ref, whh_ref, b_ref,
                   out_ref, hT_ref, cT_ref, h_sc, c_sc):
            _lstm_body(len_ref, x_ref, wih_ref, whh_ref, b_ref,
                       out_ref, hT_ref, cT_ref, h_sc, c_sc, None,
                       unrolled=True)
    else:
        def kernel(len_ref, x_ref, wih_ref, whh_ref, b_ref,
                   out_ref, hT_ref, cT_ref, h_sc, c_sc, xw_sc):
            _lstm_body(len_ref, x_ref, wih_ref, whh_ref, b_ref,
                       out_ref, hT_ref, cT_ref, h_sc, c_sc, xw_sc,
                       unrolled=False)
    return kernel


def _pick_vmem_limit():
    # v5e/v6e have 128 MiB physical VMEM per TensorCore, v7x has 64 MiB; the
    # 32 MiB scoped default (sized for v7x) needlessly caps block sizes on the
    # larger parts.  Fall back to the known-safe 32 MiB if the query fails.
    try:
        cap = int(pltpu.get_tpu_info().vmem_capacity_bytes)
        return min(cap * 3 // 4, 100 * 1024 * 1024)
    except Exception:
        return 32 * 1024 * 1024


def bidir_lstm_layer(x_slabs, len_col, wih, whh, b, *, t_blk,
                     unroll_static=None, vmem_limit_bytes=None):
    """One bidirectional LSTM layer (both directions in one pallas_call).

    x_slabs: (S, T_pad, B_pad, Ds) f32 — S=1 for the raw input, S=2 for the
             previous layer's two direction slabs (replaces the concatenated
             (T, B, 2H) input -> no XLA concat between layers).
    len_col: (B_pad, 1) int32 lengths (padded rows = 0)
    wih: (2, S, Ds, 4H) bf16, whh: (2, H, 4H) bf16, b: (2, 1, 4H) f32
    Returns (out (2, T_pad, B_pad, H), hT (2, B_pad, H), cT (2, B_pad, H)).
    """
    S, T_pad, B_pad, Ds = x_slabs.shape
    H = whh.shape[1]
    n_tb = T_pad // t_blk
    if unroll_static is None:
        unroll_static = t_blk <= 16
    if vmem_limit_bytes is None:
        vmem_limit_bytes = _pick_vmem_limit()

    def blk_idx(d, tb):             # reversed time-block order for d == 1
        return (1 - d) * tb + d * (n_tb - 1 - tb)

    scratch = [pltpu.VMEM((B_pad, H), jnp.float32),            # h carry
               pltpu.VMEM((B_pad, H), jnp.float32)]            # c carry
    if not unroll_static:
        scratch.append(pltpu.VMEM((t_blk, B_pad, 4 * H), jnp.float32))

    # TODO(synk): single-buffer the weight specs (pipeline_mode=pl.Buffered(1))
    # once verified on the target jax build — their block index depends only on
    # d, so double-buffering them just doubles weight VMEM (matters for
    # layer>=1 at large H on v7x's 64 MiB VMEM).
    out, hT, cT = pl.pallas_call(
        _make_lstm_kernel(unroll_static),
        out_shape=(
            jax.ShapeDtypeStruct((2, T_pad, B_pad, H), jnp.float32),
            jax.ShapeDtypeStruct((2, B_pad, H), jnp.float32),
            jax.ShapeDtypeStruct((2, B_pad, H), jnp.float32),
        ),
        grid_spec=pltpu.PrefetchScalarGridSpec(
            num_scalar_prefetch=0,
            grid=(2, n_tb),
            in_specs=[
                pl.BlockSpec((B_pad, 1), lambda d, tb: (0, 0)),
                pl.BlockSpec((S, t_blk, B_pad, Ds),
                             lambda d, tb: (0, blk_idx(d, tb), 0, 0)),
                pl.BlockSpec((1, S, Ds, 4 * H), lambda d, tb: (d, 0, 0, 0)),
                pl.BlockSpec((1, H, 4 * H), lambda d, tb: (d, 0, 0)),
                pl.BlockSpec((1, 1, 4 * H), lambda d, tb: (d, 0, 0)),
            ],
            out_specs=(
                pl.BlockSpec((1, t_blk, B_pad, H),
                             lambda d, tb: (d, blk_idx(d, tb), 0, 0)),
                pl.BlockSpec((1, B_pad, H), lambda d, tb: (d, 0, 0)),
                pl.BlockSpec((1, B_pad, H), lambda d, tb: (d, 0, 0)),
            ),
            scratch_shapes=scratch,
        ),
        compiler_params=pltpu.CompilerParams(
            # TODO(synk): on v7x use pltpu.CORE_PARALLEL on axis 0 so the two
            # directions genuinely shard across the 2 TensorCores; on single-TC
            # v5e/v6e fuse both directions into one time sweep instead.
            dimension_semantics=("parallel", "arbitrary"),
            vmem_limit_bytes=vmem_limit_bytes,
        ),
    )(len_col, x_slabs, wih, whh, b)
    return out, hT, cT


# ----------------------------------------------------------------------------
# Encoder forward (glue in plain JAX, recurrence hot-path in the kernel).
# ----------------------------------------------------------------------------
def encoder_forward(x, lengths, kernel_params, *, t_blk=None, unroll_static=None):
    """x: (B, T, D_in) batch-first; lengths: (B,).
    Returns (o, (h, c)); o is (B, T, 2H) — caller trims to max(lengths)."""
    B, T, _ = x.shape
    H = kernel_params[0]["whh"].shape[1]
    B_pad = ((B + 7) // 8) * 8                     # f32 sublane tile
    if t_blk is None:
        # Amortize the ~0.35us per-grid-step cost and feed the MXU >= 256 rows
        # in the hoisted input-projection matmul; VMEM per block stays small.
        t_blk = max(8, 256 // B_pad)
    t_blk = min(t_blk, T)
    T_pad = ((T + t_blk - 1) // t_blk) * t_blk
    vmem_limit = _pick_vmem_limit()

    lengths = lengths.astype(jnp.int32)
    # time-major once at entry; pad batch (length-0 rows stay zero) and time.
    x_tm = jnp.transpose(x, (1, 0, 2))
    x_tm = jnp.pad(x_tm, ((0, T_pad - T), (0, B_pad - B), (0, 0)))
    len_col = jnp.pad(lengths, (0, B_pad - B)).reshape(B_pad, 1)

    layer_in = x_tm[None]                          # (1, T_pad, B_pad, D_in)
    h_list, c_list = [], []
    for p in kernel_params:
        out, hT, cT = bidir_lstm_layer(layer_in, len_col, p["wih"], p["whh"],
                                       p["b"], t_blk=t_blk,
                                       unroll_static=unroll_static,
                                       vmem_limit_bytes=vmem_limit)
        # Next layer consumes the two direction slabs directly (its kernel
        # splits the input projection over them) -> NO jnp.concatenate / extra
        # HBM round-trip between layers.
        layer_in = out
        h_list += [hT[0], hT[1]]
        c_list += [cT[0], cT[1]]

    # back to batch-first once at exit; this single transpose also realizes
    # the (fwd | bwd) feature concat of the final output.
    o = jnp.transpose(layer_in, (2, 1, 0, 3)).reshape(B_pad, T_pad, 2 * H)
    o = o[:B, :T]
    h = jnp.stack(h_list, axis=0)[:, :B, :]        # [l0_fwd, l0_bwd, l1_fwd, l1_bwd]
    c = jnp.stack(c_list, axis=0)[:, :B, :]
    return o, (h, c)


# ----------------------------------------------------------------------------
# Parameter init (same shapes / init range as nn.LSTM; gates fused [i|f|o|g]).
# ----------------------------------------------------------------------------
def init_lstm_params(key, input_dim, hidden_dim, num_layers):
    """Canonical f32 parameters (ground truth for the reference)."""
    k = 1.0 / math.sqrt(hidden_dim)
    params = []
    for layer in range(num_layers):
        d_in = input_dim if layer == 0 else 2 * hidden_dim
        key, k1, k2, k3, k4 = jax.random.split(key, 5)
        wih = jax.random.uniform(k1, (2, d_in, 4 * hidden_dim), jnp.float32, -k, k)
        whh = jax.random.uniform(k2, (2, hidden_dim, 4 * hidden_dim), jnp.float32, -k, k)
        b_ih = jax.random.uniform(k3, (2, 1, 4 * hidden_dim), jnp.float32, -k, k)
        b_hh = jax.random.uniform(k4, (2, 1, 4 * hidden_dim), jnp.float32, -k, k)
        params.append({"wih": wih, "whh": whh, "b": b_ih + b_hh})
    return params


def prep_kernel_params(params):
    """Kernel layout: W_ih split into per-direction-slab blocks of the input
    feature axis and cast to bf16 (MXU-native, halves weight HBM/VMEM); the
    recurrent weights are bf16 too; bias stays f32."""
    kparams = []
    for layer, p in enumerate(params):
        d_in, four_h = p["wih"].shape[1], p["wih"].shape[2]
        s = 1 if layer == 0 else 2
        kparams.append({
            "wih": p["wih"].reshape(2, s, d_in // s, four_h).astype(jnp.bfloat16),
            "whh": p["whh"].astype(jnp.bfloat16),
            "b": p["b"].astype(jnp.float32),
        })
    return kparams


# ----------------------------------------------------------------------------
# Pure-JAX f32 reference (no Pallas) mirroring PyTorch's packed bidir LSTM.
# ----------------------------------------------------------------------------
def _encoder_ref(x, lengths, params):
    B, T, _ = x.shape
    H = params[0]["whh"].shape[1]
    hp = jax.lax.Precision.HIGHEST
    layer_in = x
    h_all, c_all = [], []
    for p in params:
        outs = []
        for d in range(2):
            w_ih, w_hh, b = p["wih"][d], p["whh"][d], p["b"][d]
            h = jnp.zeros((B, H), jnp.float32)
            c = jnp.zeros((B, H), jnp.float32)
            out = jnp.zeros((B, T, H), jnp.float32)
            steps = range(T) if d == 0 else range(T - 1, -1, -1)
            for t in steps:
                z = (jnp.dot(layer_in[:, t, :], w_ih, precision=hp)
                     + jnp.dot(h, w_hh, precision=hp) + b)
                i_g = jax.nn.sigmoid(z[:, :H])
                f_g = jax.nn.sigmoid(z[:, H:2 * H])
                o_g = jax.nn.sigmoid(z[:, 2 * H:3 * H])
                g_g = jnp.tanh(z[:, 3 * H:])
                c_new = f_g * c + i_g * g_g
                h_new = o_g * jnp.tanh(c_new)
                m = (lengths > t)[:, None]
                h = jnp.where(m, h_new, h)
                c = jnp.where(m, c_new, c)
                out = out.at[:, t, :].set(jnp.where(m, h_new, 0.0))
            outs.append(out)
            h_all.append(h)
            c_all.append(c)
        layer_in = jnp.concatenate(outs, axis=-1)
    return layer_in, (jnp.stack(h_all), jnp.stack(c_all))


if __name__ == "__main__":
    B, T, INPUT_DIM, HIDDEN_DIM, NUM_LAYERS = 2, 8, 16, 32, 2

    key = jax.random.PRNGKey(0)
    kx, kp = jax.random.split(key)
    x = jax.random.normal(kx, (B, T, INPUT_DIM), dtype=jnp.float32)
    lengths = jnp.array([8, 5], dtype=jnp.int32)   # variable-length sequences

    params = init_lstm_params(kp, INPUT_DIM, HIDDEN_DIM, NUM_LAYERS)
    kparams = prep_kernel_params(params)

    # f32 reference of the same recurrence (packed-LSTM semantics).
    o_ref, (h_ref, c_ref) = _encoder_ref(x, lengths, params)
    # pad_packed_sequence pads only up to max(lengths): trim once on the host,
    # outside the jitted program (no device->host sync inside the trace).
    t_max = int(jnp.max(lengths))
    o_ref = o_ref[:, :t_max, :]

    # exercise both in-kernel recurrence paths (static unroll and the
    # fori_loop + VMEM xw scratch path); t_blk=4 also exercises the h/c carry
    # across time blocks and the reversed backward block order.
    for unroll_static in (True, False):
        run = jax.jit(functools.partial(encoder_forward, t_blk=4,
                                        unroll_static=unroll_static))
        o_full, (h, c) = run(x, lengths, kparams)
        jax.block_until_ready((o_full, h, c))
        o = o_full[:, :t_max, :]

        assert o.shape == (B, t_max, 2 * HIDDEN_DIM)
        assert h.shape == (NUM_LAYERS * 2, B, HIDDEN_DIM)
        assert c.shape == (NUM_LAYERS * 2, B, HIDDEN_DIM)
        # packed-sequence check: outputs at padded positions are exactly zero
        assert float(jnp.abs(o[1, int(lengths[1]):, :]).max()) == 0.0
        # tolerances sized for bf16 matmul operands (f32 accumulation, f32
        # h/c carries) against the all-f32 reference.
        assert float(jnp.max(jnp.abs(o - o_ref))) < 3e-2
        assert float(jnp.max(jnp.abs(h - h_ref))) < 3e-2
        assert float(jnp.max(jnp.abs(c - c_ref))) < 3e-2
        assert float(jnp.mean(jnp.abs(o - o_ref))) < 3e-3

    print("KERNEL_OK")
</pallas_src>

<mosaic_0001>
module attributes {stable_mosaic.version = 11 : i64} {
  func.func @kernel(%arg0: i32, %arg1: i32, %arg2: memref<8x1xi32, #tpu.memory_space<vmem>>, %arg3: memref<2x4x8x32xf32, #tpu.memory_space<vmem>>, %arg4: memref<1x2x32x128xbf16, #tpu.memory_space<vmem>>, %arg5: memref<1x32x128xbf16, #tpu.memory_space<vmem>>, %arg6: memref<1x1x128xf32, #tpu.memory_space<vmem>>, %arg7: memref<1x4x8x32xf32, #tpu.memory_space<vmem>>, %arg8: memref<1x8x32xf32, #tpu.memory_space<vmem>>, %arg9: memref<1x8x32xf32, #tpu.memory_space<vmem>>, %arg10: memref<8x32xf32, #tpu.memory_space<vmem>>, %arg11: memref<8x32xf32, #tpu.memory_space<vmem>>) attributes {dimension_semantics = [#tpu.dimension_semantics<parallel>, #tpu.dimension_semantics<arbitrary>], iteration_bounds = array<i64: 2, 2>, scalar_prefetch = 0 : i64, scratch_operands = 2 : i64, tpu.core_type = #tpu.core_type<tc>, window_params = [{pipeline_mode = #tpu.pipeline_mode<synchronous>, transform_indices = @transform_0, window_bounds = array<i64: 8, 1>}, {transform_indices = @transform_1, window_bounds = array<i64: 2, 4, 8, 32>}, {transform_indices = @transform_2, window_bounds = array<i64: 1, 2, 32, 128>}, {transform_indices = @transform_3, window_bounds = array<i64: 1, 32, 128>}, {transform_indices = @transform_4, window_bounds = array<i64: 1, 1, 128>}, {transform_indices = @transform_5, window_bounds = array<i64: 1, 4, 8, 32>}, {transform_indices = @transform_6, window_bounds = array<i64: 1, 8, 32>}, {transform_indices = @transform_7, window_bounds = array<i64: 1, 8, 32>}]} {
    %c0_i32 = arith.constant 0 : i32
    %0 = arith.cmpi eq, %arg1, %c0_i32 : i32
    %1 = arith.extui %0 : i1 to i32
    %c0_i32_0 = arith.constant 0 : i32
    %2 = arith.cmpi ne, %1, %c0_i32_0 : i32
    scf.if %2 {
      %cst_27 = arith.constant 0.000000e+00 : f32
      %42 = vector.broadcast %cst_27 : f32 to vector<8x32xf32>
      %c0_28 = arith.constant 0 : index
      %c0_29 = arith.constant 0 : index
      %43 = vector.load %arg10[%c0_28, %c0_29] : memref<8x32xf32, #tpu.memory_space<vmem>>, vector<8x32xf32>
      tpu.vector_store %arg10[%c0_28, %c0_29], %42 {strides = array<i32>} : memref<8x32xf32, #tpu.memory_space<vmem>>, vector<8x32xf32>,
      %cst_30 = arith.constant 0.000000e+00 : f32
      %44 = vector.broadcast %cst_30 : f32 to vector<8x32xf32>
      %c0_31 = arith.constant 0 : index
      %c0_32 = arith.constant 0 : index
      %45 = vector.load %arg11[%c0_31, %c0_32] : memref<8x32xf32, #tpu.memory_space<vmem>>, vector<8x32xf32>
      tpu.vector_store %arg11[%c0_31, %c0_32], %44 {strides = array<i32>} : memref<8x32xf32, #tpu.memory_space<vmem>>, vector<8x32xf32>,
    } else {
    }
    %c0 = arith.constant 0 : index
    %c0_1 = arith.constant 0 : index
    %c0_2 = arith.constant 0 : index
    %c0_3 = arith.constant 0 : index
    %3 = vector.load %arg3[%c0, %c0_1, %c0_2, %c0_3] : memref<2x4x8x32xf32, #tpu.memory_space<vmem>>, vector<2x4x8x32xf32>
    %4 = vector.extract_strided_slice %3 {offsets = [0, 0, 0, 0], sizes = [1, 4, 8, 32], strides = [1, 1, 1, 1]} : vector<2x4x8x32xf32> to vector<1x4x8x32xf32>
    %5 = vector.shape_cast %4 : vector<1x4x8x32xf32> to vector<4x8x32xf32>
    %6 = vector.shape_cast %5 : vector<4x8x32xf32> to vector<32x32xf32>
    %7 = arith.truncf %6 : vector<32x32xf32> to vector<32x32xbf16>
    %c0_4 = arith.constant 0 : index
    %c0_5 = arith.constant 0 : index
    %c0_6 = arith.constant 0 : index
    %c0_7 = arith.constant 0 : index
    %8 = vector.load %arg4[%c0_4, %c0_5, %c0_6, %c0_7] : memref<1x2x32x128xbf16, #tpu.memory_space<vmem>>, vector<1x1x32x128xbf16>
    %9 = vector.shape_cast %8 : vector<1x1x32x128xbf16> to vector<32x128xbf16>
    %cst = arith.constant dense<0.000000e+00> : vector<32x128xf32>
    %10 = tpu.matmul %7, %9, %cst {dimension_numbers = #tpu.dot_dimension_numbers<[1], [0], [0], [1], [0, 0, 1, 1], [], []>} : vector<32x32xbf16>, vector<32x128xbf16>, vector<32x128xf32> -> vector<32x128xf32>
    %11 = vector.extract_strided_slice %3 {offsets = [1, 0, 0, 0], sizes = [1, 4, 8, 32], strides = [1, 1, 1, 1]} : vector<2x4x8x32xf32> to vector<1x4x8x32xf32>
    %12 = vector.shape_cast %11 : vector<1x4x8x32xf32> to vector<4x8x32xf32>
    %13 = vector.shape_cast %12 : vector<4x8x32xf32> to vector<32x32xf32>
    %14 = arith.truncf %13 : vector<32x32xf32> to vector<32x32xbf16>
    %c0_8 = arith.constant 0 : index
    %c1 = arith.constant 1 : index
    %c0_9 = arith.constant 0 : index
    %c0_10 = arith.constant 0 : index
    %15 = vector.load %arg4[%c0_8, %c1, %c0_9, %c0_10] : memref<1x2x32x128xbf16, #tpu.memory_space<vmem>>, vector<1x1x32x128xbf16>
    %16 = vector.shape_cast %15 : vector<1x1x32x128xbf16> to vector<32x128xbf16>
    %cst_11 = arith.constant dense<0.000000e+00> : vector<32x128xf32>
    %17 = tpu.matmul %14, %16, %cst_11 {dimension_numbers = #tpu.dot_dimension_numbers<[1], [0], [0], [1], [0, 0, 1, 1], [], []>} : vector<32x32xbf16>, vector<32x128xbf16>, vector<32x128xf32> -> vector<32x128xf32>
    %18 = arith.addf %10, %17 : vector<32x128xf32>
    %c0_12 = arith.constant 0 : index
    %c0_13 = arith.constant 0 : index
    %c0_14 = arith.constant 0 : index
    %19 = vector.load %arg6[%c0_12, %c0_13, %c0_14] : memref<1x1x128xf32, #tpu.memory_space<vmem>>, vector<1x1x128xf32>
    %20 = vector.shape_cast %19 : vector<1x1x128xf32> to vector<1x128xf32>
    %21 = vector.broadcast %20 : vector<1x128xf32> to vector<32x128xf32>
    %22 = arith.addf %18, %21 : vector<32x128xf32>
    %23 = vector.shape_cast %22 : vector<32x128xf32> to vector<4x8x128xf32>
    %c0_15 = arith.constant 0 : index
    %c0_16 = arith.constant 0 : index
    %c0_17 = arith.constant 0 : index
    %24 = vector.load %arg5[%c0_15, %c0_16, %c0_17] : memref<1x32x128xbf16, #tpu.memory_space<vmem>>, vector<1x32x128xbf16>
    %25 = vector.shape_cast %24 : vector<1x32x128xbf16> to vector<32x128xbf16>
    %c0_18 = arith.constant 0 : index
    %c0_19 = arith.constant 0 : index
    %26 = vector.load %arg2[%c0_18, %c0_19] : memref<8x1xi32, #tpu.memory_space<vmem>>, vector<8x1xi32>
    %c1_i32 = arith.constant 1 : i32
    %27 = arith.subi %c1_i32, %arg0 : i32
    %28 = arith.muli %27, %arg1 : i32
    %c1_i32_20 = arith.constant 1 : i32
    %29 = arith.subi %c1_i32_20, %arg1 : i32
    %30 = arith.muli %arg0, %29 : i32
    %31 = arith.addi %28, %30 : i32
    %c4_i32 = arith.constant 4 : i32
    %32 = arith.muli %31, %c4_i32 : i32
    %c0_i32_21 = arith.constant 0 : i32
    %33 = arith.cmpi eq, %arg0, %c0_i32_21 : i32
    %34 = arith.extui %33 : i1 to i32
    %c0_i32_22 = arith.constant 0 : i32
    %35 = arith.cmpi ne, %34, %c0_i32_22 : i32
    scf.if %35 {
      %c0_27 = arith.constant 0 : index
      %c0_28 = arith.constant 0 : index
      %42 = vector.load %arg10[%c0_27, %c0_28] : memref<8x32xf32, #tpu.memory_space<vmem>>, vector<8x32xf32>
      %c0_29 = arith.constant 0 : index
      %c0_30 = arith.constant 0 : index
      %43 = vector.load %arg11[%c0_29, %c0_30] : memref<8x32xf32, #tpu.memory_space<vmem>>, vector<8x32xf32>
      %44 = vector.extract_strided_slice %23 {offsets = [0, 0, 0], sizes = [1, 8, 128], strides = [1, 1, 1]} : vector<4x8x128xf32> to vector<1x8x128xf32>
      %45 = vector.shape_cast %44 : vector<1x8x128xf32> to vector<8x128xf32>
      %46 = arith.truncf %42 : vector<8x32xf32> to vector<8x32xbf16>
      %cst_31 = arith.constant dense<0.000000e+00> : vector<8x128xf32>
      %47 = tpu.matmul %46, %25, %cst_31 {dimension_numbers = #tpu.dot_dimension_numbers<[1], [0], [0], [1], [0, 0, 1, 1], [], []>} : vector<8x32xbf16>, vector<32x128xbf16>, vector<8x128xf32> -> vector<8x128xf32>
      %48 = arith.addf %45, %47 : vector<8x128xf32>
      %49 = vector.extract_strided_slice %48 {offsets = [0, 0], sizes = [8, 96], strides = [1, 1]} : vector<8x128xf32> to vector<8x96xf32>
      %50 = arith.negf %49 : vector<8x96xf32>
      %51 = math.exp %50 : vector<8x96xf32>
      %cst_32 = arith.constant 1.000000e+00 : f32
      %52 = vector.broadcast %cst_32 : f32 to vector<8x96xf32>
      %53 = arith.addf %52, %51 : vector<8x96xf32>
      %54 = arith.divf %52, %53 : vector<8x96xf32>
      %55 = vector.extract_strided_slice %54 {offsets = [0, 0], sizes = [8, 32], strides = [1, 1]} : vector<8x96xf32> to vector<8x32xf32>
      %56 = vector.extract_strided_slice %54 {offsets = [0, 32], sizes = [8, 32], strides = [1, 1]} : vector<8x96xf32> to vector<8x32xf32>
      %57 = vector.extract_strided_slice %54 {offsets = [0, 64], sizes = [8, 32], strides = [1, 1]} : vector<8x96xf32> to vector<8x32xf32>
      %58 = vector.extract_strided_slice %48 {offsets = [0, 96], sizes = [8, 32], strides = [1, 1]} : vector<8x128xf32> to vector<8x32xf32>
      %59 = math.tanh %58 : vector<8x32xf32>
      %60 = arith.mulf %56, %43 : vector<8x32xf32>
      %61 = arith.mulf %55, %59 : vector<8x32xf32>
      %62 = arith.addf %60, %61 : vector<8x32xf32>
      %63 = math.tanh %62 : vector<8x32xf32>
      %64 = arith.mulf %57, %63 : vector<8x32xf32>
      %c0_i32_33 = arith.constant 0 : i32
      %65 = arith.addi %32, %c0_i32_33 : i32
      %66 = vector.broadcast %65 : i32 to vector<8x1xi32>
      %67 = arith.cmpi sgt, %26, %66 : vector<8x1xi32>
      %cst_34 = arith.constant 0.000000e+00 : f32
      %68 = vector.broadcast %cst_34 : f32 to vector<8x32xf32>
      %69 = vector.shape_cast %67 : vector<8x1xi1> to vector<8x1xi1>
      %70 = vector.broadcast %69 : vector<8x1xi1> to vector<8x32xi1>
      %71 = arith.select %70, %64, %68 : vector<8x32xi1>, vector<8x32xf32>
      %c0_35 = arith.constant 0 : index
      %c0_36 = arith.constant 0 : index
      %c0_37 = arith.constant 0 : index
      %c0_38 = arith.constant 0 : index
      %72 = vector.load %arg7[%c0_35, %c0_36, %c0_37, %c0_38] : memref<1x4x8x32xf32, #tpu.memory_space<vmem>>, vector<1x1x8x32xf32>
      %73 = vector.shape_cast %72 : vector<1x1x8x32xf32> to vector<8x32xf32>
      %74 = vector.shape_cast %71 : vector<8x32xf32> to vector<1x1x8x32xf32>
      tpu.vector_store %arg7[%c0_35, %c0_36, %c0_37, %c0_38], %74 {strides = array<i32>} : memref<1x4x8x32xf32, #tpu.memory_space<vmem>>, vector<1x1x8x32xf32>,
      %75 = vector.shape_cast %67 : vector<8x1xi1> to vector<8x1xi1>
      %76 = vector.broadcast %75 : vector<8x1xi1> to vector<8x32xi1>
      %77 = arith.select %76, %64, %42 : vector<8x32xi1>, vector<8x32xf32>
      %78 = vector.shape_cast %67 : vector<8x1xi1> to vector<8x1xi1>
      %79 = vector.broadcast %78 : vector<8x1xi1> to vector<8x32xi1>
      %80 = arith.select %79, %62, %43 : vector<8x32xi1>, vector<8x32xf32>
      %81 = vector.extract_strided_slice %23 {offsets = [1, 0, 0], sizes = [1, 8, 128], strides = [1, 1, 1]} : vector<4x8x128xf32> to vector<1x8x128xf32>
      %82 = vector.shape_cast %81 : vector<1x8x128xf32> to vector<8x128xf32>
      %83 = arith.truncf %77 : vector<8x32xf32> to vector<8x32xbf16>
      %cst_39 = arith.constant dense<0.000000e+00> : vector<8x128xf32>
      %84 = tpu.matmul %83, %25, %cst_39 {dimension_numbers = #tpu.dot_dimension_numbers<[1], [0], [0], [1], [0, 0, 1, 1], [], []>} : vector<8x32xbf16>, vector<32x128xbf16>, vector<8x128xf32> -> vector<8x128xf32>
      %85 = arith.addf %82, %84 : vector<8x128xf32>
      %86 = vector.extract_strided_slice %85 {offsets = [0, 0], sizes = [8, 96], strides = [1, 1]} : vector<8x128xf32> to vector<8x96xf32>
      %87 = arith.negf %86 : vector<8x96xf32>
      %88 = math.exp %87 : vector<8x96xf32>
      %cst_40 = arith.constant 1.000000e+00 : f32
      %89 = vector.broadcast %cst_40 : f32 to vector<8x96xf32>
      %90 = arith.addf %89, %88 : vector<8x96xf32>
      %91 = arith.divf %89, %90 : vector<8x96xf32>
      %92 = vector.extract_strided_slice %91 {offsets = [0, 0], sizes = [8, 32], strides = [1, 1]} : vector<8x96xf32> to vector<8x32xf32>
      %93 = vector.extract_strided_slice %91 {offsets = [0, 32], sizes = [8, 32], strides = [1, 1]} : vector<8x96xf32> to vector<8x32xf32>
      %94 = vector.extract_strided_slice %91 {offsets = [0, 64], sizes = [8, 32], strides = [1, 1]} : vector<8x96xf32> to vector<8x32xf32>
      %95 = vector.extract_strided_slice %85 {offsets = [0, 96], sizes = [8, 32], strides = [1, 1]} : vector<8x128xf32> to vector<8x32xf32>
      %96 = math.tanh %95 : vector<8x32xf32>
      %97 = arith.mulf %93, %80 : vector<8x32xf32>
      %98 = arith.mulf %92, %96 : vector<8x32xf32>
      %99 = arith.addf %97, %98 : vector<8x32xf32>
      %100 = math.tanh %99 : vector<8x32xf32>
      %101 = arith.mulf %94, %100 : vector<8x32xf32>
      %c1_i32_41 = arith.constant 1 : i32
      %102 = arith.addi %32, %c1_i32_41 : i32
      %103 = vector.broadcast %102 : i32 to vector<8x1xi32>
      %104 = arith.cmpi sgt, %26, %103 : vector<8x1xi32>
      %cst_42 = arith.constant 0.000000e+00 : f32
      %105 = vector.broadcast %cst_42 : f32 to vector<8x32xf32>
      %106 = vector.shape_cast %104 : vector<8x1xi1> to vector<8x1xi1>
      %107 = vector.broadcast %106 : vector<8x1xi1> to vector<8x32xi1>
      %108 = arith.select %107, %101, %105 : vector<8x32xi1>, vector<8x32xf32>
      %c0_43 = arith.constant 0 : index
      %c1_44 = arith.constant 1 : index
      %c0_45 = arith.constant 0 : index
      %c0_46 = arith.constant 0 : index
      %109 = vector.load %arg7[%c0_43, %c1_44, %c0_45, %c0_46] : memref<1x4x8x32xf32, #tpu.memory_space<vmem>>, vector<1x1x8x32xf32>
      %110 = vector.shape_cast %109 : vector<1x1x8x32xf32> to vector<8x32xf32>
      %111 = vector.shape_cast %108 : vector<8x32xf32> to vector<1x1x8x32xf32>
      tpu.vector_store %arg7[%c0_43, %c1_44, %c0_45, %c0_46], %111 {strides = array<i32>} : memref<1x4x8x32xf32, #tpu.memory_space<vmem>>, vector<1x1x8x32xf32>,
      %112 = vector.shape_cast %104 : vector<8x1xi1> to vector<8x1xi1>
      %113 = vector.broadcast %112 : vector<8x1xi1> to vector<8x32xi1>
      %114 = arith.select %113, %101, %77 : vector<8x32xi1>, vector<8x32xf32>
      %115 = vector.shape_cast %104 : vector<8x1xi1> to vector<8x1xi1>
      %116 = vector.broadcast %115 : vector<8x1xi1> to vector<8x32xi1>
      %117 = arith.select %116, %99, %80 : vector<8x32xi1>, vector<8x32xf32>
      %118 = vector.extract_strided_slice %23 {offsets = [2, 0, 0], sizes = [1, 8, 128], strides = [1, 1, 1]} : vector<4x8x128xf32> to vector<1x8x128xf32>
      %119 = vector.shape_cast %118 : vector<1x8x128xf32> to vector<8x128xf32>
      %120 = arith.truncf %114 : vector<8x32xf32> to vector<8x32xbf16>
      %cst_47 = arith.constant dense<0.000000e+00> : vector<8x128xf32>
      %121 = tpu.matmul %120, %25, %cst_47 {dimension_numbers = #tpu.dot_dimension_numbers<[1], [0], [0], [1], [0, 0, 1, 1], [], []>} : vector<8x32xbf16>, vector<32x128xbf16>, vector<8x128xf32> -> vector<8x128xf32>
      %122 = arith.addf %119, %121 : vector<8x128xf32>
      %123 = vector.extract_strided_slice %122 {offsets = [0, 0], sizes = [8, 96], strides = [1, 1]} : vector<8x128xf32> to vector<8x96xf32>
      %124 = arith.negf %123 : vector<8x96xf32>
      %125 = math.exp %124 : vector<8x96xf32>
      %cst_48 = arith.constant 1.000000e+00 : f32
      %126 = vector.broadcast %cst_48 : f32 to vector<8x96xf32>
      %127 = arith.addf %126, %125 : vector<8x96xf32>
      %128 = arith.divf %126, %127 : vector<8x96xf32>
      %129 = vector.extract_strided_slice %128 {offsets = [0, 0], sizes = [8, 32], strides = [1, 1]} : vector<8x96xf32> to vector<8x32xf32>
      %130 = vector.extract_strided_slice %128 {offsets = [0, 32], sizes = [8, 32], strides = [1, 1]} : vector<8x96xf32> to vector<8x32xf32>
      %131 = vector.extract_strided_slice %128 {offsets = [0, 64], sizes = [8, 32], strides = [1, 1]} : vector<8x96xf32> to vector<8x32xf32>
      %132 = vector.extract_strided_slice %122 {offsets = [0, 96], sizes = [8, 32], strides = [1, 1]} : vector<8x128xf32> to vector<8x32xf32>
      %133 = math.tanh %132 : vector<8x32xf32>
      %134 = arith.mulf %130, %117 : vector<8x32xf32>
      %135 = arith.mulf %129, %133 : vector<8x32xf32>
      %136 = arith.addf %134, %135 : vector<8x32xf32>
      %137 = math.tanh %136 : vector<8x32xf32>
      %138 = arith.mulf %131, %137 : vector<8x32xf32>
      %c2_i32 = arith.constant 2 : i32
      %139 = arith.addi %32, %c2_i32 : i32
      %140 = vector.broadcast %139 : i32 to vector<8x1xi32>
      %141 = arith.cmpi sgt, %26, %140 : vector<8x1xi32>
      %cst_49 = arith.constant 0.000000e+00 : f32
      %142 = vector.broadcast %cst_49 : f32 to vector<8x32xf32>
      %143 = vector.shape_cast %141 : vector<8x1xi1> to vector<8x1xi1>
      %144 = vector.broadcast %143 : vector<8x1xi1> to vector<8x32xi1>
      %145 = arith.select %144, %138, %142 : vector<8x32xi1>, vector<8x32xf32>
      %c0_50 = arith.constant 0 : index
      %c2 = arith.constant 2 : index
      %c0_51 = arith.constant 0 : index
      %c0_52 = arith.constant 0 : index
      %146 = vector.load %arg7[%c0_50, %c2, %c0_51, %c0_52] : memref<1x4x8x32xf32, #tpu.memory_space<vmem>>, vector<1x1x8x32xf32>
      %147 = vector.shape_cast %146 : vector<1x1x8x32xf32> to vector<8x32xf32>
      %148 = vector.shape_cast %145 : vector<8x32xf32> to vector<1x1x8x32xf32>
      tpu.vector_store %arg7[%c0_50, %c2, %c0_51, %c0_52], %148 {strides = array<i32>} : memref<1x4x8x32xf32, #tpu.memory_space<vmem>>, vector<1x1x8x32xf32>,
      %149 = vector.shape_cast %141 : vector<8x1xi1> to vector<8x1xi1>
      %150 = vector.broadcast %149 : vector<8x1xi1> to vector<8x32xi1>
      %151 = arith.select %150, %138, %114 : vector<8x32xi1>, vector<8x32xf32>
      %152 = vector.shape_cast %141 : vector<8x1xi1> to vector<8x1xi1>
      %153 = vector.broadcast %152 : vector<8x1xi1> to vector<8x32xi1>
      %154 = arith.select %153, %136, %117 : vector<8x32xi1>, vector<8x32xf32>
      %155 = vector.extract_strided_slice %23 {offsets = [3, 0, 0], sizes = [1, 8, 128], strides = [1, 1, 1]} : vector<4x8x128xf32> to vector<1x8x128xf32>
      %156 = vector.shape_cast %155 : vector<1x8x128xf32> to vector<8x128xf32>
      %157 = arith.truncf %151 : vector<8x32xf32> to vector<8x32xbf16>
      %cst_53 = arith.constant dense<0.000000e+00> : vector<8x128xf32>
      %158 = tpu.matmul %157, %25, %cst_53 {dimension_numbers = #tpu.dot_dimension_numbers<[1], [0], [0], [1], [0, 0, 1, 1], [], []>} : vector<8x32xbf16>, vector<32x128xbf16>, vector<8x128xf32> -> vector<8x128xf32>
      %159 = arith.addf %156, %158 : vector<8x128xf32>
      %160 = vector.extract_strided_slice %159 {offsets = [0, 0], sizes = [8, 96], strides = [1, 1]} : vector<8x128xf32> to vector<8x96xf32>
      %161 = arith.negf %160 : vector<8x96xf32>
      %162 = math.exp %161 : vector<8x96xf32>
      %cst_54 = arith.constant 1.000000e+00 : f32
      %163 = vector.broadcast %cst_54 : f32 to vector<8x96xf32>
      %164 = arith.addf %163, %162 : vector<8x96xf32>
      %165 = arith.divf %163, %164 : vector<8x96xf32>
      %166 = vector.extract_strided_slice %165 {offsets = [0, 0], sizes = [8, 32], strides = [1, 1]} : vector<8x96xf32> to vector<8x32xf32>
      %167 = vector.extract_strided_slice %165 {offsets = [0, 32], sizes = [8, 32], strides = [1, 1]} : vector<8x96xf32> to vector<8x32xf32>
      %168 = vector.extract_strided_slice %165 {offsets = [0, 64], sizes = [8, 32], strides = [1, 1]} : vector<8x96xf32> to vector<8x32xf32>
      %169 = vector.extract_strided_slice %159 {offsets = [0, 96], sizes = [8, 32], strides = [1, 1]} : vector<8x128xf32> to vector<8x32xf32>
      %170 = math.tanh %169 : vector<8x32xf32>
      %171 = arith.mulf %167, %154 : vector<8x32xf32>
      %172 = arith.mulf %166, %170 : vector<8x32xf32>
      %173 = arith.addf %171, %172 : vector<8x32xf32>
      %174 = math.tanh %173 : vector<8x32xf32>
      %175 = arith.mulf %168, %174 : vector<8x32xf32>
      %c3_i32 = arith.constant 3 : i32
      %176 = arith.addi %32, %c3_i32 : i32
      %177 = vector.broadcast %176 : i32 to vector<8x1xi32>
      %178 = arith.cmpi sgt, %26, %177 : vector<8x1xi32>
      %cst_55 = arith.constant 0.000000e+00 : f32
      %179 = vector.broadcast %cst_55 : f32 to vector<8x32xf32>
      %180 = vector.shape_cast %178 : vector<8x1xi1> to vector<8x1xi1>
      %181 = vector.broadcast %180 : vector<8x1xi1> to vector<8x32xi1>
      %182 = arith.select %181, %175, %179 : vector<8x32xi1>, vector<8x32xf32>
      %c0_56 = arith.constant 0 : index
      %c3 = arith.constant 3 : index
      %c0_57 = arith.constant 0 : index
      %c0_58 = arith.constant 0 : index
      %183 = vector.load %arg7[%c0_56, %c3, %c0_57, %c0_58] : memref<1x4x8x32xf32, #tpu.memory_space<vmem>>, vector<1x1x8x32xf32>
      %184 = vector.shape_cast %183 : vector<1x1x8x32xf32> to vector<8x32xf32>
      %185 = vector.shape_cast %182 : vector<8x32xf32> to vector<1x1x8x32xf32>
      tpu.vector_store %arg7[%c0_56, %c3, %c0_57, %c0_58], %185 {strides = array<i32>} : memref<1x4x8x32xf32, #tpu.memory_space<vmem>>, vector<1x1x8x32xf32>,
      %186 = vector.shape_cast %178 : vector<8x1xi1> to vector<8x1xi1>
      %187 = vector.broadcast %186 : vector<8x1xi1> to vector<8x32xi1>
      %188 = arith.select %187, %175, %151 : vector<8x32xi1>, vector<8x32xf32>
      %189 = vector.shape_cast %178 : vector<8x1xi1> to vector<8x1xi1>
      %190 = vector.broadcast %189 : vector<8x1xi1> to vector<8x32xi1>
      %191 = arith.select %190, %173, %154 : vector<8x32xi1>, vector<8x32xf32>
      %c0_59 = arith.constant 0 : index
      %c0_60 = arith.constant 0 : index
      %192 = vector.load %arg10[%c0_59, %c0_60] : memref<8x32xf32, #tpu.memory_space<vmem>>, vector<8x32xf32>
      tpu.vector_store %arg10[%c0_59, %c0_60], %188 {strides = array<i32>} : memref<8x32xf32, #tpu.memory_space<vmem>>, vector<8x32xf32>,
      %c0_61 = arith.constant 0 : index
      %c0_62 = arith.constant 0 : index
      %193 = vector.load %arg11[%c0_61, %c0_62] : memref<8x32xf32, #tpu.memory_space<vmem>>, vector<8x32xf32>
      tpu.vector_store %arg11[%c0_61, %c0_62], %191 {strides = array<i32>} : memref<8x32xf32, #tpu.memory_space<vmem>>, vector<8x32xf32>,
    } else {
    }
    %c1_i32_23 = arith.constant 1 : i32
    %36 = arith.cmpi eq, %arg0, %c1_i32_23 : i32
    %37 = arith.extui %36 : i1 to i32
    %c0_i32_24 = arith.constant 0 : i32
    %38 = arith.cmpi ne, %37, %c0_i32_24 : i32
    scf.if %38 {
      %c0_27 = arith.constant 0 : index
      %c0_28 = arith.constant 0 : index
      %42 = vector.load %arg10[%c0_27, %c0_28] : memref<8x32xf32, #tpu.memory_space<vmem>>, vector<8x32xf32>
      %c0_29 = arith.constant 0 : index
      %c0_30 = arith.constant 0 : index
      %43 = vector.load %arg11[%c0_29, %c0_30] : memref<8x32xf32, #tpu.memory_space<vmem>>, vector<8x32xf32>
      %44 = vector.extract_strided_slice %23 {offsets = [3, 0, 0], sizes = [1, 8, 128], strides = [1, 1, 1]} : vector<4x8x128xf32> to vector<1x8x128xf32>
      %45 = vector.shape_cast %44 : vector<1x8x128xf32> to vector<8x128xf32>
      %46 = arith.truncf %42 : vector<8x32xf32> to vector<8x32xbf16>
      %cst_31 = arith.constant dense<0.000000e+00> : vector<8x128xf32>
      %47 = tpu.matmul %46, %25, %cst_31 {dimension_numbers = #tpu.dot_dimension_numbers<[1], [0], [0], [1], [0, 0, 1, 1], [], []>} : vector<8x32xbf16>, vector<32x128xbf16>, vector<8x128xf32> -> vector<8x128xf32>
      %48 = arith.addf %45, %47 : vector<8x128xf32>
      %49 = vector.extract_strided_slice %48 {offsets = [0, 0], sizes = [8, 96], strides = [1, 1]} : vector<8x128xf32> to vector<8x96xf32>
      %50 = arith.negf %49 : vector<8x96xf32>
      %51 = math.exp %50 : vector<8x96xf32>
      %cst_32 = arith.constant 1.000000e+00 : f32
      %52 = vector.broadcast %cst_32 : f32 to vector<8x96xf32>
      %53 = arith.addf %52, %51 : vector<8x96xf32>
      %54 = arith.divf %52, %53 : vector<8x96xf32>
      %55 = vector.extract_strided_slice %54 {offsets = [0, 0], sizes = [8, 32], strides = [1, 1]} : vector<8x96xf32> to vector<8x32xf32>
      %56 = vector.extract_strided_slice %54 {offsets = [0, 32], sizes = [8, 32], strides = [1, 1]} : vector<8x96xf32> to vector<8x32xf32>
      %57 = vector.extract_strided_slice %54 {offsets = [0, 64], sizes = [8, 32], strides = [1, 1]} : vector<8x96xf32> to vector<8x32xf32>
      %58 = vector.extract_strided_slice %48 {offsets = [0, 96], sizes = [8, 32], strides = [1, 1]} : vector<8x128xf32> to vector<8x32xf32>
      %59 = math.tanh %58 : vector<8x32xf32>
      %60 = arith.mulf %56, %43 : vector<8x32xf32>
      %61 = arith.mulf %55, %59 : vector<8x32xf32>
      %62 = arith.addf %60, %61 : vector<8x32xf32>
      %63 = math.tanh %62 : vector<8x32xf32>
      %64 = arith.mulf %57, %63 : vector<8x32xf32>
      %c3_i32 = arith.constant 3 : i32
      %65 = arith.addi %32, %c3_i32 : i32
      %66 = vector.broadcast %65 : i32 to vector<8x1xi32>
      %67 = arith.cmpi sgt, %26, %66 : vector<8x1xi32>
      %cst_33 = arith.constant 0.000000e+00 : f32
      %68 = vector.broadcast %cst_33 : f32 to vector<8x32xf32>
      %69 = vector.shape_cast %67 : vector<8x1xi1> to vector<8x1xi1>
      %70 = vector.broadcast %69 : vector<8x1xi1> to vector<8x32xi1>
      %71 = arith.select %70, %64, %68 : vector<8x32xi1>, vector<8x32xf32>
      %c0_34 = arith.constant 0 : index
      %c3 = arith.constant 3 : index
      %c0_35 = arith.constant 0 : index
      %c0_36 = arith.constant 0 : index
      %72 = vector.load %arg7[%c0_34, %c3, %c0_35, %c0_36] : memref<1x4x8x32xf32, #tpu.memory_space<vmem>>, vector<1x1x8x32xf32>
      %73 = vector.shape_cast %72 : vector<1x1x8x32xf32> to vector<8x32xf32>
      %74 = vector.shape_cast %71 : vector<8x32xf32> to vector<1x1x8x32xf32>
      tpu.vector_store %arg7[%c0_34, %c3, %c0_35, %c0_36], %74 {strides = array<i32>} : memref<1x4x8x32xf32, #tpu.memory_space<vmem>>, vector<1x1x8x32xf32>,
      %75 = vector.shape_cast %67 : vector<8x1xi1> to vector<8x1xi1>
      %76 = vector.broadcast %75 : vector<8x1xi1> to vector<8x32xi1>
      %77 = arith.select %76, %64, %42 : vector<8x32xi1>, vector<8x32xf32>
      %78 = vector.shape_cast %67 : vector<8x1xi1> to vector<8x1xi1>
      %79 = vector.broadcast %78 : vector<8x1xi1> to vector<8x32xi1>
      %80 = arith.select %79, %62, %43 : vector<8x32xi1>, vector<8x32xf32>
      %81 = vector.extract_strided_slice %23 {offsets = [2, 0, 0], sizes = [1, 8, 128], strides = [1, 1, 1]} : vector<4x8x128xf32> to vector<1x8x128xf32>
      %82 = vector.shape_cast %81 : vector<1x8x128xf32> to vector<8x128xf32>
      %83 = arith.truncf %77 : vector<8x32xf32> to vector<8x32xbf16>
      %cst_37 = arith.constant dense<0.000000e+00> : vector<8x128xf32>
      %84 = tpu.matmul %83, %25, %cst_37 {dimension_numbers = #tpu.dot_dimension_numbers<[1], [0], [0], [1], [0, 0, 1, 1], [], []>} : vector<8x32xbf16>, vector<32x128xbf16>, vector<8x128xf32> -> vector<8x128xf32>
      %85 = arith.addf %82, %84 : vector<8x128xf32>
      %86 = vector.extract_strided_slice %85 {offsets = [0, 0], sizes = [8, 96], strides = [1, 1]} : vector<8x128xf32> to vector<8x96xf32>
      %87 = arith.negf %86 : vector<8x96xf32>
      %88 = math.exp %87 : vector<8x96xf32>
      %cst_38 = arith.constant 1.000000e+00 : f32
      %89 = vector.broadcast %cst_38 : f32 to vector<8x96xf32>
      %90 = arith.addf %89, %88 : vector<8x96xf32>
      %91 = arith.divf %89, %90 : vector<8x96xf32>
      %92 = vector.extract_strided_slice %91 {offsets = [0, 0], sizes = [8, 32], strides = [1, 1]} : vector<8x96xf32> to vector<8x32xf32>
      %93 = vector.extract_strided_slice %91 {offsets = [0, 32], sizes = [8, 32], strides = [1, 1]} : vector<8x96xf32> to vector<8x32xf32>
      %94 = vector.extract_strided_slice %91 {offsets = [0, 64], sizes = [8, 32], strides = [1, 1]} : vector<8x96xf32> to vector<8x32xf32>
      %95 = vector.extract_strided_slice %85 {offsets = [0, 96], sizes = [8, 32], strides = [1, 1]} : vector<8x128xf32> to vector<8x32xf32>
      %96 = math.tanh %95 : vector<8x32xf32>
      %97 = arith.mulf %93, %80 : vector<8x32xf32>
      %98 = arith.mulf %92, %96 : vector<8x32xf32>
      %99 = arith.addf %97, %98 : vector<8x32xf32>
      %100 = math.tanh %99 : vector<8x32xf32>
      %101 = arith.mulf %94, %100 : vector<8x32xf32>
      %c2_i32 = arith.constant 2 : i32
      %102 = arith.addi %32, %c2_i32 : i32
      %103 = vector.broadcast %102 : i32 to vector<8x1xi32>
      %104 = arith.cmpi sgt, %26, %103 : vector<8x1xi32>
      %cst_39 = arith.constant 0.000000e+00 : f32
      %105 = vector.broadcast %cst_39 : f32 to vector<8x32xf32>
      %106 = vector.shape_cast %104 : vector<8x1xi1> to vector<8x1xi1>
      %107 = vector.broadcast %106 : vector<8x1xi1> to vector<8x32xi1>
      %108 = arith.select %107, %101, %105 : vector<8x32xi1>, vector<8x32xf32>
      %c0_40 = arith.constant 0 : index
      %c2 = arith.constant 2 : index
      %c0_41 = arith.constant 0 : index
      %c0_42 = arith.constant 0 : index
      %109 = vector.load %arg7[%c0_40, %c2, %c0_41, %c0_42] : memref<1x4x8x32xf32, #tpu.memory_space<vmem>>, vector<1x1x8x32xf32>
      %110 = vector.shape_cast %109 : vector<1x1x8x32xf32> to vector<8x32xf32>
      %111 = vector.shape_cast %108 : vector<8x32xf32> to vector<1x1x8x32xf32>
      tpu.vector_store %arg7[%c0_40, %c2, %c0_41, %c0_42], %111 {strides = array<i32>} : memref<1x4x8x32xf32, #tpu.memory_space<vmem>>, vector<1x1x8x32xf32>,
      %112 = vector.shape_cast %104 : vector<8x1xi1> to vector<8x1xi1>
      %113 = vector.broadcast %112 : vector<8x1xi1> to vector<8x32xi1>
      %114 = arith.select %113, %101, %77 : vector<8x32xi1>, vector<8x32xf32>
      %115 = vector.shape_cast %104 : vector<8x1xi1> to vector<8x1xi1>
      %116 = vector.broadcast %115 : vector<8x1xi1> to vector<8x32xi1>
      %117 = arith.select %116, %99, %80 : vector<8x32xi1>, vector<8x32xf32>
      %118 = vector.extract_strided_slice %23 {offsets = [1, 0, 0], sizes = [1, 8, 128], strides = [1, 1, 1]} : vector<4x8x128xf32> to vector<1x8x128xf32>
      %119 = vector.shape_cast %118 : vector<1x8x128xf32> to vector<8x128xf32>
      %120 = arith.truncf %114 : vector<8x32xf32> to vector<8x32xbf16>
      %cst_43 = arith.constant dense<0.000000e+00> : vector<8x128xf32>
      %121 = tpu.matmul %120, %25, %cst_43 {dimension_numbers = #tpu.dot_dimension_numbers<[1], [0], [0], [1], [0, 0, 1, 1], [], []>} : vector<8x32xbf16>, vector<32x128xbf16>, vector<8x128xf32> -> vector<8x128xf32>
      %122 = arith.addf %119, %121 : vector<8x128xf32>
      %123 = vector.extract_strided_slice %122 {offsets = [0, 0], sizes = [8, 96], strides = [1, 1]} : vector<8x128xf32> to vector<8x96xf32>
      %124 = arith.negf %123 : vector<8x96xf32>
      %125 = math.exp %124 : vector<8x96xf32>
      %cst_44 = arith.constant 1.000000e+00 : f32
      %126 = vector.broadcast %cst_44 : f32 to vector<8x96xf32>
      %127 = arith.addf %126, %125 : vector<8x96xf32>
      %128 = arith.divf %126, %127 : vector<8x96xf32>
      %129 = vector.extract_strided_slice %128 {offsets = [0, 0], sizes = [8, 32], strides = [1, 1]} : vector<8x96xf32> to vector<8x32xf32>
      %130 = vector.extract_strided_slice %128 {offsets = [0, 32], sizes = [8, 32], strides = [1, 1]} : vector<8x96xf32> to vector<8x32xf32>
      %131 = vector.extract_strided_slice %128 {offsets = [0, 64], sizes = [8, 32], strides = [1, 1]} : vector<8x96xf32> to vector<8x32xf32>
      %132 = vector.extract_strided_slice %122 {offsets = [0, 96], sizes = [8, 32], strides = [1, 1]} : vector<8x128xf32> to vector<8x32xf32>
      %133 = math.tanh %132 : vector<8x32xf32>
      %134 = arith.mulf %130, %117 : vector<8x32xf32>
      %135 = arith.mulf %129, %133 : vector<8x32xf32>
      %136 = arith.addf %134, %135 : vector<8x32xf32>
      %137 = math.tanh %136 : vector<8x32xf32>
      %138 = arith.mulf %131, %137 : vector<8x32xf32>
      %c1_i32_45 = arith.constant 1 : i32
      %139 = arith.addi %32, %c1_i32_45 : i32
      %140 = vector.broadcast %139 : i32 to vector<8x1xi32>
      %141 = arith.cmpi sgt, %26, %140 : vector<8x1xi32>
      %cst_46 = arith.constant 0.000000e+00 : f32
      %142 = vector.broadcast %cst_46 : f32 to vector<8x32xf32>
      %143 = vector.shape_cast %141 : vector<8x1xi1> to vector<8x1xi1>
      %144 = vector.broadcast %143 : vector<8x1xi1> to vector<8x32xi1>
      %145 = arith.select %144, %138, %142 : vector<8x32xi1>, vector<8x32xf32>
      %c0_47 = arith.constant 0 : index
      %c1_48 = arith.constant 1 : index
      %c0_49 = arith.constant 0 : index
      %c0_50 = arith.constant 0 : index
      %146 = vector.load %arg7[%c0_47, %c1_48, %c0_49, %c0_50] : memref<1x4x8x32xf32, #tpu.memory_space<vmem>>, vector<1x1x8x32xf32>
      %147 = vector.shape_cast %146 : vector<1x1x8x32xf32> to vector<8x32xf32>
      %148 = vector.shape_cast %145 : vector<8x32xf32> to vector<1x1x8x32xf32>
      tpu.vector_store %arg7[%c0_47, %c1_48, %c0_49, %c0_50], %148 {strides = array<i32>} : memref<1x4x8x32xf32, #tpu.memory_space<vmem>>, vector<1x1x8x32xf32>,
      %149 = vector.shape_cast %141 : vector<8x1xi1> to vector<8x1xi1>
      %150 = vector.broadcast %149 : vector<8x1xi1> to vector<8x32xi1>
      %151 = arith.select %150, %138, %114 : vector<8x32xi1>, vector<8x32xf32>
      %152 = vector.shape_cast %141 : vector<8x1xi1> to vector<8x1xi1>
      %153 = vector.broadcast %152 : vector<8x1xi1> to vector<8x32xi1>
      %154 = arith.select %153, %136, %117 : vector<8x32xi1>, vector<8x32xf32>
      %155 = vector.extract_strided_slice %23 {offsets = [0, 0, 0], sizes = [1, 8, 128], strides = [1, 1, 1]} : vector<4x8x128xf32> to vector<1x8x128xf32>
      %156 = vector.shape_cast %155 : vector<1x8x128xf32> to vector<8x128xf32>
      %157 = arith.truncf %151 : vector<8x32xf32> to vector<8x32xbf16>
      %cst_51 = arith.constant dense<0.000000e+00> : vector<8x128xf32>
      %158 = tpu.matmul %157, %25, %cst_51 {dimension_numbers = #tpu.dot_dimension_numbers<[1], [0], [0], [1], [0, 0, 1, 1], [], []>} : vector<8x32xbf16>, vector<32x128xbf16>, vector<8x128xf32> -> vector<8x128xf32>
      %159 = arith.addf %156, %158 : vector<8x128xf32>
      %160 = vector.extract_strided_slice %159 {offsets = [0, 0], sizes = [8, 96], strides = [1, 1]} : vector<8x128xf32> to vector<8x96xf32>
      %161 = arith.negf %160 : vector<8x96xf32>
      %162 = math.exp %161 : vector<8x96xf32>
      %cst_52 = arith.constant 1.000000e+00 : f32
      %163 = vector.broadcast %cst_52 : f32 to vector<8x96xf32>
      %164 = arith.addf %163, %162 : vector<8x96xf32>
      %165 = arith.divf %163, %164 : vector<8x96xf32>
      %166 = vector.extract_strided_slice %165 {offsets = [0, 0], sizes = [8, 32], strides = [1, 1]} : vector<8x96xf32> to vector<8x32xf32>
      %167 = vector.extract_strided_slice %165 {offsets = [0, 32], sizes = [8, 32], strides = [1, 1]} : vector<8x96xf32> to vector<8x32xf32>
      %168 = vector.extract_strided_slice %165 {offsets = [0, 64], sizes = [8, 32], strides = [1, 1]} : vector<8x96xf32> to vector<8x32xf32>
      %169 = vector.extract_strided_slice %159 {offsets = [0, 96], sizes = [8, 32], strides = [1, 1]} : vector<8x128xf32> to vector<8x32xf32>
      %170 = math.tanh %169 : vector<8x32xf32>
      %171 = arith.mulf %167, %154 : vector<8x32xf32>
      %172 = arith.mulf %166, %170 : vector<8x32xf32>
      %173 = arith.addf %171, %172 : vector<8x32xf32>
      %174 = math.tanh %173 : vector<8x32xf32>
      %175 = arith.mulf %168, %174 : vector<8x32xf32>
      %c0_i32_53 = arith.constant 0 : i32
      %176 = arith.addi %32, %c0_i32_53 : i32
      %177 = vector.broadcast %176 : i32 to vector<8x1xi32>
      %178 = arith.cmpi sgt, %26, %177 : vector<8x1xi32>
      %cst_54 = arith.constant 0.000000e+00 : f32
      %179 = vector.broadcast %cst_54 : f32 to vector<8x32xf32>
      %180 = vector.shape_cast %178 : vector<8x1xi1> to vector<8x1xi1>
      %181 = vector.broadcast %180 : vector<8x1xi1> to vector<8x32xi1>
      %182 = arith.select %181, %175, %179 : vector<8x32xi1>, vector<8x32xf32>
      %c0_55 = arith.constant 0 : index
      %c0_56 = arith.constant 0 : index
      %c0_57 = arith.constant 0 : index
      %c0_58 = arith.constant 0 : index
      %183 = vector.load %arg7[%c0_55, %c0_56, %c0_57, %c0_58] : memref<1x4x8x32xf32, #tpu.memory_space<vmem>>, vector<1x1x8x32xf32>
      %184 = vector.shape_cast %183 : vector<1x1x8x32xf32> to vector<8x32xf32>
      %185 = vector.shape_cast %182 : vector<8x32xf32> to vector<1x1x8x32xf32>
      tpu.vector_store %arg7[%c0_55, %c0_56, %c0_57, %c0_58], %185 {strides = array<i32>} : memref<1x4x8x32xf32, #tpu.memory_space<vmem>>, vector<1x1x8x32xf32>,
      %186 = vector.shape_cast %178 : vector<8x1xi1> to vector<8x1xi1>
      %187 = vector.broadcast %186 : vector<8x1xi1> to vector<8x32xi1>
      %188 = arith.select %187, %175, %151 : vector<8x32xi1>, vector<8x32xf32>
      %189 = vector.shape_cast %178 : vector<8x1xi1> to vector<8x1xi1>
      %190 = vector.broadcast %189 : vector<8x1xi1> to vector<8x32xi1>
      %191 = arith.select %190, %173, %154 : vector<8x32xi1>, vector<8x32xf32>
      %c0_59 = arith.constant 0 : index
      %c0_60 = arith.constant 0 : index
      %192 = vector.load %arg10[%c0_59, %c0_60] : memref<8x32xf32, #tpu.memory_space<vmem>>, vector<8x32xf32>
      tpu.vector_store %arg10[%c0_59, %c0_60], %188 {strides = array<i32>} : memref<8x32xf32, #tpu.memory_space<vmem>>, vector<8x32xf32>,
      %c0_61 = arith.constant 0 : index
      %c0_62 = arith.constant 0 : index
      %193 = vector.load %arg11[%c0_61, %c0_62] : memref<8x32xf32, #tpu.memory_space<vmem>>, vector<8x32xf32>
      tpu.vector_store %arg11[%c0_61, %c0_62], %191 {strides = array<i32>} : memref<8x32xf32, #tpu.memory_space<vmem>>, vector<8x32xf32>,
    } else {
    }
    %c1_i32_25 = arith.constant 1 : i32
    %39 = arith.cmpi eq, %arg1, %c1_i32_25 : i32
    %40 = arith.extui %39 : i1 to i32
    %c0_i32_26 = arith.constant 0 : i32
    %41 = arith.cmpi ne, %40, %c0_i32_26 : i32
    scf.if %41 {
      %c0_27 = arith.constant 0 : index
      %c0_28 = arith.constant 0 : index
      %42 = vector.load %arg10[%c0_27, %c0_28] : memref<8x32xf32, #tpu.memory_space<vmem>>, vector<8x32xf32>
      %c0_29 = arith.constant 0 : index
      %c0_30 = arith.constant 0 : index
      %c0_31 = arith.constant 0 : index
      %43 = vector.load %arg8[%c0_29, %c0_30, %c0_31] : memref<1x8x32xf32, #tpu.memory_space<vmem>>, vector<1x8x32xf32>
      %44 = vector.shape_cast %43 : vector<1x8x32xf32> to vector<8x32xf32>
      %45 = vector.shape_cast %42 : vector<8x32xf32> to vector<1x8x32xf32>
      tpu.vector_store %arg8[%c0_29, %c0_30, %c0_31], %45 {strides = array<i32>} : memref<1x8x32xf32, #tpu.memory_space<vmem>>, vector<1x8x32xf32>,
      %c0_32 = arith.constant 0 : index
      %c0_33 = arith.constant 0 : index
      %46 = vector.load %arg11[%c0_32, %c0_33] : memref<8x32xf32, #tpu.memory_space<vmem>>, vector<8x32xf32>
      %c0_34 = arith.constant 0 : index
      %c0_35 = arith.constant 0 : index
      %c0_36 = arith.constant 0 : index
      %47 = vector.load %arg9[%c0_34, %c0_35, %c0_36] : memref<1x8x32xf32, #tpu.memory_space<vmem>>, vector<1x8x32xf32>
      %48 = vector.shape_cast %47 : vector<1x8x32xf32> to vector<8x32xf32>
      %49 = vector.shape_cast %46 : vector<8x32xf32> to vector<1x8x32xf32>
      tpu.vector_store %arg9[%c0_34, %c0_35, %c0_36], %49 {strides = array<i32>} : memref<1x8x32xf32, #tpu.memory_space<vmem>>, vector<1x8x32xf32>,
    } else {
    }
    return
  }
  func.func @transform_0(%arg0: i32, %arg1: i32) -> (i32, i32) {
    %c0_i32 = arith.constant 0 : i32
    %c0_i32_0 = arith.constant 0 : i32
    %c0_i32_1 = arith.constant 0 : i32
    return %c0_i32, %c0_i32_0 : i32, i32
  }
  func.func @transform_1(%arg0: i32, %arg1: i32) -> (i32, i32, i32, i32) {
    %c1_i32 = arith.constant 1 : i32
    %0 = arith.subi %c1_i32, %arg0 : i32
    %1 = arith.muli %0, %arg1 : i32
    %c1_i32_0 = arith.constant 1 : i32
    %2 = arith.subi %c1_i32_0, %arg1 : i32
    %3 = arith.muli %arg0, %2 : i32
    %4 = arith.addi %1, %3 : i32
    %c0_i32 = arith.constant 0 : i32
    %c0_i32_1 = arith.constant 0 : i32
    %c0_i32_2 = arith.constant 0 : i32
    %c0_i32_3 = arith.constant 0 : i32
    return %c0_i32, %4, %c0_i32_1, %c0_i32_2 : i32, i32, i32, i32
  }
  func.func @transform_2(%arg0: i32, %arg1: i32) -> (i32, i32, i32, i32) {
    %c0_i32 = arith.constant 0 : i32
    %c0_i32_0 = arith.constant 0 : i32
    %c0_i32_1 = arith.constant 0 : i32
    %c0_i32_2 = arith.constant 0 : i32
    return %arg0, %c0_i32, %c0_i32_0, %c0_i32_1 : i32, i32, i32, i32
  }
  func.func @transform_3(%arg0: i32, %arg1: i32) -> (i32, i32, i32) {
    %c0_i32 = arith.constant 0 : i32
    %c0_i32_0 = arith.constant 0 : i32
    %c0_i32_1 = arith.constant 0 : i32
    return %arg0, %c0_i32, %c0_i32_0 : i32, i32, i32
  }
  func.func @transform_4(%arg0: i32, %arg1: i32) -> (i32, i32, i32) {
    %c0_i32 = arith.constant 0 : i32
    %c0_i32_0 = arith.constant 0 : i32
    %c0_i32_1 = arith.constant 0 : i32
    return %arg0, %c0_i32, %c0_i32_0 : i32, i32, i32
  }
  func.func @transform_5(%arg0: i32, %arg1: i32) -> (i32, i32, i32, i32) {
    %c1_i32 = arith.constant 1 : i32
    %0 = arith.subi %c1_i32, %arg0 : i32
    %1 = arith.muli %0, %arg1 : i32
    %c1_i32_0 = arith.constant 1 : i32
    %2 = arith.subi %c1_i32_0, %arg1 : i32
    %3 = arith.muli %arg0, %2 : i32
    %4 = arith.addi %1, %3 : i32
    %c0_i32 = arith.constant 0 : i32
    %c0_i32_1 = arith.constant 0 : i32
    %c0_i32_2 = arith.constant 0 : i32
    return %arg0, %4, %c0_i32, %c0_i32_1 : i32, i32, i32, i32
  }
  func.func @transform_6(%arg0: i32, %arg1: i32) -> (i32, i32, i32) {
    %c0_i32 = arith.constant 0 : i32
    %c0_i32_0 = arith.constant 0 : i32
    %c0_i32_1 = arith.constant 0 : i32
    return %arg0, %c0_i32, %c0_i32_0 : i32, i32, i32
  }
  func.func @transform_7(%arg0: i32, %arg1: i32) -> (i32, i32, i32) {
    %c0_i32 = arith.constant 0 : i32
    %c0_i32_0 = arith.constant 0 : i32
    %c0_i32_1 = arith.constant 0 : i32
    return %arg0, %c0_i32, %c0_i32_0 : i32, i32, i32
  }
}

module attributes {stable_mosaic.version = 11 : i64} {
  func.func @kernel(%arg0: i32, %arg1: i32, %arg2: memref<8x1xi32, #tpu.memory_space<vmem>>, %arg3: memref<1x4x8x16xf32, #tpu.memory_space<vmem>>, %arg4: memref<1x1x16x128xbf16, #tpu.memory_space<vmem>>, %arg5: memref<1x32x128xbf16, #tpu.memory_space<vmem>>, %arg6: memref<1x1x128xf32, #tpu.memory_space<vmem>>, %arg7: memref<1x4x8x32xf32, #tpu.memory_space<vmem>>, %arg8: memref<1x8x32xf32, #tpu.memory_space<vmem>>, %arg9: memref<1x8x32xf32, #tpu.memory_space<vmem>>, %arg10: memref<8x32xf32, #tpu.memory_space<vmem>>, %arg11: memref<8x32xf32, #tpu.memory_space<vmem>>) attributes {dimension_semantics = [#tpu.dimension_semantics<parallel>, #tpu.dimension_semantics<arbitrary>], iteration_bounds = array<i64: 2, 2>, scalar_prefetch = 0 : i64, scratch_operands = 2 : i64, tpu.core_type = #tpu.core_type<tc>, window_params = [{pipeline_mode = #tpu.pipeline_mode<synchronous>, transform_indices = @transform_0, window_bounds = array<i64: 8, 1>}, {transform_indices = @transform_1, window_bounds = array<i64: 1, 4, 8, 16>}, {transform_indices = @transform_2, window_bounds = array<i64: 1, 1, 16, 128>}, {transform_indices = @transform_3, window_bounds = array<i64: 1, 32, 128>}, {transform_indices = @transform_4, window_bounds = array<i64: 1, 1, 128>}, {transform_indices = @transform_5, window_bounds = array<i64: 1, 4, 8, 32>}, {transform_indices = @transform_6, window_bounds = array<i64: 1, 8, 32>}, {transform_indices = @transform_7, window_bounds = array<i64: 1, 8, 32>}]} {
    %c0_i32 = arith.constant 0 : i32
    %0 = arith.cmpi eq, %arg1, %c0_i32 : i32
    %1 = arith.extui %0 : i1 to i32
    %c0_i32_0 = arith.constant 0 : i32
    %2 = arith.cmpi ne, %1, %c0_i32_0 : i32
    scf.if %2 {
      %cst_23 = arith.constant 0.000000e+00 : f32
      %33 = vector.broadcast %cst_23 : f32 to vector<8x32xf32>
      %c0_24 = arith.constant 0 : index
      %c0_25 = arith.constant 0 : index
      %34 = vector.load %arg10[%c0_24, %c0_25] : memref<8x32xf32, #tpu.memory_space<vmem>>, vector<8x32xf32>
      tpu.vector_store %arg10[%c0_24, %c0_25], %33 {strides = array<i32>} : memref<8x32xf32, #tpu.memory_space<vmem>>, vector<8x32xf32>,
      %cst_26 = arith.constant 0.000000e+00 : f32
      %35 = vector.broadcast %cst_26 : f32 to vector<8x32xf32>
      %c0_27 = arith.constant 0 : index
      %c0_28 = arith.constant 0 : index
      %36 = vector.load %arg11[%c0_27, %c0_28] : memref<8x32xf32, #tpu.memory_space<vmem>>, vector<8x32xf32>
      tpu.vector_store %arg11[%c0_27, %c0_28], %35 {strides = array<i32>} : memref<8x32xf32, #tpu.memory_space<vmem>>, vector<8x32xf32>,
    } else {
    }
    %c0 = arith.constant 0 : index
    %c0_1 = arith.constant 0 : index
    %c0_2 = arith.constant 0 : index
    %c0_3 = arith.constant 0 : index
    %3 = vector.load %arg3[%c0, %c0_1, %c0_2, %c0_3] : memref<1x4x8x16xf32, #tpu.memory_space<vmem>>, vector<1x4x8x16xf32>
    %4 = vector.shape_cast %3 : vector<1x4x8x16xf32> to vector<4x8x16xf32>
    %5 = vector.shape_cast %4 : vector<4x8x16xf32> to vector<32x16xf32>
    %6 = arith.truncf %5 : vector<32x16xf32> to vector<32x16xbf16>
    %c0_4 = arith.constant 0 : index
    %c0_5 = arith.constant 0 : index
    %c0_6 = arith.constant 0 : index
    %c0_7 = arith.constant 0 : index
    %7 = vector.load %arg4[%c0_4, %c0_5, %c0_6, %c0_7] : memref<1x1x16x128xbf16, #tpu.memory_space<vmem>>, vector<1x1x16x128xbf16>
    %8 = vector.shape_cast %7 : vector<1x1x16x128xbf16> to vector<16x128xbf16>
    %cst = arith.constant dense<0.000000e+00> : vector<32x128xf32>
    %9 = tpu.matmul %6, %8, %cst {dimension_numbers = #tpu.dot_dimension_numbers<[1], [0], [0], [1], [0, 0, 1, 1], [], []>} : vector<32x16xbf16>, vector<16x128xbf16>, vector<32x128xf32> -> vector<32x128xf32>
    %c0_8 = arith.constant 0 : index
    %c0_9 = arith.constant 0 : index
    %c0_10 = arith.constant 0 : index
    %10 = vector.load %arg6[%c0_8, %c0_9, %c0_10] : memref<1x1x128xf32, #tpu.memory_space<vmem>>, vector<1x1x128xf32>
    %11 = vector.shape_cast %10 : vector<1x1x128xf32> to vector<1x128xf32>
    %12 = vector.broadcast %11 : vector<1x128xf32> to vector<32x128xf32>
    %13 = arith.addf %9, %12 : vector<32x128xf32>
    %14 = vector.shape_cast %13 : vector<32x128xf32> to vector<4x8x128xf32>
    %c0_11 = arith.constant 0 : index
    %c0_12 = arith.constant 0 : index
    %c0_13 = arith.constant 0 : index
    %15 = vector.load %arg5[%c0_11, %c0_12, %c0_13] : memref<1x32x128xbf16, #tpu.memory_space<vmem>>, vector<1x32x128xbf16>
    %16 = vector.shape_cast %15 : vector<1x32x128xbf16> to vector<32x128xbf16>
    %c0_14 = arith.constant 0 : index
    %c0_15 = arith.constant 0 : index
    %17 = vector.load %arg2[%c0_14, %c0_15] : memref<8x1xi32, #tpu.memory_space<vmem>>, vector<8x1xi32>
    %c1_i32 = arith.constant 1 : i32
    %18 = arith.subi %c1_i32, %arg0 : i32
    %19 = arith.muli %18, %arg1 : i32
    %c1_i32_16 = arith.constant 1 : i32
    %20 = arith.subi %c1_i32_16, %arg1 : i32
    %21 = arith.muli %arg0, %20 : i32
    %22 = arith.addi %19, %21 : i32
    %c4_i32 = arith.constant 4 : i32
    %23 = arith.muli %22, %c4_i32 : i32
    %c0_i32_17 = arith.constant 0 : i32
    %24 = arith.cmpi eq, %arg0, %c0_i32_17 : i32
    %25 = arith.extui %24 : i1 to i32
    %c0_i32_18 = arith.constant 0 : i32
    %26 = arith.cmpi ne, %25, %c0_i32_18 : i32
    scf.if %26 {
      %c0_23 = arith.constant 0 : index
      %c0_24 = arith.constant 0 : index
      %33 = vector.load %arg10[%c0_23, %c0_24] : memref<8x32xf32, #tpu.memory_space<vmem>>, vector<8x32xf32>
      %c0_25 = arith.constant 0 : index
      %c0_26 = arith.constant 0 : index
      %34 = vector.load %arg11[%c0_25, %c0_26] : memref<8x32xf32, #tpu.memory_space<vmem>>, vector<8x32xf32>
      %35 = vector.extract_strided_slice %14 {offsets = [0, 0, 0], sizes = [1, 8, 128], strides = [1, 1, 1]} : vector<4x8x128xf32> to vector<1x8x128xf32>
      %36 = vector.shape_cast %35 : vector<1x8x128xf32> to vector<8x128xf32>
      %37 = arith.truncf %33 : vector<8x32xf32> to vector<8x32xbf16>
      %cst_27 = arith.constant dense<0.000000e+00> : vector<8x128xf32>
      %38 = tpu.matmul %37, %16, %cst_27 {dimension_numbers = #tpu.dot_dimension_numbers<[1], [0], [0], [1], [0, 0, 1, 1], [], []>} : vector<8x32xbf16>, vector<32x128xbf16>, vector<8x128xf32> -> vector<8x128xf32>
      %39 = arith.addf %36, %38 : vector<8x128xf32>
      %40 = vector.extract_strided_slice %39 {offsets = [0, 0], sizes = [8, 96], strides = [1, 1]} : vector<8x128xf32> to vector<8x96xf32>
      %41 = arith.negf %40 : vector<8x96xf32>
      %42 = math.exp %41 : vector<8x96xf32>
      %cst_28 = arith.constant 1.000000e+00 : f32
      %43 = vector.broadcast %cst_28 : f32 to vector<8x96xf32>
      %44 = arith.addf %43, %42 : vector<8x96xf32>
      %45 = arith.divf %43, %44 : vector<8x96xf32>
      %46 = vector.extract_strided_slice %45 {offsets = [0, 0], sizes = [8, 32], strides = [1, 1]} : vector<8x96xf32> to vector<8x32xf32>
      %47 = vector.extract_strided_slice %45 {offsets = [0, 32], sizes = [8, 32], strides = [1, 1]} : vector<8x96xf32> to vector<8x32xf32>
      %48 = vector.extract_strided_slice %45 {offsets = [0, 64], sizes = [8, 32], strides = [1, 1]} : vector<8x96xf32> to vector<8x32xf32>
      %49 = vector.extract_strided_slice %39 {offsets = [0, 96], sizes = [8, 32], strides = [1, 1]} : vector<8x128xf32> to vector<8x32xf32>
      %50 = math.tanh %49 : vector<8x32xf32>
      %51 = arith.mulf %47, %34 : vector<8x32xf32>
      %52 = arith.mulf %46, %50 : vector<8x32xf32>
      %53 = arith.addf %51, %52 : vector<8x32xf32>
      %54 = math.tanh %53 : vector<8x32xf32>
      %55 = arith.mulf %48, %54 : vector<8x32xf32>
      %c0_i32_29 = arith.constant 0 : i32
      %56 = arith.addi %23, %c0_i32_29 : i32
      %57 = vector.broadcast %56 : i32 to vector<8x1xi32>
      %58 = arith.cmpi sgt, %17, %57 : vector<8x1xi32>
      %cst_30 = arith.constant 0.000000e+00 : f32
      %59 = vector.broadcast %cst_30 : f32 to vector<8x32xf32>
      %60 = vector.shape_cast %58 : vector<8x1xi1> to vector<8x1xi1>
      %61 = vector.broadcast %60 : vector<8x1xi1> to vector<8x32xi1>
      %62 = arith.select %61, %55, %59 : vector<8x32xi1>, vector<8x32xf32>
      %c0_31 = arith.constant 0 : index
      %c0_32 = arith.constant 0 : index
      %c0_33 = arith.constant 0 : index
      %c0_34 = arith.constant 0 : index
      %63 = vector.load %arg7[%c0_31, %c0_32, %c0_33, %c0_34] : memref<1x4x8x32xf32, #tpu.memory_space<vmem>>, vector<1x1x8x32xf32>
      %64 = vector.shape_cast %63 : vector<1x1x8x32xf32> to vector<8x32xf32>
      %65 = vector.shape_cast %62 : vector<8x32xf32> to vector<1x1x8x32xf32>
      tpu.vector_store %arg7[%c0_31, %c0_32, %c0_33, %c0_34], %65 {strides = array<i32>} : memref<1x4x8x32xf32, #tpu.memory_space<vmem>>, vector<1x1x8x32xf32>,
      %66 = vector.shape_cast %58 : vector<8x1xi1> to vector<8x1xi1>
      %67 = vector.broadcast %66 : vector<8x1xi1> to vector<8x32xi1>
      %68 = arith.select %67, %55, %33 : vector<8x32xi1>, vector<8x32xf32>
      %69 = vector.shape_cast %58 : vector<8x1xi1> to vector<8x1xi1>
      %70 = vector.broadcast %69 : vector<8x1xi1> to vector<8x32xi1>
      %71 = arith.select %70, %53, %34 : vector<8x32xi1>, vector<8x32xf32>
      %72 = vector.extract_strided_slice %14 {offsets = [1, 0, 0], sizes = [1, 8, 128], strides = [1, 1, 1]} : vector<4x8x128xf32> to vector<1x8x128xf32>
      %73 = vector.shape_cast %72 : vector<1x8x128xf32> to vector<8x128xf32>
      %74 = arith.truncf %68 : vector<8x32xf32> to vector<8x32xbf16>
      %cst_35 = arith.constant dense<0.000000e+00> : vector<8x128xf32>
      %75 = tpu.matmul %74, %16, %cst_35 {dimension_numbers = #tpu.dot_dimension_numbers<[1], [0], [0], [1], [0, 0, 1, 1], [], []>} : vector<8x32xbf16>, vector<32x128xbf16>, vector<8x128xf32> -> vector<8x128xf32>
      %76 = arith.addf %73, %75 : vector<8x128xf32>
      %77 = vector.extract_strided_slice %76 {offsets = [0, 0], sizes = [8, 96], strides = [1, 1]} : vector<8x128xf32> to vector<8x96xf32>
      %78 = arith.negf %77 : vector<8x96xf32>
      %79 = math.exp %78 : vector<8x96xf32>
      %cst_36 = arith.constant 1.000000e+00 : f32
      %80 = vector.broadcast %cst_36 : f32 to vector<8x96xf32>
      %81 = arith.addf %80, %79 : vector<8x96xf32>
      %82 = arith.divf %80, %81 : vector<8x96xf32>
      %83 = vector.extract_strided_slice %82 {offsets = [0, 0], sizes = [8, 32], strides = [1, 1]} : vector<8x96xf32> to vector<8x32xf32>
      %84 = vector.extract_strided_slice %82 {offsets = [0, 32], sizes = [8, 32], strides = [1, 1]} : vector<8x96xf32> to vector<8x32xf32>
      %85 = vector.extract_strided_slice %82 {offsets = [0, 64], sizes = [8, 32], strides = [1, 1]} : vector<8x96xf32> to vector<8x32xf32>
      %86 = vector.extract_strided_slice %76 {offsets = [0, 96], sizes = [8, 32], strides = [1, 1]} : vector<8x128xf32> to vector<8x32xf32>
      %87 = math.tanh %86 : vector<8x32xf32>
      %88 = arith.mulf %84, %71 : vector<8x32xf32>
      %89 = arith.mulf %83, %87 : vector<8x32xf32>
      %90 = arith.addf %88, %89 : vector<8x32xf32>
      %91 = math.tanh %90 : vector<8x32xf32>
      %92 = arith.mulf %85, %91 : vector<8x32xf32>
      %c1_i32_37 = arith.constant 1 : i32
      %93 = arith.addi %23, %c1_i32_37 : i32
      %94 = vector.broadcast %93 : i32 to vector<8x1xi32>
      %95 = arith.cmpi sgt, %17, %94 : vector<8x1xi32>
      %cst_38 = arith.constant 0.000000e+00 : f32
      %96 = vector.broadcast %cst_38 : f32 to vector<8x32xf32>
      %97 = vector.shape_cast %95 : vector<8x1xi1> to vector<8x1xi1>
      %98 = vector.broadcast %97 : vector<8x1xi1> to vector<8x32xi1>
      %99 = arith.select %98, %92, %96 : vector<8x32xi1>, vector<8x32xf32>
      %c0_39 = arith.constant 0 : index
      %c1 = arith.constant 1 : index
      %c0_40 = arith.constant 0 : index
      %c0_41 = arith.constant 0 : index
      %100 = vector.load %arg7[%c0_39, %c1, %c0_40, %c0_41] : memref<1x4x8x32xf32, #tpu.memory_space<vmem>>, vector<1x1x8x32xf32>
      %101 = vector.shape_cast %100 : vector<1x1x8x32xf32> to vector<8x32xf32>
      %102 = vector.shape_cast %99 : vector<8x32xf32> to vector<1x1x8x32xf32>
      tpu.vector_store %arg7[%c0_39, %c1, %c0_40, %c0_41], %102 {strides = array<i32>} : memref<1x4x8x32xf32, #tpu.memory_space<vmem>>, vector<1x1x8x32xf32>,
      %103 = vector.shape_cast %95 : vector<8x1xi1> to vector<8x1xi1>
      %104 = vector.broadcast %103 : vector<8x1xi1> to vector<8x32xi1>
      %105 = arith.select %104, %92, %68 : vector<8x32xi1>, vector<8x32xf32>
      %106 = vector.shape_cast %95 : vector<8x1xi1> to vector<8x1xi1>
      %107 = vector.broadcast %106 : vector<8x1xi1> to vector<8x32xi1>
      %108 = arith.select %107, %90, %71 : vector<8x32xi1>, vector<8x32xf32>
      %109 = vector.extract_strided_slice %14 {offsets = [2, 0, 0], sizes = [1, 8, 128], strides = [1, 1, 1]} : vector<4x8x128xf32> to vector<1x8x128xf32>
      %110 = vector.shape_cast %109 : vector<1x8x128xf32> to vector<8x128xf32>
      %111 = arith.truncf %105 : vector<8x32xf32> to vector<8x32xbf16>
      %cst_42 = arith.constant dense<0.000000e+00> : vector<8x128xf32>
      %112 = tpu.matmul %111, %16, %cst_42 {dimension_numbers = #tpu.dot_dimension_numbers<[1], [0], [0], [1], [0, 0, 1, 1], [], []>} : vector<8x32xbf16>, vector<32x128xbf16>, vector<8x128xf32> -> vector<8x128xf32>
      %113 = arith.addf %110, %112 : vector<8x128xf32>
      %114 = vector.extract_strided_slice %113 {offsets = [0, 0], sizes = [8, 96], strides = [1, 1]} : vector<8x128xf32> to vector<8x96xf32>
      %115 = arith.negf %114 : vector<8x96xf32>
      %116 = math.exp %115 : vector<8x96xf32>
      %cst_43 = arith.constant 1.000000e+00 : f32
      %117 = vector.broadcast %cst_43 : f32 to vector<8x96xf32>
      %118 = arith.addf %117, %116 : vector<8x96xf32>
      %119 = arith.divf %117, %118 : vector<8x96xf32>
      %120 = vector.extract_strided_slice %119 {offsets = [0, 0], sizes = [8, 32], strides = [1, 1]} : vector<8x96xf32> to vector<8x32xf32>
      %121 = vector.extract_strided_slice %119 {offsets = [0, 32], sizes = [8, 32], strides = [1, 1]} : vector<8x96xf32> to vector<8x32xf32>
      %122 = vector.extract_strided_slice %119 {offsets = [0, 64], sizes = [8, 32], strides = [1, 1]} : vector<8x96xf32> to vector<8x32xf32>
      %123 = vector.extract_strided_slice %113 {offsets = [0, 96], sizes = [8, 32], strides = [1, 1]} : vector<8x128xf32> to vector<8x32xf32>
      %124 = math.tanh %123 : vector<8x32xf32>
      %125 = arith.mulf %121, %108 : vector<8x32xf32>
      %126 = arith.mulf %120, %124 : vector<8x32xf32>
      %127 = arith.addf %125, %126 : vector<8x32xf32>
      %128 = math.tanh %127 : vector<8x32xf32>
      %129 = arith.mulf %122, %128 : vector<8x32xf32>
      %c2_i32 = arith.constant 2 : i32
      %130 = arith.addi %23, %c2_i32 : i32
      %131 = vector.broadcast %130 : i32 to vector<8x1xi32>
      %132 = arith.cmpi sgt, %17, %131 : vector<8x1xi32>
      %cst_44 = arith.constant 0.000000e+00 : f32
      %133 = vector.broadcast %cst_44 : f32 to vector<8x32xf32>
      %134 = vector.shape_cast %132 : vector<8x1xi1> to vector<8x1xi1>
      %135 = vector.broadcast %134 : vector<8x1xi1> to vector<8x32xi1>
      %136 = arith.select %135, %129, %133 : vector<8x32xi1>, vector<8x32xf32>
      %c0_45 = arith.constant 0 : index
      %c2 = arith.constant 2 : index
      %c0_46 = arith.constant 0 : index
      %c0_47 = arith.constant 0 : index
      %137 = vector.load %arg7[%c0_45, %c2, %c0_46, %c0_47] : memref<1x4x8x32xf32, #tpu.memory_space<vmem>>, vector<1x1x8x32xf32>
      %138 = vector.shape_cast %137 : vector<1x1x8x32xf32> to vector<8x32xf32>
      %139 = vector.shape_cast %136 : vector<8x32xf32> to vector<1x1x8x32xf32>
      tpu.vector_store %arg7[%c0_45, %c2, %c0_46, %c0_47], %139 {strides = array<i32>} : memref<1x4x8x32xf32, #tpu.memory_space<vmem>>, vector<1x1x8x32xf32>,
      %140 = vector.shape_cast %132 : vector<8x1xi1> to vector<8x1xi1>
      %141 = vector.broadcast %140 : vector<8x1xi1> to vector<8x32xi1>
      %142 = arith.select %141, %129, %105 : vector<8x32xi1>, vector<8x32xf32>
      %143 = vector.shape_cast %132 : vector<8x1xi1> to vector<8x1xi1>
      %144 = vector.broadcast %143 : vector<8x1xi1> to vector<8x32xi1>
      %145 = arith.select %144, %127, %108 : vector<8x32xi1>, vector<8x32xf32>
      %146 = vector.extract_strided_slice %14 {offsets = [3, 0, 0], sizes = [1, 8, 128], strides = [1, 1, 1]} : vector<4x8x128xf32> to vector<1x8x128xf32>
      %147 = vector.shape_cast %146 : vector<1x8x128xf32> to vector<8x128xf32>
      %148 = arith.truncf %142 : vector<8x32xf32> to vector<8x32xbf16>
      %cst_48 = arith.constant dense<0.000000e+00> : vector<8x128xf32>
      %149 = tpu.matmul %148, %16, %cst_48 {dimension_numbers = #tpu.dot_dimension_numbers<[1], [0], [0], [1], [0, 0, 1, 1], [], []>} : vector<8x32xbf16>, vector<32x128xbf16>, vector<8x128xf32> -> vector<8x128xf32>
      %150 = arith.addf %147, %149 : vector<8x128xf32>
      %151 = vector.extract_strided_slice %150 {offsets = [0, 0], sizes = [8, 96], strides = [1, 1]} : vector<8x128xf32> to vector<8x96xf32>
      %152 = arith.negf %151 : vector<8x96xf32>
      %153 = math.exp %152 : vector<8x96xf32>
      %cst_49 = arith.constant 1.000000e+00 : f32
      %154 = vector.broadcast %cst_49 : f32 to vector<8x96xf32>
      %155 = arith.addf %154, %153 : vector<8x96xf32>
      %156 = arith.divf %154, %155 : vector<8x96xf32>
      %157 = vector.extract_strided_slice %156 {offsets = [0, 0], sizes = [8, 32], strides = [1, 1]} : vector<8x96xf32> to vector<8x32xf32>
      %158 = vector.extract_strided_slice %156 {offsets = [0, 32], sizes = [8, 32], strides = [1, 1]} : vector<8x96xf32> to vector<8x32xf32>
      %159 = vector.extract_strided_slice %156 {offsets = [0, 64], sizes = [8, 32], strides = [1, 1]} : vector<8x96xf32> to vector<8x32xf32>
      %160 = vector.extract_strided_slice %150 {offsets = [0, 96], sizes = [8, 32], strides = [1, 1]} : vector<8x128xf32> to vector<8x32xf32>
      %161 = math.tanh %160 : vector<8x32xf32>
      %162 = arith.mulf %158, %145 : vector<8x32xf32>
      %163 = arith.mulf %157, %161 : vector<8x32xf32>
      %164 = arith.addf %162, %163 : vector<8x32xf32>
      %165 = math.tanh %164 : vector<8x32xf32>
      %166 = arith.mulf %159, %165 : vector<8x32xf32>
      %c3_i32 = arith.constant 3 : i32
      %167 = arith.addi %23, %c3_i32 : i32
      %168 = vector.broadcast %167 : i32 to vector<8x1xi32>
      %169 = arith.cmpi sgt, %17, %168 : vector<8x1xi32>
      %cst_50 = arith.constant 0.000000e+00 : f32
      %170 = vector.broadcast %cst_50 : f32 to vector<8x32xf32>
      %171 = vector.shape_cast %169 : vector<8x1xi1> to vector<8x1xi1>
      %172 = vector.broadcast %171 : vector<8x1xi1> to vector<8x32xi1>
      %173 = arith.select %172, %166, %170 : vector<8x32xi1>, vector<8x32xf32>
      %c0_51 = arith.constant 0 : index
      %c3 = arith.constant 3 : index
      %c0_52 = arith.constant 0 : index
      %c0_53 = arith.constant 0 : index
      %174 = vector.load %arg7[%c0_51, %c3, %c0_52, %c0_53] : memref<1x4x8x32xf32, #tpu.memory_space<vmem>>, vector<1x1x8x32xf32>
      %175 = vector.shape_cast %174 : vector<1x1x8x32xf32> to vector<8x32xf32>
      %176 = vector.shape_cast %173 : vector<8x32xf32> to vector<1x1x8x32xf32>
      tpu.vector_store %arg7[%c0_51, %c3, %c0_52, %c0_53], %176 {strides = array<i32>} : memref<1x4x8x32xf32, #tpu.memory_space<vmem>>, vector<1x1x8x32xf32>,
      %177 = vector.shape_cast %169 : vector<8x1xi1> to vector<8x1xi1>
      %178 = vector.broadcast %177 : vector<8x1xi1> to vector<8x32xi1>
      %179 = arith.select %178, %166, %142 : vector<8x32xi1>, vector<8x32xf32>
      %180 = vector.shape_cast %169 : vector<8x1xi1> to vector<8x1xi1>
      %181 = vector.broadcast %180 : vector<8x1xi1> to vector<8x32xi1>
      %182 = arith.select %181, %164, %145 : vector<8x32xi1>, vector<8x32xf32>
      %c0_54 = arith.constant 0 : index
      %c0_55 = arith.constant 0 : index
      %183 = vector.load %arg10[%c0_54, %c0_55] : memref<8x32xf32, #tpu.memory_space<vmem>>, vector<8x32xf32>
      tpu.vector_store %arg10[%c0_54, %c0_55], %179 {strides = array<i32>} : memref<8x32xf32, #tpu.memory_space<vmem>>, vector<8x32xf32>,
      %c0_56 = arith.constant 0 : index
      %c0_57 = arith.constant 0 : index
      %184 = vector.load %arg11[%c0_56, %c0_57] : memref<8x32xf32, #tpu.memory_space<vmem>>, vector<8x32xf32>
      tpu.vector_store %arg11[%c0_56, %c0_57], %182 {strides = array<i32>} : memref<8x32xf32, #tpu.memory_space<vmem>>, vector<8x32xf32>,
    } else {
    }
    %c1_i32_19 = arith.constant 1 : i32
    %27 = arith.cmpi eq, %arg0, %c1_i32_19 : i32
    %28 = arith.extui %27 : i1 to i32
    %c0_i32_20 = arith.constant 0 : i32
    %29 = arith.cmpi ne, %28, %c0_i32_20 : i32
    scf.if %29 {
      %c0_23 = arith.constant 0 : index
      %c0_24 = arith.constant 0 : index
      %33 = vector.load %arg10[%c0_23, %c0_24] : memref<8x32xf32, #tpu.memory_space<vmem>>, vector<8x32xf32>
      %c0_25 = arith.constant 0 : index
      %c0_26 = arith.constant 0 : index
      %34 = vector.load %arg11[%c0_25, %c0_26] : memref<8x32xf32, #tpu.memory_space<vmem>>, vector<8x32xf32>
      %35 = vector.extract_strided_slice %14 {offsets = [3, 0, 0], sizes = [1, 8, 128], strides = [1, 1, 1]} : vector<4x8x128xf32> to vector<1x8x128xf32>
      %36 = vector.shape_cast %35 : vector<1x8x128xf32> to vector<8x128xf32>
      %37 = arith.truncf %33 : vector<8x32xf32> to vector<8x32xbf16>
      %cst_27 = arith.constant dense<0.000000e+00> : vector<8x128xf32>
      %38 = tpu.matmul %37, %16, %cst_27 {dimension_numbers = #tpu.dot_dimension_numbers<[1], [0], [0], [1], [0, 0, 1, 1], [], []>} : vector<8x32xbf16>, vector<32x128xbf16>, vector<8x128xf32> -> vector<8x128xf32>
      %39 = arith.addf %36, %38 : vector<8x128xf32>
      %40 = vector.extract_strided_slice %39 {offsets = [0, 0], sizes = [8, 96], strides = [1, 1]} : vector<8x128xf32> to vector<8x96xf32>
      %41 = arith.negf %40 : vector<8x96xf32>
      %42 = math.exp %41 : vector<8x96xf32>
      %cst_28 = arith.constant 1.000000e+00 : f32
      %43 = vector.broadcast %cst_28 : f32 to vector<8x96xf32>
      %44 = arith.addf %43, %42 : vector<8x96xf32>
      %45 = arith.divf %43, %44 : vector<8x96xf32>
      %46 = vector.extract_strided_slice %45 {offsets = [0, 0], sizes = [8, 32], strides = [1, 1]} : vector<8x96xf32> to vector<8x32xf32>
      %47 = vector.extract_strided_slice %45 {offsets = [0, 32], sizes = [8, 32], strides = [1, 1]} : vector<8x96xf32> to vector<8x32xf32>
      %48 = vector.extract_strided_slice %45 {offsets = [0, 64], sizes = [8, 32], strides = [1, 1]} : vector<8x96xf32> to vector<8x32xf32>
      %49 = vector.extract_strided_slice %39 {offsets = [0, 96], sizes = [8, 32], strides = [1, 1]} : vector<8x128xf32> to vector<8x32xf32>
      %50 = math.tanh %49 : vector<8x32xf32>
      %51 = arith.mulf %47, %34 : vector<8x32xf32>
      %52 = arith.mulf %46, %50 : vector<8x32xf32>
      %53 = arith.addf %51, %52 : vector<8x32xf32>
      %54 = math.tanh %53 : vector<8x32xf32>
      %55 = arith.mulf %48, %54 : vector<8x32xf32>
      %c3_i32 = arith.constant 3 : i32
      %56 = arith.addi %23, %c3_i32 : i32
      %57 = vector.broadcast %56 : i32 to vector<8x1xi32>
      %58 = arith.cmpi sgt, %17, %57 : vector<8x1xi32>
      %cst_29 = arith.constant 0.000000e+00 : f32
      %59 = vector.broadcast %cst_29 : f32 to vector<8x32xf32>
      %60 = vector.shape_cast %58 : vector<8x1xi1> to vector<8x1xi1>
      %61 = vector.broadcast %60 : vector<8x1xi1> to vector<8x32xi1>
      %62 = arith.select %61, %55, %59 : vector<8x32xi1>, vector<8x32xf32>
      %c0_30 = arith.constant 0 : index
      %c3 = arith.constant 3 : index
      %c0_31 = arith.constant 0 : index
      %c0_32 = arith.constant 0 : index
      %63 = vector.load %arg7[%c0_30, %c3, %c0_31, %c0_32] : memref<1x4x8x32xf32, #tpu.memory_space<vmem>>, vector<1x1x8x32xf32>
      %64 = vector.shape_cast %63 : vector<1x1x8x32xf32> to vector<8x32xf32>
      %65 = vector.shape_cast %62 : vector<8x32xf32> to vector<1x1x8x32xf32>
      tpu.vector_store %arg7[%c0_30, %c3, %c0_31, %c0_32], %65 {strides = array<i32>} : memref<1x4x8x32xf32, #tpu.memory_space<vmem>>, vector<1x1x8x32xf32>,
      %66 = vector.shape_cast %58 : vector<8x1xi1> to vector<8x1xi1>
      %67 = vector.broadcast %66 : vector<8x1xi1> to vector<8x32xi1>
      %68 = arith.select %67, %55, %33 : vector<8x32xi1>, vector<8x32xf32>
      %69 = vector.shape_cast %58 : vector<8x1xi1> to vector<8x1xi1>
      %70 = vector.broadcast %69 : vector<8x1xi1> to vector<8x32xi1>
      %71 = arith.select %70, %53, %34 : vector<8x32xi1>, vector<8x32xf32>
      %72 = vector.extract_strided_slice %14 {offsets = [2, 0, 0], sizes = [1, 8, 128], strides = [1, 1, 1]} : vector<4x8x128xf32> to vector<1x8x128xf32>
      %73 = vector.shape_cast %72 : vector<1x8x128xf32> to vector<8x128xf32>
      %74 = arith.truncf %68 : vector<8x32xf32> to vector<8x32xbf16>
      %cst_33 = arith.constant dense<0.000000e+00> : vector<8x128xf32>
      %75 = tpu.matmul %74, %16, %cst_33 {dimension_numbers = #tpu.dot_dimension_numbers<[1], [0], [0], [1], [0, 0, 1, 1], [], []>} : vector<8x32xbf16>, vector<32x128xbf16>, vector<8x128xf32> -> vector<8x128xf32>
      %76 = arith.addf %73, %75 : vector<8x128xf32>
      %77 = vector.extract_strided_slice %76 {offsets = [0, 0], sizes = [8, 96], strides = [1, 1]} : vector<8x128xf32> to vector<8x96xf32>
      %78 = arith.negf %77 : vector<8x96xf32>
      %79 = math.exp %78 : vector<8x96xf32>
      %cst_34 = arith.constant 1.000000e+00 : f32
      %80 = vector.broadcast %cst_34 : f32 to vector<8x96xf32>
      %81 = arith.addf %80, %79 : vector<8x96xf32>
      %82 = arith.divf %80, %81 : vector<8x96xf32>
      %83 = vector.extract_strided_slice %82 {offsets = [0, 0], sizes = [8, 32], strides = [1, 1]} : vector<8x96xf32> to vector<8x32xf32>
      %84 = vector.extract_strided_slice %82 {offsets = [0, 32], sizes = [8, 32], strides = [1, 1]} : vector<8x96xf32> to vector<8x32xf32>
      %85 = vector.extract_strided_slice %82 {offsets = [0, 64], sizes = [8, 32], strides = [1, 1]} : vector<8x96xf32> to vector<8x32xf32>
      %86 = vector.extract_strided_slice %76 {offsets = [0, 96], sizes = [8, 32], strides = [1, 1]} : vector<8x128xf32> to vector<8x32xf32>
      %87 = math.tanh %86 : vector<8x32xf32>
      %88 = arith.mulf %84, %71 : vector<8x32xf32>
      %89 = arith.mulf %83, %87 : vector<8x32xf32>
      %90 = arith.addf %88, %89 : vector<8x32xf32>
      %91 = math.tanh %90 : vector<8x32xf32>
      %92 = arith.mulf %85, %91 : vector<8x32xf32>
      %c2_i32 = arith.constant 2 : i32
      %93 = arith.addi %23, %c2_i32 : i32
      %94 = vector.broadcast %93 : i32 to vector<8x1xi32>
      %95 = arith.cmpi sgt, %17, %94 : vector<8x1xi32>
      %cst_35 = arith.constant 0.000000e+00 : f32
      %96 = vector.broadcast %cst_35 : f32 to vector<8x32xf32>
      %97 = vector.shape_cast %95 : vector<8x1xi1> to vector<8x1xi1>
      %98 = vector.broadcast %97 : vector<8x1xi1> to vector<8x32xi1>
      %99 = arith.select %98, %92, %96 : vector<8x32xi1>, vector<8x32xf32>
      %c0_36 = arith.constant 0 : index
      %c2 = arith.constant 2 : index
      %c0_37 = arith.constant 0 : index
      %c0_38 = arith.constant 0 : index
      %100 = vector.load %arg7[%c0_36, %c2, %c0_37, %c0_38] : memref<1x4x8x32xf32, #tpu.memory_space<vmem>>, vector<1x1x8x32xf32>
      %101 = vector.shape_cast %100 : vector<1x1x8x32xf32> to vector<8x32xf32>
      %102 = vector.shape_cast %99 : vector<8x32xf32> to vector<1x1x8x32xf32>
      tpu.vector_store %arg7[%c0_36, %c2, %c0_37, %c0_38], %102 {strides = array<i32>} : memref<1x4x8x32xf32, #tpu.memory_space<vmem>>, vector<1x1x8x32xf32>,
      %103 = vector.shape_cast %95 : vector<8x1xi1> to vector<8x1xi1>
      %104 = vector.broadcast %103 : vector<8x1xi1> to vector<8x32xi1>
      %105 = arith.select %104, %92, %68 : vector<8x32xi1>, vector<8x32xf32>
      %106 = vector.shape_cast %95 : vector<8x1xi1> to vector<8x1xi1>
      %107 = vector.broadcast %106 : vector<8x1xi1> to vector<8x32xi1>
      %108 = arith.select %107, %90, %71 : vector<8x32xi1>, vector<8x32xf32>
      %109 = vector.extract_strided_slice %14 {offsets = [1, 0, 0], sizes = [1, 8, 128], strides = [1, 1, 1]} : vector<4x8x128xf32> to vector<1x8x128xf32>
      %110 = vector.shape_cast %109 : vector<1x8x128xf32> to vector<8x128xf32>
      %111 = arith.truncf %105 : vector<8x32xf32> to vector<8x32xbf16>
      %cst_39 = arith.constant dense<0.000000e+00> : vector<8x128xf32>
      %112 = tpu.matmul %111, %16, %cst_39 {dimension_numbers = #tpu.dot_dimension_numbers<[1], [0], [0], [1], [0, 0, 1, 1], [], []>} : vector<8x32xbf16>, vector<32x128xbf16>, vector<8x128xf32> -> vector<8x128xf32>
      %113 = arith.addf %110, %112 : vector<8x128xf32>
      %114 = vector.extract_strided_slice %113 {offsets = [0, 0], sizes = [8, 96], strides = [1, 1]} : vector<8x128xf32> to vector<8x96xf32>
      %115 = arith.negf %114 : vector<8x96xf32>
      %116 = math.exp %115 : vector<8x96xf32>
      %cst_40 = arith.constant 1.000000e+00 : f32
      %117 = vector.broadcast %cst_40 : f32 to vector<8x96xf32>
      %118 = arith.addf %117, %116 : vector<8x96xf32>
      %119 = arith.divf %117, %118 : vector<8x96xf32>
      %120 = vector.extract_strided_slice %119 {offsets = [0, 0], sizes = [8, 32], strides = [1, 1]} : vector<8x96xf32> to vector<8x32xf32>
      %121 = vector.extract_strided_slice %119 {offsets = [0, 32], sizes = [8, 32], strides = [1, 1]} : vector<8x96xf32> to vector<8x32xf32>
      %122 = vector.extract_strided_slice %119 {offsets = [0, 64], sizes = [8, 32], strides = [1, 1]} : vector<8x96xf32> to vector<8x32xf32>
      %123 = vector.extract_strided_slice %113 {offsets = [0, 96], sizes = [8, 32], strides = [1, 1]} : vector<8x128xf32> to vector<8x32xf32>
      %124 = math.tanh %123 : vector<8x32xf32>
      %125 = arith.mulf %121, %108 : vector<8x32xf32>
      %126 = arith.mulf %120, %124 : vector<8x32xf32>
      %127 = arith.addf %125, %126 : vector<8x32xf32>
      %128 = math.tanh %127 : vector<8x32xf32>
      %129 = arith.mulf %122, %128 : vector<8x32xf32>
      %c1_i32_41 = arith.constant 1 : i32
      %130 = arith.addi %23, %c1_i32_41 : i32
      %131 = vector.broadcast %130 : i32 to vector<8x1xi32>
      %132 = arith.cmpi sgt, %17, %131 : vector<8x1xi32>
      %cst_42 = arith.constant 0.000000e+00 : f32
      %133 = vector.broadcast %cst_42 : f32 to vector<8x32xf32>
      %134 = vector.shape_cast %132 : vector<8x1xi1> to vector<8x1xi1>
      %135 = vector.broadcast %134 : vector<8x1xi1> to vector<8x32xi1>
      %136 = arith.select %135, %129, %133 : vector<8x32xi1>, vector<8x32xf32>
      %c0_43 = arith.constant 0 : index
      %c1 = arith.constant 1 : index
      %c0_44 = arith.constant 0 : index
      %c0_45 = arith.constant 0 : index
      %137 = vector.load %arg7[%c0_43, %c1, %c0_44, %c0_45] : memref<1x4x8x32xf32, #tpu.memory_space<vmem>>, vector<1x1x8x32xf32>
      %138 = vector.shape_cast %137 : vector<1x1x8x32xf32> to vector<8x32xf32>
      %139 = vector.shape_cast %136 : vector<8x32xf32> to vector<1x1x8x32xf32>
      tpu.vector_store %arg7[%c0_43, %c1, %c0_44, %c0_45], %139 {strides = array<i32>} : memref<1x4x8x32xf32, #tpu.memory_space<vmem>>, vector<1x1x8x32xf32>,
      %140 = vector.shape_cast %132 : vector<8x1xi1> to vector<8x1xi1>
      %141 = vector.broadcast %140 : vector<8x1xi1> to vector<8x32xi1>
      %142 = arith.select %141, %129, %105 : vector<8x32xi1>, vector<8x32xf32>
      %143 = vector.shape_cast %132 : vector<8x1xi1> to vector<8x1xi1>
      %144 = vector.broadcast %143 : vector<8x1xi1> to vector<8x32xi1>
      %145 = arith.select %144, %127, %108 : vector<8x32xi1>, vector<8x32xf32>
      %146 = vector.extract_strided_slice %14 {offsets = [0, 0, 0], sizes = [1, 8, 128], strides = [1, 1, 1]} : vector<4x8x128xf32> to vector<1x8x128xf32>
      %147 = vector.shape_cast %146 : vector<1x8x128xf32> to vector<8x128xf32>
      %148 = arith.truncf %142 : vector<8x32xf32> to vector<8x32xbf16>
      %cst_46 = arith.constant dense<0.000000e+00> : vector<8x128xf32>
      %149 = tpu.matmul %148, %16, %cst_46 {dimension_numbers = #tpu.dot_dimension_numbers<[1], [0], [0], [1], [0, 0, 1, 1], [], []>} : vector<8x32xbf16>, vector<32x128xbf16>, vector<8x128xf32> -> vector<8x128xf32>
      %150 = arith.addf %147, %149 : vector<8x128xf32>
      %151 = vector.extract_strided_slice %150 {offsets = [0, 0], sizes = [8, 96], strides = [1, 1]} : vector<8x128xf32> to vector<8x96xf32>
      %152 = arith.negf %151 : vector<8x96xf32>
      %153 = math.exp %152 : vector<8x96xf32>
      %cst_47 = arith.constant 1.000000e+00 : f32
      %154 = vector.broadcast %cst_47 : f32 to vector<8x96xf32>
      %155 = arith.addf %154, %153 : vector<8x96xf32>
      %156 = arith.divf %154, %155 : vector<8x96xf32>
      %157 = vector.extract_strided_slice %156 {offsets = [0, 0], sizes = [8, 32], strides = [1, 1]} : vector<8x96xf32> to vector<8x32xf32>
      %158 = vector.extract_strided_slice %156 {offsets = [0, 32], sizes = [8, 32], strides = [1, 1]} : vector<8x96xf32> to vector<8x32xf32>
      %159 = vector.extract_strided_slice %156 {offsets = [0, 64], sizes = [8, 32], strides = [1, 1]} : vector<8x96xf32> to vector<8x32xf32>
      %160 = vector.extract_strided_slice %150 {offsets = [0, 96], sizes = [8, 32], strides = [1, 1]} : vector<8x128xf32> to vector<8x32xf32>
      %161 = math.tanh %160 : vector<8x32xf32>
      %162 = arith.mulf %158, %145 : vector<8x32xf32>
      %163 = arith.mulf %157, %161 : vector<8x32xf32>
      %164 = arith.addf %162, %163 : vector<8x32xf32>
      %165 = math.tanh %164 : vector<8x32xf32>
      %166 = arith.mulf %159, %165 : vector<8x32xf32>
      %c0_i32_48 = arith.constant 0 : i32
      %167 = arith.addi %23, %c0_i32_48 : i32
      %168 = vector.broadcast %167 : i32 to vector<8x1xi32>
      %169 = arith.cmpi sgt, %17, %168 : vector<8x1xi32>
      %cst_49 = arith.constant 0.000000e+00 : f32
      %170 = vector.broadcast %cst_49 : f32 to vector<8x32xf32>
      %171 = vector.shape_cast %169 : vector<8x1xi1> to vector<8x1xi1>
      %172 = vector.broadcast %171 : vector<8x1xi1> to vector<8x32xi1>
      %173 = arith.select %172, %166, %170 : vector<8x32xi1>, vector<8x32xf32>
      %c0_50 = arith.constant 0 : index
      %c0_51 = arith.constant 0 : index
      %c0_52 = arith.constant 0 : index
      %c0_53 = arith.constant 0 : index
      %174 = vector.load %arg7[%c0_50, %c0_51, %c0_52, %c0_53] : memref<1x4x8x32xf32, #tpu.memory_space<vmem>>, vector<1x1x8x32xf32>
      %175 = vector.shape_cast %174 : vector<1x1x8x32xf32> to vector<8x32xf32>
      %176 = vector.shape_cast %173 : vector<8x32xf32> to vector<1x1x8x32xf32>
      tpu.vector_store %arg7[%c0_50, %c0_51, %c0_52, %c0_53], %176 {strides = array<i32>} : memref<1x4x8x32xf32, #tpu.memory_space<vmem>>, vector<1x1x8x32xf32>,
      %177 = vector.shape_cast %169 : vector<8x1xi1> to vector<8x1xi1>
      %178 = vector.broadcast %177 : vector<8x1xi1> to vector<8x32xi1>
      %179 = arith.select %178, %166, %142 : vector<8x32xi1>, vector<8x32xf32>
      %180 = vector.shape_cast %169 : vector<8x1xi1> to vector<8x1xi1>
      %181 = vector.broadcast %180 : vector<8x1xi1> to vector<8x32xi1>
      %182 = arith.select %181, %164, %145 : vector<8x32xi1>, vector<8x32xf32>
      %c0_54 = arith.constant 0 : index
      %c0_55 = arith.constant 0 : index
      %183 = vector.load %arg10[%c0_54, %c0_55] : memref<8x32xf32, #tpu.memory_space<vmem>>, vector<8x32xf32>
      tpu.vector_store %arg10[%c0_54, %c0_55], %179 {strides = array<i32>} : memref<8x32xf32, #tpu.memory_space<vmem>>, vector<8x32xf32>,
      %c0_56 = arith.constant 0 : index
      %c0_57 = arith.constant 0 : index
      %184 = vector.load %arg11[%c0_56, %c0_57] : memref<8x32xf32, #tpu.memory_space<vmem>>, vector<8x32xf32>
      tpu.vector_store %arg11[%c0_56, %c0_57], %182 {strides = array<i32>} : memref<8x32xf32, #tpu.memory_space<vmem>>, vector<8x32xf32>,
    } else {
    }
    %c1_i32_21 = arith.constant 1 : i32
    %30 = arith.cmpi eq, %arg1, %c1_i32_21 : i32
    %31 = arith.extui %30 : i1 to i32
    %c0_i32_22 = arith.constant 0 : i32
    %32 = arith.cmpi ne, %31, %c0_i32_22 : i32
    scf.if %32 {
      %c0_23 = arith.constant 0 : index
      %c0_24 = arith.constant 0 : index
      %33 = vector.load %arg10[%c0_23, %c0_24] : memref<8x32xf32, #tpu.memory_space<vmem>>, vector<8x32xf32>
      %c0_25 = arith.constant 0 : index
      %c0_26 = arith.constant 0 : index
      %c0_27 = arith.constant 0 : index
      %34 = vector.load %arg8[%c0_25, %c0_26, %c0_27] : memref<1x8x32xf32, #tpu.memory_space<vmem>>, vector<1x8x32xf32>
      %35 = vector.shape_cast %34 : vector<1x8x32xf32> to vector<8x32xf32>
      %36 = vector.shape_cast %33 : vector<8x32xf32> to vector<1x8x32xf32>
      tpu.vector_store %arg8[%c0_25, %c0_26, %c0_27], %36 {strides = array<i32>} : memref<1x8x32xf32, #tpu.memory_space<vmem>>, vector<1x8x32xf32>,
      %c0_28 = arith.constant 0 : index
      %c0_29 = arith.constant 0 : index
      %37 = vector.load %arg11[%c0_28, %c0_29] : memref<8x32xf32, #tpu.memory_space<vmem>>, vector<8x32xf32>
      %c0_30 = arith.constant 0 : index
      %c0_31 = arith.constant 0 : index
      %c0_32 = arith.constant 0 : index
      %38 = vector.load %arg9[%c0_30, %c0_31, %c0_32] : memref<1x8x32xf32, #tpu.memory_space<vmem>>, vector<1x8x32xf32>
      %39 = vector.shape_cast %38 : vector<1x8x32xf32> to vector<8x32xf32>
      %40 = vector.shape_cast %37 : vector<8x32xf32> to vector<1x8x32xf32>
      tpu.vector_store %arg9[%c0_30, %c0_31, %c0_32], %40 {strides = array<i32>} : memref<1x8x32xf32, #tpu.memory_space<vmem>>, vector<1x8x32xf32>,
    } else {
    }
    return
  }
  func.func @transform_0(%arg0: i32, %arg1: i32) -> (i32, i32) {
    %c0_i32 = arith.constant 0 : i32
    %c0_i32_0 = arith.constant 0 : i32
    %c0_i32_1 = arith.constant 0 : i32
    return %c0_i32, %c0_i32_0 : i32, i32
  }
  func.func @transform_1(%arg0: i32, %arg1: i32) -> (i32, i32, i32, i32) {
    %c1_i32 = arith.constant 1 : i32
    %0 = arith.subi %c1_i32, %arg0 : i32
    %1 = arith.muli %0, %arg1 : i32
    %c1_i32_0 = arith.constant 1 : i32
    %2 = arith.subi %c1_i32_0, %arg1 : i32
    %3 = arith.muli %arg0, %2 : i32
    %4 = arith.addi %1, %3 : i32
    %c0_i32 = arith.constant 0 : i32
    %c0_i32_1 = arith.constant 0 : i32
    %c0_i32_2 = arith.constant 0 : i32
    %c0_i32_3 = arith.constant 0 : i32
    return %c0_i32, %4, %c0_i32_1, %c0_i32_2 : i32, i32, i32, i32
  }
  func.func @transform_2(%arg0: i32, %arg1: i32) -> (i32, i32, i32, i32) {
    %c0_i32 = arith.constant 0 : i32
    %c0_i32_0 = arith.constant 0 : i32
    %c0_i32_1 = arith.constant 0 : i32
    %c0_i32_2 = arith.constant 0 : i32
    return %arg0, %c0_i32, %c0_i32_0, %c0_i32_1 : i32, i32, i32, i32
  }
  func.func @transform_3(%arg0: i32, %arg1: i32) -> (i32, i32, i32) {
    %c0_i32 = arith.constant 0 : i32
    %c0_i32_0 = arith.constant 0 : i32
    %c0_i32_1 = arith.constant 0 : i32
    return %arg0, %c0_i32, %c0_i32_0 : i32, i32, i32
  }
  func.func @transform_4(%arg0: i32, %arg1: i32) -> (i32, i32, i32) {
    %c0_i32 = arith.constant 0 : i32
    %c0_i32_0 = arith.constant 0 : i32
    %c0_i32_1 = arith.constant 0 : i32
    return %arg0, %c0_i32, %c0_i32_0 : i32, i32, i32
  }
  func.func @transform_5(%arg0: i32, %arg1: i32) -> (i32, i32, i32, i32) {
    %c1_i32 = arith.constant 1 : i32
    %0 = arith.subi %c1_i32, %arg0 : i32
    %1 = arith.muli %0, %arg1 : i32
    %c1_i32_0 = arith.constant 1 : i32
    %2 = arith.subi %c1_i32_0, %arg1 : i32
    %3 = arith.muli %arg0, %2 : i32
    %4 = arith.addi %1, %3 : i32
    %c0_i32 = arith.constant 0 : i32
    %c0_i32_1 = arith.constant 0 : i32
    %c0_i32_2 = arith.constant 0 : i32
    return %arg0, %4, %c0_i32, %c0_i32_1 : i32, i32, i32, i32
  }
  func.func @transform_6(%arg0: i32, %arg1: i32) -> (i32, i32, i32) {
    %c0_i32 = arith.constant 0 : i32
    %c0_i32_0 = arith.constant 0 : i32
    %c0_i32_1 = arith.constant 0 : i32
    return %arg0, %c0_i32, %c0_i32_0 : i32, i32, i32
  }
  func.func @transform_7(%arg0: i32, %arg1: i32) -> (i32, i32, i32) {
    %c0_i32 = arith.constant 0 : i32
    %c0_i32_0 = arith.constant 0 : i32
    %c0_i32_1 = arith.constant 0 : i32
    return %arg0, %c0_i32, %c0_i32_0 : i32, i32, i32
  }
}

</mosaic_0001>

<llo_original>
// kernel: encoder_forward.3
$region0: #{encoder_forward.3}
  #allocation0 [shape = 'u32[]', space=smem, size = 0x4, offset = 0x4, fixed_abs, tag = 'smem constant byte address 0x4 - core index']
  #allocation1 [shape = 'u32[144,128]{1,0:T(1,128)}', space=vmem, size = 0x12000, scoped, tag = 'internal scratch']
  #allocation2 [shape = 'f32[8,32]{1,0:T(8,128)}', space=vmem, size = 0x1000, scoped, tag = 'scratch operand']
  #allocation3 [shape = 'f32[8,32]{1,0:T(8,128)}', space=vmem, size = 0x1000, scoped, tag = 'scratch operand']
  %s0 = inlined_call_operand.vmem [shape: s32[8,1], index: 0, kind: input, shape index: {}]
  %s1 = inlined_call_operand.vmem [shape: f32[2,8,8,32], index: 1, kind: input, shape index: {}]
  %s2 = inlined_call_operand.vmem [shape: bf16[2,2,32,128], index: 2, kind: input, shape index: {}]
  %s3 = inlined_call_operand.vmem [shape: bf16[2,32,128], index: 3, kind: input, shape index: {}]
  %s4 = inlined_call_operand.vmem [shape: f32[2,1,128], index: 4, kind: input, shape index: {}]
  %s5 = inlined_call_operand.vmem [shape: f32[2,8,8,32], index: 5, kind: output, shape index: {0}]
  %s6 = inlined_call_operand.vmem [shape: f32[2,8,32], index: 6, kind: output, shape index: {1}]
  %s7 = inlined_call_operand.vmem [shape: f32[2,8,32], index: 7, kind: output, shape index: {2}]
  %8 = xla_tuple %s5, %s6, %s7
  %s9 = sld [smem:[#allocation0]]
  $region123: #{encoder_forward.3} parent=0
    _
  %s11 = ssub.s32 1, %s9
  %s12 = scalar_select 0, %s11, %s9
  $region1: #{encoder_forward.3} parent=0
    #allocation4 [shape = 'u8[65536]{0}', space=vmem, size = 0x10000, scoped, tag = 'input window, operand 1']
    loop: start=0, step=1, limit=6
    $region2: #{encoder_forward.3} parent=1 // loop_pre_header
      _
    $region3: #{encoder_forward.3} parent=1 // loop_header
      %s14 = sphi 0, %s18
      %p15 = scmp.ge.s32.totalorder %s14, 6
      %s21 = sphi 0, %s33
      %s22 = sphi 0, %s29
      %s23 = sphi 0, %s21
      %s24 = sphi 0, %s22
      %s25 = sphi 0, %s23
      %s26 = sphi 0, %s24
      %s34 = sphi 0, %s34
      %s36 = sphi 0, %s34
      %s37 = sphi 0, %s36
      %s51 = sphi 0, %s37
      %s67 = sphi 0, %s69
      %s70 = sphi 0, %s67
      %s71 = sphi 0, %s70
      %s87 = sphi 0, %s71
      %s93 = sphi 0, %s95
      %s96 = sphi 0, %s93
      %s97 = sphi 0, %s96
      %s113 = sphi 0, %s97
      %s119 = sphi 0, %s121
      %s122 = sphi 0, %s119
      %s123 = sphi 0, %s122
      %s139 = sphi 0, %s123
      %s145 = sphi 0, %s147
      %s148 = sphi 0, %s145
      %s149 = sphi 0, %s148
      %s165 = sphi 0, %s149
      %s183 = sphi 0, %s185
      %s186 = sphi 0, %s183
      %s187 = sphi 0, %s186
      %s203 = sphi 0, %s187
      %s209 = sphi 0, %s211
      %s212 = sphi 0, %s209
      %s213 = sphi 0, %s212
      %s229 = sphi 0, %s213
      %s235 = sphi 0, %s237
      %s238 = sphi 0, %s235
      %s239 = sphi 0, %s238
      %s255 = sphi 0, %s239
    $region4: #{encoder_forward.3} parent=1 // loop_header_branch
      %17 = sbr.rel (%p15) target = $region8
    $region5: #{encoder_forward.3} parent=1 // loop_body
      %s19 = ssub.s32 %s14, 1
      %s20 = ssub.s32 %s14, 2
      %s27 = sadd.s32 1, %s22
      %p28 = scmp.ge.s32.totalorder %s27, 2
      %s29 = scalar_select %p28, 0, %s27
      %s30 = sadd.s32 1, %s21
      %s31 = scalar_select %p28, %s30, %s21
      %p32 = scmp.ge.s32.totalorder %s31, 2
      %s33 = scalar_select %p32, 0, %s31
      %s35 = sadd.s32 %s34, 1
      %p38 = scmp.eq.s32.totalorder %s14, 3
      %p39 = scmp.ne.s32.totalorder %s34, %s36
      %p40 = scmp.eq.s32.totalorder %s14, 0
      %p41 = por %p39, %p40
      %p42 = scmp.ne.s32.totalorder %s34, %s36
      %p43 = scmp.eq.s32.totalorder %s19, 3
      %p44 = por %p42, %p43
      %p45 = scmp.ne.s32.totalorder %s36, %s37
      %p46 = scmp.eq.s32.totalorder %s19, 0
      %p47 = por %p45, %p46
      %p48 = scmp.ne.s32.totalorder %s36, %s37
      %p49 = scmp.eq.s32.totalorder %s20, 3
      %p50 = por %p48, %p49
      %p52 = scmp.ne.s32.totalorder %s37, %s51
      %p53 = scmp.eq.s32.totalorder %s20, 0
      %p54 = por %p52, %p53
      %s55 = ssub.s32 1, %s21
      %s56 = smul.u32 %s55, %s22
      %s57 = ssub.s32 1, %s22
      %s58 = smul.u32 %s21, %s57
      %s59 = sadd.s32 %s56, %s58
      %s60 = ssub.s32 1, %s33
      %s61 = smul.u32 %s60, %s29
      %s62 = ssub.s32 1, %s29
      %s63 = smul.u32 %s33, %s62
      %s64 = sadd.s32 %s61, %s63
      %s65 = ssub.s32 %s59, %s64
      %p66 = scmp.eq.s32.totalorder %s65, 0
      %s68 = sadd.s32 %s67, 1
      %s69 = scalar_select %p66, %s67, %s68
      %p72 = pneg %p66
      %p73 = scmp.eq.s32.totalorder %s14, 3
      %p74 = por %p72, %p73
      %p75 = scmp.ne.s32.totalorder %s67, %s70
      %p76 = scmp.eq.s32.totalorder %s14, 0
      %p77 = por %p75, %p76
      %p78 = scmp.ne.s32.totalorder %s67, %s70
      %p79 = scmp.eq.s32.totalorder %s19, 3
      %p80 = por %p78, %p79
      %p81 = scmp.ne.s32.totalorder %s70, %s71
      %p82 = scmp.eq.s32.totalorder %s19, 0
      %p83 = por %p81, %p82
      %p84 = scmp.ne.s32.totalorder %s70, %s71
      %p85 = scmp.eq.s32.totalorder %s20, 3
      %p86 = por %p84, %p85
      %p88 = scmp.ne.s32.totalorder %s71, %s87
      %p89 = scmp.eq.s32.totalorder %s20, 0
      %p90 = por %p88, %p89
      %s91 = ssub.s32 %s21, %s33
      %p92 = scmp.eq.s32.totalorder %s91, 0
      %s94 = sadd.s32 %s93, 1
      %s95 = scalar_select %p92, %s93, %s94
      %p98 = pneg %p92
      %p99 = scmp.eq.s32.totalorder %s14, 3
      %p100 = por %p98, %p99
      %p101 = scmp.ne.s32.totalorder %s93, %s96
      %p102 = scmp.eq.s32.totalorder %s14, 0
      %p103 = por %p101, %p102
      %p104 = scmp.ne.s32.totalorder %s93, %s96
      %p105 = scmp.eq.s32.totalorder %s19, 3
      %p106 = por %p104, %p105
      %p107 = scmp.ne.s32.totalorder %s96, %s97
      %p108 = scmp.eq.s32.totalorder %s19, 0
      %p109 = por %p107, %p108
      %p110 = scmp.ne.s32.totalorder %s96, %s97
      %p111 = scmp.eq.s32.totalorder %s20, 3
      %p112 = por %p110, %p111
      %p114 = scmp.ne.s32.totalorder %s97, %s113
      %p115 = scmp.eq.s32.totalorder %s20, 0
      %p116 = por %p114, %p115
      %s117 = ssub.s32 %s21, %s33
      %p118 = scmp.eq.s32.totalorder %s117, 0
      %s120 = sadd.s32 %s119, 1
      %s121 = scalar_select %p118, %s119, %s120
      %p124 = pneg %p118
      %p125 = scmp.eq.s32.totalorder %s14, 3
      %p126 = por %p124, %p125
      %p127 = scmp.ne.s32.totalorder %s119, %s122
      %p128 = scmp.eq.s32.totalorder %s14, 0
      %p129 = por %p127, %p128
      %p130 = scmp.ne.s32.totalorder %s119, %s122
      %p131 = scmp.eq.s32.totalorder %s19, 3
      %p132 = por %p130, %p131
      %p133 = scmp.ne.s32.totalorder %s122, %s123
      %p134 = scmp.eq.s32.totalorder %s19, 0
      %p135 = por %p133, %p134
      %p136 = scmp.ne.s32.totalorder %s122, %s123
      %p137 = scmp.eq.s32.totalorder %s20, 3
      %p138 = por %p136, %p137
      %p140 = scmp.ne.s32.totalorder %s123, %s139
      %p141 = scmp.eq.s32.totalorder %s20, 0
      %p142 = por %p140, %p141
      %s143 = ssub.s32 %s21, %s33
      %p144 = scmp.eq.s32.totalorder %s143, 0
      %s146 = sadd.s32 %s145, 1
      %s147 = scalar_select %p144, %s145, %s146
      %p150 = pneg %p144
      %p151 = scmp.eq.s32.totalorder %s14, 3
      %p152 = por %p150, %p151
      %p153 = scmp.ne.s32.totalorder %s145, %s148
      %p154 = scmp.eq.s32.totalorder %s14, 0
      %p155 = por %p153, %p154
      %p156 = scmp.ne.s32.totalorder %s145, %s148
      %p157 = scmp.eq.s32.totalorder %s19, 3
      %p158 = por %p156, %p157
      %p159 = scmp.ne.s32.totalorder %s148, %s149
      %p160 = scmp.eq.s32.totalorder %s19, 0
      %p161 = por %p159, %p160
      %p162 = scmp.ne.s32.totalorder %s148, %s149
      %p163 = scmp.eq.s32.totalorder %s20, 3
      %p164 = por %p162, %p163
      %p166 = scmp.ne.s32.totalorder %s149, %s165
      %p167 = scmp.eq.s32.totalorder %s20, 0
      %p168 = por %p166, %p167
      %s169 = ssub.s32 1, %s21
      %s170 = smul.u32 %s169, %s22
      %s171 = ssub.s32 1, %s22
      %s172 = smul.u32 %s21, %s171
      %s173 = sadd.s32 %s170, %s172
      %s174 = ssub.s32 1, %s33
      %s175 = smul.u32 %s174, %s29
      %s176 = ssub.s32 1, %s29
      %s177 = smul.u32 %s33, %s176
      %s178 = sadd.s32 %s175, %s177
      %s179 = ssub.s32 %s21, %s33
      %s180 = ssub.s32 %s173, %s178
      %s181 = sor.u32 %s179, %s180
      %p182 = scmp.eq.s32.totalorder %s181, 0
      %s184 = sadd.s32 %s183, 1
      %s185 = scalar_select %p182, %s183, %s184
      %p188 = pneg %p182
      %p189 = scmp.eq.s32.totalorder %s14, 3
      %p190 = por %p188, %p189
      %p191 = scmp.ne.s32.totalorder %s183, %s186
      %p192 = scmp.eq.s32.totalorder %s14, 0
      %p193 = por %p191, %p192
      %p194 = scmp.ne.s32.totalorder %s183, %s186
      %p195 = scmp.eq.s32.totalorder %s19, 3
      %p196 = por %p194, %p195
      %p197 = scmp.ne.s32.totalorder %s186, %s187
      %p198 = scmp.eq.s32.totalorder %s19, 0
      %p199 = por %p197, %p198
      %p200 = scmp.ne.s32.totalorder %s186, %s187
      %p201 = scmp.eq.s32.totalorder %s20, 3
      %p202 = por %p200, %p201
      %p204 = scmp.ne.s32.totalorder %s187, %s203
      %p205 = scmp.eq.s32.totalorder %s20, 0
      %p206 = por %p204, %p205
      %s207 = ssub.s32 %s21, %s33
      %p208 = scmp.eq.s32.totalorder %s207, 0
      %s210 = sadd.s32 %s209, 1
      %s211 = scalar_select %p208, %s209, %s210
      %p214 = pneg %p208
      %p215 = scmp.eq.s32.totalorder %s14, 3
      %p216 = por %p214, %p215
      %p217 = scmp.ne.s32.totalorder %s209, %s212
      %p218 = scmp.eq.s32.totalorder %s14, 0
      %p219 = por %p217, %p218
      %p220 = scmp.ne.s32.totalorder %s209, %s212
      %p221 = scmp.eq.s32.totalorder %s19, 3
      %p222 = por %p220, %p221
      %p223 = scmp.ne.s32.totalorder %s212, %s213
      %p224 = scmp.eq.s32.totalorder %s19, 0
      %p225 = por %p223, %p224
      %p226 = scmp.ne.s32.totalorder %s212, %s213
      %p227 = scmp.eq.s32.totalorder %s20, 3
      %p228 = por %p226, %p227
      %p230 = scmp.ne.s32.totalorder %s213, %s229
      %p231 = scmp.eq.s32.totalorder %s20, 0
      %p232 = por %p230, %p231
      %s233 = ssub.s32 %s21, %s33
      %p234 = scmp.eq.s32.totalorder %s233, 0
      %s236 = sadd.s32 %s235, 1
      %s237 = scalar_select %p234, %s235, %s236
      %p240 = pneg %p234
      %p241 = scmp.eq.s32.totalorder %s14, 3
      %p242 = por %p240, %p241
      %p243 = scmp.ne.s32.totalorder %s235, %s238
      %p244 = scmp.eq.s32.totalorder %s14, 0
      %p245 = por %p243, %p244
      %p246 = scmp.ne.s32.totalorder %s235, %s238
      %p247 = scmp.eq.s32.totalorder %s19, 3
      %p248 = por %p246, %p247
      %p249 = scmp.ne.s32.totalorder %s238, %s239
      %p250 = scmp.eq.s32.totalorder %s19, 0
      %p251 = por %p249, %p250
      %p252 = scmp.ne.s32.totalorder %s238, %s239
      %p253 = scmp.eq.s32.totalorder %s20, 3
      %p254 = por %p252, %p253
      %p256 = scmp.ne.s32.totalorder %s239, %s255
      %p257 = scmp.eq.s32.totalorder %s20, 0
      %p258 = por %p256, %p257
      %p259 = scmp.le.s32.totalorder 1, %s14
      %p260 = scmp.lt.s32.totalorder %s14, 5
      %p261 = pnand %p259, %p260
      %p262 = pneg %p261
      // Predicated region
      $region9: #{encoder_forward.3} parent=5 // pred_check
        _
      $region10: #{encoder_forward.3} parent=5 // pred_check_branch
        %264 = sbr.rel (%p261) target = $region12
      $region11: #{encoder_forward.3} parent=5 // pred_region
        %s265 = ssub.s32 %s14, 1
        // Predicated region
        $region13: #{encoder_forward.3} parent=11 // pred_check
          %p266 = pneg %p47
        $region14: #{encoder_forward.3} parent=11 // pred_check_branch
          %268 = sbr.rel (%p266) target = $region16
        $region15: #{encoder_forward.3} parent=11 // pred_region
          _
        $region16: #{encoder_forward.3} parent=11 // pred_fallthru
          _
      $region12: #{encoder_forward.3} parent=5 // pred_fallthru
        _
      %p269 = scmp.lt.s32.totalorder %s14, 4
      // Predicated region
      $region17: #{encoder_forward.3} parent=5 // pred_check
        %p270 = pneg %p269
      $region18: #{encoder_forward.3} parent=5 // pred_check_branch
        %272 = sbr.rel (%p270) target = $region20
      $region19: #{encoder_forward.3} parent=5 // pred_region
        // Predicated region
        $region21: #{encoder_forward.3} parent=19 // pred_check
          %p273 = pneg %p77
        $region22: #{encoder_forward.3} parent=19 // pred_check_branch
          %275 = sbr.rel (%p273) target = $region24
        $region23: #{encoder_forward.3} parent=19 // pred_region
          %s276 = sand.u32 %s67, 1
          %s277 = sand.u32 %s67, 1
          %s278 = smul.addr %s277, 64
          %s279 = scalar_lea.vmem [#allocation4], %s278
          %s280 = ssub.s32 1, %s21
          %s281 = smul.u32 %s280, %s22
          %s282 = ssub.s32 1, %s22
          %s283 = smul.u32 %s21, %s282
          %s284 = sadd.s32 %s281, %s283
          %s285 = smul.u32 4, %s284
          %s286 = smul.addr %s285, 8
          %s287 = scalar_lea.vmem %s1, %s286
          // Predicated region
          $region25: #{encoder_forward.3} parent=23 // pred_check
            _
          $region26: #{encoder_forward.3} parent=23 // pred_check_branch
            %289 = sbr.rel (0) target = $region28
          $region27: #{encoder_forward.3} parent=23 // pred_region
            // Predicated region
            $region29: #{encoder_forward.3} parent=27 // pred_check
              _
            $region30: #{encoder_forward.3} parent=27 // pred_check_branch
              %291 = sbr.rel (0) target = $region32
            $region31: #{encoder_forward.3} parent=27 // pred_region
              // Predicated region
              $region44: #{encoder_forward.3} parent=31 // pred_check
                _
              $region45: #{encoder_forward.3} parent=31 // pred_check_branch
                %320 = sbr.rel (0) target = $region47
              $region46: #{encoder_forward.3} parent=31 // pred_region
                loop: start=0, step=1, limit=1
                $region48: #{encoder_forward.3} parent=46 // loop_pre_header
                  _
                $region49: #{encoder_forward.3} parent=46 // loop_header
                  %s322 = sphi 0, %s326
                  %p323 = scmp.ge.s32.totalorder %s322, 1
                  %s327 = sphi %s287, %s287
                  %s328 = sphi %s279, %s279
                $region50: #{encoder_forward.3} parent=46 // loop_header_branch
                  %325 = sbr.rel (%p323) target = $region54
                $region51: #{encoder_forward.3} parent=46 // loop_body
                  %v329 = vld [vmem:[%s327] sm:$0xff]
                  %330 = vst [vmem:[%s328] sm:$0xff] %v329
                  %v331 = vld [vmem:[%s327 + $0x8] sm:$0xff]
                  %332 = vst [vmem:[%s328 + $0x8] sm:$0xff] %v331
                  %v333 = vld [vmem:[%s327 + $0x10] sm:$0xff]
                  %334 = vst [vmem:[%s328 + $0x10] sm:$0xff] %v333
                  %v335 = vld [vmem:[%s327 + $0x18] sm:$0xff]
                  %336 = vst [vmem:[%s328 + $0x18] sm:$0xff] %v335
                  %v337 = vld [vmem:[%s327 + $0x40] sm:$0xff]
                  %338 = vst [vmem:[%s328 + $0x20] sm:$0xff] %v337
                  %v339 = vld [vmem:[%s327 + $0x48] sm:$0xff]
                  %340 = vst [vmem:[%s328 + $0x28] sm:$0xff] %v339
                  %v341 = vld [vmem:[%s327 + $0x50] sm:$0xff]
                  %342 = vst [vmem:[%s328 + $0x30] sm:$0xff] %v341
                  %v343 = vld [vmem:[%s327 + $0x58] sm:$0xff]
                  %344 = vst [vmem:[%s328 + $0x38] sm:$0xff] %v343
                $region52: #{encoder_forward.3} parent=46 // loop_footer
                  %s326 = sadd.s32 1, %s322
                $region53: #{encoder_forward.3} parent=46 // loop_footer_branch
                  %321 = sbr.rel target = $region49
                $region54: #{encoder_forward.3} parent=46 // loop_exit
                  _
              $region47: #{encoder_forward.3} parent=31 // pred_fallthru
                _
              // Predicated region
              $region55: #{encoder_forward.3} parent=31 // pred_check
                _
              $region56: #{encoder_forward.3} parent=31 // pred_check_branch
                %346 = sbr.rel target = $region58
              $region57: #{encoder_forward.3} parent=31 // pred_region
                _
              $region58: #{encoder_forward.3} parent=31 // pred_fallthru
                _
            $region32: #{encoder_forward.3} parent=27 // pred_fallthru
              _
            // Predicated region
            $region33: #{encoder_forward.3} parent=27 // pred_check
              _
            $region34: #{encoder_forward.3} parent=27 // pred_check_branch
              %293 = sbr.rel target = $region36
            $region35: #{encoder_forward.3} parent=27 // pred_region
              loop: start=0, step=1, limit=1
              $region37: #{encoder_forward.3} parent=35 // loop_pre_header
                _
              $region38: #{encoder_forward.3} parent=35 // loop_header
                %s296 = sphi 0, %s300
                %p297 = scmp.ge.s32.totalorder %s296, 1
                %s301 = sphi %s287, %s287
                %s302 = sphi %s279, %s279
              $region39: #{encoder_forward.3} parent=35 // loop_header_branch
                %299 = sbr.rel (%p297) target = $region43
              $region40: #{encoder_forward.3} parent=35 // loop_body
                %v303 = vld [vmem:[%s301] sm:$0xff]
                %304 = vst [vmem:[%s302] sm:$0xff] %v303
                %v305 = vld [vmem:[%s301 + $0x8] sm:$0xff]
                %306 = vst [vmem:[%s302 + $0x8] sm:$0xff] %v305
                %v307 = vld [vmem:[%s301 + $0x10] sm:$0xff]
                %308 = vst [vmem:[%s302 + $0x10] sm:$0xff] %v307
                %v309 = vld [vmem:[%s301 + $0x18] sm:$0xff]
                %310 = vst [vmem:[%s302 + $0x18] sm:$0xff] %v309
                %v311 = vld [vmem:[%s301 + $0x40] sm:$0xff]
                %312 = vst [vmem:[%s302 + $0x20] sm:$0xff] %v311
                %v313 = vld [vmem:[%s301 + $0x48] sm:$0xff]
                %314 = vst [vmem:[%s302 + $0x28] sm:$0xff] %v313
                %v315 = vld [vmem:[%s301 + $0x50] sm:$0xff]
                %316 = vst [vmem:[%s302 + $0x30] sm:$0xff] %v315
                %v317 = vld [vmem:[%s301 + $0x58] sm:$0xff]
                %318 = vst [vmem:[%s302 + $0x38] sm:$0xff] %v317
              $region41: #{encoder_forward.3} parent=35 // loop_footer
                %s300 = sadd.s32 1, %s296
              $region42: #{encoder_forward.3} parent=35 // loop_footer_branch
                %295 = sbr.rel target = $region38
              $region43: #{encoder_forward.3} parent=35 // loop_exit
                _
            $region36: #{encoder_forward.3} parent=27 // pred_fallthru
              _
          $region28: #{encoder_forward.3} parent=23 // pred_fallthru
            _
          %347 = vnop
        $region24: #{encoder_forward.3} parent=19 // pred_fallthru
          _
        // Predicated region
        $region59: #{encoder_forward.3} parent=19 // pred_check
          %p348 = pneg %p103
        $region60: #{encoder_forward.3} parent=19 // pred_check_branch
          %350 = sbr.rel (%p348) target = $region62
        $region61: #{encoder_forward.3} parent=19 // pred_region
          %p351 = scmp.lt.s32.totalorder %s21, 1
          %s352 = scalar_select %p351, %s21, 1
          %s353 = smul.addr %s352, 8
          %s354 = smul.addr %s353, 4
          %s355 = scalar_lea.vmem %s2, %s354
        $region62: #{encoder_forward.3} parent=19 // pred_fallthru
          _
        // Predicated region
        $region63: #{encoder_forward.3} parent=19 // pred_check
          %p356 = pneg %p129
        $region64: #{encoder_forward.3} parent=19 // pred_check_branch
          %358 = sbr.rel (%p356) target = $region66
        $region65: #{encoder_forward.3} parent=19 // pred_region
          %p359 = scmp.lt.s32.totalorder %s21, 1
          %s360 = scalar_select %p359, %s21, 1
          %s361 = smul.addr %s360, 4
          %s362 = smul.addr %s361, 4
          %s363 = scalar_lea.vmem %s3, %s362
        $region66: #{encoder_forward.3} parent=19 // pred_fallthru
          _
        // Predicated region
        $region67: #{encoder_forward.3} parent=19 // pred_check
          %p364 = pneg %p155
        $region68: #{encoder_forward.3} parent=19 // pred_check_branch
          %366 = sbr.rel (%p364) target = $region70
        $region69: #{encoder_forward.3} parent=19 // pred_region
          %p367 = scmp.lt.s32.totalorder %s21, 1
          %s368 = scalar_select %p367, %s21, 1
          %s369 = scalar_lea.vmem %s4, %s368
        $region70: #{encoder_forward.3} parent=19 // pred_fallthru
          _
      $region20: #{encoder_forward.3} parent=5 // pred_fallthru
        _
      %p370 = scmp.le.s32.totalorder 1, %s14
      %p371 = scmp.lt.s32.totalorder %s14, 5
      %p372 = pnand %p370, %p371
      %p373 = pneg %p372
      // Predicated region
      $region71: #{encoder_forward.3} parent=5 // pred_check
        _
      $region72: #{encoder_forward.3} parent=5 // pred_check_branch
        %375 = sbr.rel (%p372) target = $region74
      $region73: #{encoder_forward.3} parent=5 // pred_region
        %s376 = ssub.s32 %s14, 1
        %s377 = sand.u32 %s70, 1
        %s378 = sand.u32 %s70, 1
        %s379 = smul.addr %s378, 64
        %s380 = scalar_lea.vmem [#allocation4], %s379
        // Predicated region
        $region75: #{encoder_forward.3} parent=73 // pred_check
          %p381 = pneg %p83
        $region76: #{encoder_forward.3} parent=73 // pred_check_branch
          %383 = sbr.rel (%p381) target = $region78
        $region77: #{encoder_forward.3} parent=73 // pred_region
          _
        $region78: #{encoder_forward.3} parent=73 // pred_fallthru
          _
        %p384 = pneg %p47
        %p385 = pneg %p44
        %s386 = sand.u32 %s70, 1
        %s387 = sand.u32 %s70, 1
        %s388 = smul.addr %s387, 64
        %s389 = scalar_lea.vmem [#allocation4], %s388
        %p390 = pneg %p83
        %p391 = pneg %p80
        %p392 = scmp.lt.s32.totalorder %s23, 1
        %s393 = scalar_select %p392, %s23, 1
        %s394 = smul.addr %s393, 8
        %s395 = smul.addr %s394, 4
        %s396 = scalar_lea.vmem %s2, %s395
        %p397 = pneg %p109
        %p398 = pneg %p106
        %p399 = scmp.lt.s32.totalorder %s23, 1
        %s400 = scalar_select %p399, %s23, 1
        %s401 = smul.addr %s400, 4
        %s402 = smul.addr %s401, 4
        %s403 = scalar_lea.vmem %s3, %s402
        %p404 = pneg %p135
        %p405 = pneg %p132
        %p406 = scmp.lt.s32.totalorder %s23, 1
        %s407 = scalar_select %p406, %s23, 1
        %s408 = scalar_lea.vmem %s4, %s407
        %p409 = pneg %p161
        %p410 = pneg %p158
        %p411 = pneg %p199
        %p412 = pneg %p196
        %s413 = ssub.s32 1, %s23
        %s414 = smul.u32 %s413, %s24
        %s415 = ssub.s32 1, %s24
        %s416 = smul.u32 %s23, %s415
        %s417 = sadd.s32 %s414, %s416
        %s418 = smul.u32 4, %s417
        %p419 = scmp.lt.s32.totalorder %s23, 1
        %s420 = scalar_select %p419, %s23, 1
        %p421 = scmp.lt.s32.totalorder %s418, 7
        %s422 = scalar_select %p421, %s418, 7
        %s423 = smul.addr %s420, 8
        %s424 = sadd.s32 %s422, %s423
        %s425 = smul.addr %s424, 8
        %s426 = scalar_lea.vmem %s5, %s425
        %p427 = pneg %p225
        %p428 = pneg %p222
        %p429 = scmp.lt.s32.totalorder %s23, 1
        %s430 = scalar_select %p429, %s23, 1
        %s431 = smul.addr %s430, 8
        %s432 = scalar_lea.vmem %s6, %s431
        %p433 = pneg %p251
        %p434 = pneg %p248
        %p435 = scmp.lt.s32.totalorder %s23, 1
        %s436 = scalar_select %p435, %s23, 1
        %s437 = smul.addr %s436, 8
        %s438 = scalar_lea.vmem %s7, %s437
        %s439 = ssub.s32 1, %s23
        %s440 = smul.u32 %s439, %s24
        %s441 = ssub.s32 1, %s24
        %s442 = smul.u32 %s23, %s441
        %s443 = sadd.s32 %s440, %s442
        %s444 = smul.u32 4, %s443
        %p445 = scmp.lt.s32.totalorder %s23, 1
        %s446 = scalar_select %p445, %s23, 1
        %s447 = smul.addr %s446, 8
        %s448 = smul.addr %s447, 4
        %s449 = scalar_lea.vmem %s2, %s448
        %p450 = scmp.lt.s32.totalorder %s23, 1
        %s451 = scalar_select %p450, %s23, 1
        %s452 = smul.addr %s451, 4
        %s453 = smul.addr %s452, 4
        %s454 = scalar_lea.vmem %s3, %s453
        %p455 = scmp.lt.s32.totalorder %s23, 1
        %s456 = scalar_select %p455, %s23, 1
        %s457 = scalar_lea.vmem %s4, %s456
        %s458 = ssub.s32 1, %s23
        %s459 = smul.u32 %s458, %s24
        %s460 = ssub.s32 1, %s24
        %s461 = smul.u32 %s23, %s460
        %s462 = sadd.s32 %s459, %s461
        %s463 = smul.u32 4, %s462
        %p464 = scmp.lt.s32.totalorder %s23, 1
        %s465 = scalar_select %p464, %s23, 1
        %p466 = scmp.lt.s32.totalorder %s463, 7
        %s467 = scalar_select %p466, %s463, 7
        %s468 = smul.addr %s465, 8
        %s469 = sadd.s32 %s467, %s468
        %s470 = smul.addr %s469, 8
        %s471 = scalar_lea.vmem %s5, %s470
        %s472 = ssub.s32 1, %s23
        %s473 = smul.u32 %s472, %s24
        %s474 = ssub.s32 1, %s24
        %s475 = smul.u32 %s23, %s474
        %s476 = sadd.s32 %s473, %s475
        %s477 = smul.u32 4, %s476
        %p478 = scmp.lt.s32.totalorder %s23, 1
        %s479 = scalar_select %p478, %s23, 1
        %s480 = smul.addr %s479, 8
        %s481 = scalar_lea.vmem %s6, %s480
        %p482 = scmp.lt.s32.totalorder %s23, 1
        %s483 = scalar_select %p482, %s23, 1
        %s484 = smul.addr %s483, 8
        %s485 = scalar_lea.vmem %s7, %s484
        %p487 = scmp.eq.s32.totalorder %s24, 0
        // Predicated region
        $region79: #{encoder_forward.3} parent=73 // pred_check
          %p488 = pneg %p487
        $region80: #{encoder_forward.3} parent=73 // pred_check_branch
          %490 = sbr.rel (%p488) target = $region82
        $region81: #{encoder_forward.3} parent=73 // pred_region
          %vm491 = vcmask 261120
          %492 = vst.msk [vmem:[#allocation2] sm:$0xff] %vm491, 0.0
          %493 = vst.msk [vmem:[#allocation3] sm:$0xff] %vm491, 0.0
        $region82: #{encoder_forward.3} parent=73 // pred_fallthru
          _
        %v494 = vld [vmem:[%s380] sm:$0xff]
        %v495 = vld [vmem:[%s380 + $0x8] sm:$0xff]
        %v496 = vld [vmem:[%s380 + $0x10] sm:$0xff]
        %v497 = vld [vmem:[%s380 + $0x18] sm:$0xff]
        %v498 = vld [vmem:[%s380 + $0x20] sm:$0xff]
        %v499 = vld [vmem:[%s380 + $0x28] sm:$0xff]
        %v500 = vld [vmem:[%s380 + $0x30] sm:$0xff]
        %v501 = vld [vmem:[%s380 + $0x38] sm:$0xff]
        %v502 = vpack.c.bf16 %v495, %v494
        %v503 = vpack.c.bf16 %v497, %v496
        %v504 = vld [vmem:[%s449] sm:$0xf]
        %v505 = vld [vmem:[%s449 + $0x4] sm:$0xf]
        %v506 = vld [vmem:[%s449 + $0x8] sm:$0xf]
        %v507 = vld [vmem:[%s449 + $0xc] sm:$0xf]
        %v508 = vpack.c.bf16 %v499, %v498
        %v509 = vpack.c.bf16 %v501, %v500
        %s510 = scalar_lea.vmem %s449, 16
        %v511 = vld [vmem:[%s510] sm:$0xf]
        %v512 = vld [vmem:[%s510 + $0x4] sm:$0xf]
        %v513 = vld [vmem:[%s510 + $0x8] sm:$0xf]
        %v514 = vld [vmem:[%s510 + $0xc] sm:$0xf]
        %v519 = vunpack.c.l.b16 %v511
        %v520 = vunpack.c.l.b16 %v512
        %v521 = vunpack.c.l.b16 %v513
        %v522 = vunpack.c.l.b16 %v514
        %v523 = vpack.c.b16 %v520, %v519
        %v524 = vpack.c.b16 %v522, %v521
        %vm527 = vcmask 261120
        %v529 = vsel %vm527, %v508, 0
        %v532 = vsel %vm527, %v509, 0
        %534 = vmatprep.subr.bf16.mxu0 0
        %535 = vmatpush1.bf16.msra.mxu0 %v523
        %536 = vmatprep.subr.bf16.mxu0 0
        %537 = vmatpush1.bf16.msra.mxu0 %v524
        %538 = vmatprep.subr.bf16.mxu0 0
        %539 = vmatpush1.bf16.msra.mxu0 0
        %540 = vmatprep.subr.bf16.mxu0 0
        %541 = vmatpush1.bf16.msra.mxu0 0
        %542 = vmatprep.subr.bf16.mxu0 0
        %543 = vmatpush1.bf16.msra.mxu0 0
        %544 = vmatprep.subr.bf16.mxu0 0
        %545 = vmatpush1.bf16.msra.mxu0 0
        %546 = vmatprep.subr.bf16.mxu0 0
        %547 = vmatpush1.bf16.msra.mxu0 0
        %548 = vmatprep.subr.bf16.mxu0 0
        %549 = vmatpush1.bf16.msra.mxu0 0
        %550 = vmatprep.subr.bf16.mxu0 0
        %551 = vmatpush1.bf16.msra.mxu0 0
        %552 = vmatprep.subr.bf16.mxu0 0
        %553 = vmatpush1.bf16.msra.mxu0 0
        %554 = vmatprep.subr.bf16.mxu0 0
        %555 = vmatpush1.bf16.msra.mxu0 0
        %556 = vmatprep.subr.bf16.mxu0 0
        %557 = vmatpush1.bf16.msra.mxu0 0
        %558 = vmatprep.subr.bf16.mxu0 0
        %559 = vmatpush1.bf16.msra.mxu0 0
        %560 = vmatprep.subr.bf16.mxu0 0
        %561 = vmatpush1.bf16.msra.mxu0 0
        %562 = vmatprep.subr.bf16.mxu0 0
        %563 = vmatpush1.bf16.msra.mxu0 0
        %564 = vmatprep.subr.bf16.mxu0 0
        %565 = vmatpush1.bf16.msra.mxu0 0
        %566 = vmatprep.mubr.bf16.mxu0 0
        %567 = vmatmul.mubr.bf16.gmra.mrb[0].mxu0 %v529
        %v568 = vpop.f32.mrb[0].mxu0
        %v569 = vadd.f32 0.0, %v568
        %v570 = vpop.f32.mrb[0].mxu0
        %v571 = vpop.f32.mrb[0].mxu0
        %v572 = vadd.f32 0.0, %v571
        %v573 = vpop.f32.mrb[0].mxu0
        %574 = vmatprep.mubr.bf16.mxu0 0
        %575 = vmatmul.mubr.bf16.gmra.mrb[0].mxu0 %v532
        %v576 = vpop.f32.mrb[0].mxu0
        %v577 = vadd.f32 0.0, %v576
        %v578 = vpop.f32.mrb[0].mxu0
        %v579 = vpop.f32.mrb[0].mxu0
        %v580 = vadd.f32 0.0, %v579
        %v581 = vpop.f32.mrb[0].mxu0
        %582 = vdwg.mxu0
        %v587 = vunpack.c.l.b16 %v504
        %v588 = vunpack.c.l.b16 %v505
        %v589 = vunpack.c.l.b16 %v506
        %v590 = vunpack.c.l.b16 %v507
        %v591 = vpack.c.b16 %v588, %v587
        %v592 = vpack.c.b16 %v590, %v589
        %v596 = vsel %vm527, %v502, 0
        %v599 = vsel %vm527, %v503, 0
        %601 = vmatprep.subr.bf16.mxu0 0
        %602 = vmatpush1.bf16.msra.mxu0 %v591
        %603 = vmatprep.subr.bf16.mxu0 0
        %604 = vmatpush1.bf16.msra.mxu0 %v592
        %605 = vmatprep.subr.bf16.mxu0 0
        %606 = vmatpush1.bf16.msra.mxu0 0
        %607 = vmatprep.subr.bf16.mxu0 0
        %608 = vmatpush1.bf16.msra.mxu0 0
        %609 = vmatprep.subr.bf16.mxu0 0
        %610 = vmatpush1.bf16.msra.mxu0 0
        %611 = vmatprep.subr.bf16.mxu0 0
        %612 = vmatpush1.bf16.msra.mxu0 0
        %613 = vmatprep.subr.bf16.mxu0 0
        %614 = vmatpush1.bf16.msra.mxu0 0
        %615 = vmatprep.subr.bf16.mxu0 0
        %616 = vmatpush1.bf16.msra.mxu0 0
        %617 = vmatprep.subr.bf16.mxu0 0
        %618 = vmatpush1.bf16.msra.mxu0 0
        %619 = vmatprep.subr.bf16.mxu0 0
        %620 = vmatpush1.bf16.msra.mxu0 0
        %621 = vmatprep.subr.bf16.mxu0 0
        %622 = vmatpush1.bf16.msra.mxu0 0
        %623 = vmatprep.subr.bf16.mxu0 0
        %624 = vmatpush1.bf16.msra.mxu0 0
        %625 = vmatprep.subr.bf16.mxu0 0
        %626 = vmatpush1.bf16.msra.mxu0 0
        %627 = vmatprep.subr.bf16.mxu0 0
        %628 = vmatpush1.bf16.msra.mxu0 0
        %629 = vmatprep.subr.bf16.mxu0 0
        %630 = vmatpush1.bf16.msra.mxu0 0
        %631 = vmatprep.subr.bf16.mxu0 0
        %632 = vmatpush1.bf16.msra.mxu0 0
        %633 = vmatprep.mubr.bf16.mxu0 0
        %634 = vmatmul.mubr.bf16.gmra.mrb[0].mxu0 %v596
        %v635 = vpop.f32.mrb[0].mxu0
        %v636 = vadd.f32 %v569, %v635
        %v637 = vpop.f32.mrb[0].mxu0
        %v638 = vpop.f32.mrb[0].mxu0
        %v639 = vadd.f32 %v572, %v638
        %v640 = vpop.f32.mrb[0].mxu0
        %641 = vmatprep.mubr.bf16.mxu0 0
        %642 = vmatmul.mubr.bf16.gmra.mrb[0].mxu0 %v599
        %v643 = vpop.f32.mrb[0].mxu0
        %v644 = vadd.f32 %v577, %v643
        %v645 = vpop.f32.mrb[0].mxu0
        %v646 = vpop.f32.mrb[0].mxu0
        %v647 = vadd.f32 %v580, %v646
        %v648 = vpop.f32.mrb[0].mxu0
        %649 = vdwg.mxu0
        %v650 = vld [vmem:[%s457] sm:$0x1]
        %v652 = vlaneseq
        %v653 = vshrl.u32 %v652, 7
        %v654 = vsub.s32 0, %v653
        %v655 = vrot.slane %v650, %v654
        %v657 = vadd.f32 %v636, %v655
        %v658 = vadd.f32 %v639, %v655
        %v659 = vadd.f32 %v644, %v655
        %v660 = vadd.f32 %v647, %v655
        %v661 = vld [vmem:[%s454] sm:$0xf]
        %v662 = vld [vmem:[%s454 + $0x4] sm:$0xf]
        %v663 = vld [vmem:[%s454 + $0x8] sm:$0xf]
        %v664 = vld [vmem:[%s454 + $0xc] sm:$0xf]
        %v665 = vld [vmem:[%s0] sm:$0xff]
        %s666 = ssub.s32 1, %s23
        %s667 = smul.u32 %s666, %s24
        %s668 = ssub.s32 1, %s24
        %s669 = smul.u32 %s23, %s668
        %s670 = sadd.s32 %s667, %s669
        %s671 = smul.u32 %s670, 4
        %p672 = scmp.eq.s32.totalorder %s23, 0
        // Predicated region
        $region83: #{encoder_forward.3} parent=73 // pred_check
          %p673 = pneg %p672
        $region84: #{encoder_forward.3} parent=73 // pred_check_branch
          %675 = sbr.rel (%p673) target = $region86
        $region85: #{encoder_forward.3} parent=73 // pred_region
          %v676 = vld [vmem:[#allocation2] sm:$0xff]
          %v677 = vld [vmem:[#allocation3] sm:$0xff]
          %v678 = vpack.c.bf16 %v676, %v676
          %v683 = vunpack.c.l.b16 %v661
          %v684 = vunpack.c.l.b16 %v662
          %v685 = vunpack.c.l.b16 %v663
          %v686 = vunpack.c.l.b16 %v664
          %v687 = vpack.c.b16 %v684, %v683
          %v688 = vpack.c.b16 %v686, %v685
          %v692 = vsel %vm527, %v678, 0
          %694 = vmatprep.subr.bf16.mxu0 0
          %695 = vmatpush1.bf16.msra.mxu0 %v687
          %696 = vmatprep.subr.bf16.mxu0 0
          %697 = vmatpush1.bf16.msra.mxu0 %v688
          %698 = vmatprep.subr.bf16.mxu0 0
          %699 = vmatpush1.bf16.msra.mxu0 0
          %700 = vmatprep.subr.bf16.mxu0 0
          %701 = vmatpush1.bf16.msra.mxu0 0
          %702 = vmatprep.subr.bf16.mxu0 0
          %703 = vmatpush1.bf16.msra.mxu0 0
          %704 = vmatprep.subr.bf16.mxu0 0
          %705 = vmatpush1.bf16.msra.mxu0 0
          %706 = vmatprep.subr.bf16.mxu0 0
          %707 = vmatpush1.bf16.msra.mxu0 0
          %708 = vmatprep.subr.bf16.mxu0 0
          %709 = vmatpush1.bf16.msra.mxu0 0
          %710 = vmatprep.subr.bf16.mxu0 0
          %711 = vmatpush1.bf16.msra.mxu0 0
          %712 = vmatprep.subr.bf16.mxu0 0
          %713 = vmatpush1.bf16.msra.mxu0 0
          %714 = vmatprep.subr.bf16.mxu0 0
          %715 = vmatpush1.bf16.msra.mxu0 0
          %716 = vmatprep.subr.bf16.mxu0 0
          %717 = vmatpush1.bf16.msra.mxu0 0
          %718 = vmatprep.subr.bf16.mxu0 0
          %719 = vmatpush1.bf16.msra.mxu0 0
          %720 = vmatprep.subr.bf16.mxu0 0
          %721 = vmatpush1.bf16.msra.mxu0 0
          %722 = vmatprep.subr.bf16.mxu0 0
          %723 = vmatpush1.bf16.msra.mxu0 0
          %724 = vmatprep.subr.bf16.mxu0 0
          %725 = vmatpush1.bf16.msra.mxu0 0
          %726 = vmatprep.mubr.bf16.mxu0 0
          %727 = vmatmul.mubr.bf16.gmra.mrb[0].mxu0 %v692
          %v728 = vpop.f32.mrb[0].mxu0
          %v729 = vadd.f32 0.0, %v728
          %v730 = vpop.f32.mrb[0].mxu0
          %v731 = vpop.f32.mrb[0].mxu0
          %v732 = vpop.f32.mrb[0].mxu0
          %733 = vdwg.mxu0
          %v734 = vadd.f32 %v657, %v729
          %v735 = vxor.u32 %v734, 2147483648
          %v736 = vmul.f32 %v735, 1.442695
          %v737 = vpow.pop %v736
          %v738 = vadd.f32 %v737, 1.0
          %v739 = vrcp.pop %v738
          %v740 = vmul.f32 1.0, %v739
          %v741 = vtanh.pop %v734
          %743 = vrot.lane.b32.xlu0 %v677, 32
          %v744 = vpop.permute.xlu0 %743
          %v746 = vmul.f32 %v740, %v744
          %748 = vrot.lane.b32.xlu0 %v741, 32
          %v749 = vpop.permute.xlu0 %748
          %v751 = vmul.f32 %v740, %v749
          %753 = vrot.lane.b32.xlu0 %v751, 32
          %v754 = vpop.permute.xlu0 %753
          %v756 = vadd.f32 %v746, %v754
          %v757 = vtanh.pop %v756
          %759 = vrot.lane.b32.xlu0 %v757, 32
          %v760 = vpop.permute.xlu0 %759
          %v762 = vmul.f32 %v740, %v760
          %v763 = vstv %s671
          %vm764 = vcmp.gt.s32.totalorder %v665, %v763
          %v765 = vsel %vm764, 1, 0
          %766 = vset.pattern.permute.xlu0 0
          %767 = vperm.xlu0 %766, %v765
          %v768 = vpop.permute.xlu0 %767
          %vm769 = vcmp.eq.s32.totalorder %v768, 1
          %v770 = vsel %vm769, %v762, 0.0
          %772 = vrot.lane.b32.xlu0 %v770, 64
          %v773 = vpop.permute.xlu0 %772
          %775 = vst.msk [vmem:[%s471] sm:$0xff] %vm527, %v773
          %777 = vrot.lane.b32.xlu0 %v676, 64
          %v778 = vpop.permute.xlu0 %777
          %v780 = vsel %vm769, %v762, %v778
          %v781 = vsel %vm769, %v756, %v744
          %v782 = vpack.c.bf16 %v780, %v780
          %784 = vrot.lane.b32.xlu0 %v782, 64
          %v785 = vpop.permute.xlu0 %784
          %v787 = vsel %vm527, %v785, 0
          %789 = vmatprep.subr.bf16.mxu0 0
          %790 = vmatpush1.bf16.msra.mxu0 %v687
          %791 = vmatprep.subr.bf16.mxu0 0
          %792 = vmatpush1.bf16.msra.mxu0 %v688
          %793 = vmatprep.subr.bf16.mxu0 0
          %794 = vmatpush1.bf16.msra.mxu0 0
          %795 = vmatprep.subr.bf16.mxu0 0
          %796 = vmatpush1.bf16.msra.mxu0 0
          %797 = vmatprep.subr.bf16.mxu0 0
          %798 = vmatpush1.bf16.msra.mxu0 0
          %799 = vmatprep.subr.bf16.mxu0 0
          %800 = vmatpush1.bf16.msra.mxu0 0
          %801 = vmatprep.subr.bf16.mxu0 0
          %802 = vmatpush1.bf16.msra.mxu0 0
          %803 = vmatprep.subr.bf16.mxu0 0
          %804 = vmatpush1.bf16.msra.mxu0 0
          %805 = vmatprep.subr.bf16.mxu0 0
          %806 = vmatpush1.bf16.msra.mxu0 0
          %807 = vmatprep.subr.bf16.mxu0 0
          %808 = vmatpush1.bf16.msra.mxu0 0
          %809 = vmatprep.subr.bf16.mxu0 0
          %810 = vmatpush1.bf16.msra.mxu0 0
          %811 = vmatprep.subr.bf16.mxu0 0
          %812 = vmatpush1.bf16.msra.mxu0 0
          %813 = vmatprep.subr.bf16.mxu0 0
          %814 = vmatpush1.bf16.msra.mxu0 0
          %815 = vmatprep.subr.bf16.mxu0 0
          %816 = vmatpush1.bf16.msra.mxu0 0
          %817 = vmatprep.subr.bf16.mxu0 0
          %818 = vmatpush1.bf16.msra.mxu0 0
          %819 = vmatprep.subr.bf16.mxu0 0
          %820 = vmatpush1.bf16.msra.mxu0 0
          %821 = vmatprep.mubr.bf16.mxu0 0
          %822 = vmatmul.mubr.bf16.gmra.mrb[0].mxu0 %v787
          %v823 = vpop.f32.mrb[0].mxu0
          %v824 = vadd.f32 0.0, %v823
          %v825 = vpop.f32.mrb[0].mxu0
          %v826 = vpop.f32.mrb[0].mxu0
          %v827 = vpop.f32.mrb[0].mxu0
          %828 = vdwg.mxu0
          %v829 = vadd.f32 %v658, %v824
          %v830 = vxor.u32 %v829, 2147483648
          %v831 = vmul.f32 %v830, 1.442695
          %v832 = vpow.pop %v831
          %v833 = vadd.f32 %v832, 1.0
          %v834 = vrcp.pop %v833
          %v835 = vmul.f32 1.0, %v834
          %v836 = vtanh.pop %v829
          %v837 = vmul.f32 %v835, %v781
          %839 = vrot.lane.b32.xlu0 %v836, 32
          %v840 = vpop.permute.xlu0 %839
          %v842 = vmul.f32 %v835, %v840
          %844 = vrot.lane.b32.xlu0 %v842, 32
          %v845 = vpop.permute.xlu0 %844
          %v847 = vadd.f32 %v837, %v845
          %v848 = vtanh.pop %v847
          %850 = vrot.lane.b32.xlu0 %v848, 32
          %v851 = vpop.permute.xlu0 %850
          %v853 = vmul.f32 %v835, %v851
          %s854 = sadd.s32 %s671, 1
          %v855 = vstv %s854
          %vm856 = vcmp.gt.s32.totalorder %v665, %v855
          %v857 = vsel %vm856, 1, 0
          %858 = vset.pattern.permute.xlu0 0
          %859 = vperm.xlu0 %858, %v857
          %v860 = vpop.permute.xlu0 %859
          %vm861 = vcmp.eq.s32.totalorder %v860, 1
          %v862 = vsel %vm861, %v853, 0.0
          %864 = vrot.lane.b32.xlu0 %v862, 64
          %v865 = vpop.permute.xlu0 %864
          %s867 = scalar_lea.vmem %s471, 8
          %868 = vst.msk [vmem:[%s867] sm:$0xff] %vm527, %v865
          %v869 = vsel %vm861, %v853, %v780
          %v870 = vsel %vm861, %v847, %v781
          %v871 = vpack.c.bf16 %v869, %v869
          %873 = vrot.lane.b32.xlu0 %v871, 64
          %v874 = vpop.permute.xlu0 %873
          %v876 = vsel %vm527, %v874, 0
          %878 = vmatprep.subr.bf16.mxu0 0
          %879 = vmatpush1.bf16.msra.mxu0 %v687
          %880 = vmatprep.subr.bf16.mxu0 0
          %881 = vmatpush1.bf16.msra.mxu0 %v688
          %882 = vmatprep.subr.bf16.mxu0 0
          %883 = vmatpush1.bf16.msra.mxu0 0
          %884 = vmatprep.subr.bf16.mxu0 0
          %885 = vmatpush1.bf16.msra.mxu0 0
          %886 = vmatprep.subr.bf16.mxu0 0
          %887 = vmatpush1.bf16.msra.mxu0 0
          %888 = vmatprep.subr.bf16.mxu0 0
          %889 = vmatpush1.bf16.msra.mxu0 0
          %890 = vmatprep.subr.bf16.mxu0 0
          %891 = vmatpush1.bf16.msra.mxu0 0
          %892 = vmatprep.subr.bf16.mxu0 0
          %893 = vmatpush1.bf16.msra.mxu0 0
          %894 = vmatprep.subr.bf16.mxu0 0
          %895 = vmatpush1.bf16.msra.mxu0 0
          %896 = vmatprep.subr.bf16.mxu0 0
          %897 = vmatpush1.bf16.msra.mxu0 0
          %898 = vmatprep.subr.bf16.mxu0 0
          %899 = vmatpush1.bf16.msra.mxu0 0
          %900 = vmatprep.subr.bf16.mxu0 0
          %901 = vmatpush1.bf16.msra.mxu0 0
          %902 = vmatprep.subr.bf16.mxu0 0
          %903 = vmatpush1.bf16.msra.mxu0 0
          %904 = vmatprep.subr.bf16.mxu0 0
          %905 = vmatpush1.bf16.msra.mxu0 0
          %906 = vmatprep.subr.bf16.mxu0 0
          %907 = vmatpush1.bf16.msra.mxu0 0
          %908 = vmatprep.subr.bf16.mxu0 0
          %909 = vmatpush1.bf16.msra.mxu0 0
          %910 = vmatprep.mubr.bf16.mxu0 0
          %911 = vmatmul.mubr.bf16.gmra.mrb[0].mxu0 %v876
          %v912 = vpop.f32.mrb[0].mxu0
          %v913 = vadd.f32 0.0, %v912
          %v914 = vpop.f32.mrb[0].mxu0
          %v915 = vpop.f32.mrb[0].mxu0
          %v916 = vpop.f32.mrb[0].mxu0
          %917 = vdwg.mxu0
          %v918 = vadd.f32 %v659, %v913
          %v919 = vxor.u32 %v918, 2147483648
          %v920 = vmul.f32 %v919, 1.442695
          %v921 = vpow.pop %v920
          %v922 = vadd.f32 %v921, 1.0
          %v923 = vrcp.pop %v922
          %v924 = vmul.f32 1.0, %v923
          %v925 = vtanh.pop %v918
          %v926 = vmul.f32 %v924, %v870
          %928 = vrot.lane.b32.xlu0 %v925, 32
          %v929 = vpop.permute.xlu0 %928
          %v931 = vmul.f32 %v924, %v929
          %933 = vrot.lane.b32.xlu0 %v931, 32
          %v934 = vpop.permute.xlu0 %933
          %v936 = vadd.f32 %v926, %v934
          %v937 = vtanh.pop %v936
          %939 = vrot.lane.b32.xlu0 %v937, 32
          %v940 = vpop.permute.xlu0 %939
          %v942 = vmul.f32 %v924, %v940
          %s943 = sadd.s32 %s671, 2
          %v944 = vstv %s943
          %vm945 = vcmp.gt.s32.totalorder %v665, %v944
          %v946 = vsel %vm945, 1, 0
          %947 = vset.pattern.permute.xlu0 0
          %948 = vperm.xlu0 %947, %v946
          %v949 = vpop.permute.xlu0 %948
          %vm950 = vcmp.eq.s32.totalorder %v949, 1
          %v951 = vsel %vm950, %v942, 0.0
          %953 = vrot.lane.b32.xlu0 %v951, 64
          %v954 = vpop.permute.xlu0 %953
          %s956 = scalar_lea.vmem %s471, 16
          %957 = vst.msk [vmem:[%s956] sm:$0xff] %vm527, %v954
          %v958 = vsel %vm950, %v942, %v869
          %v959 = vsel %vm950, %v936, %v870
          %v960 = vpack.c.bf16 %v958, %v958
          %962 = vrot.lane.b32.xlu0 %v960, 64
          %v963 = vpop.permute.xlu0 %962
          %v965 = vsel %vm527, %v963, 0
          %967 = vmatprep.subr.bf16.mxu0 0
          %968 = vmatpush1.bf16.msra.mxu0 %v687
          %969 = vmatprep.subr.bf16.mxu0 0
          %970 = vmatpush1.bf16.msra.mxu0 %v688
          %971 = vmatprep.subr.bf16.mxu0 0
          %972 = vmatpush1.bf16.msra.mxu0 0
          %973 = vmatprep.subr.bf16.mxu0 0
          %974 = vmatpush1.bf16.msra.mxu0 0
          %975 = vmatprep.subr.bf16.mxu0 0
          %976 = vmatpush1.bf16.msra.mxu0 0
          %977 = vmatprep.subr.bf16.mxu0 0
          %978 = vmatpush1.bf16.msra.mxu0 0
          %979 = vmatprep.subr.bf16.mxu0 0
          %980 = vmatpush1.bf16.msra.mxu0 0
          %981 = vmatprep.subr.bf16.mxu0 0
          %982 = vmatpush1.bf16.msra.mxu0 0
          %983 = vmatprep.subr.bf16.mxu0 0
          %984 = vmatpush1.bf16.msra.mxu0 0
          %985 = vmatprep.subr.bf16.mxu0 0
          %986 = vmatpush1.bf16.msra.mxu0 0
          %987 = vmatprep.subr.bf16.mxu0 0
          %988 = vmatpush1.bf16.msra.mxu0 0
          %989 = vmatprep.subr.bf16.mxu0 0
          %990 = vmatpush1.bf16.msra.mxu0 0
          %991 = vmatprep.subr.bf16.mxu0 0
          %992 = vmatpush1.bf16.msra.mxu0 0
          %993 = vmatprep.subr.bf16.mxu0 0
          %994 = vmatpush1.bf16.msra.mxu0 0
          %995 = vmatprep.subr.bf16.mxu0 0
          %996 = vmatpush1.bf16.msra.mxu0 0
          %997 = vmatprep.subr.bf16.mxu0 0
          %998 = vmatpush1.bf16.msra.mxu0 0
          %999 = vmatprep.mubr.bf16.mxu0 0
          %1000 = vmatmul.mubr.bf16.gmra.mrb[0].mxu0 %v965
          %v1001 = vpop.f32.mrb[0].mxu0
          %v1002 = vadd.f32 0.0, %v1001
          %v1003 = vpop.f32.mrb[0].mxu0
          %v1004 = vpop.f32.mrb[0].mxu0
          %v1005 = vpop.f32.mrb[0].mxu0
          %1006 = vdwg.mxu0
          %v1007 = vadd.f32 %v660, %v1002
          %v1008 = vxor.u32 %v1007, 2147483648
          %v1009 = vmul.f32 %v1008, 1.442695
          %v1010 = vpow.pop %v1009
          %v1011 = vadd.f32 %v1010, 1.0
          %v1012 = vrcp.pop %v1011
          %v1013 = vmul.f32 1.0, %v1012
          %v1014 = vtanh.pop %v1007
          %v1015 = vmul.f32 %v1013, %v959
          %1017 = vrot.lane.b32.xlu0 %v1014, 32
          %v1018 = vpop.permute.xlu0 %1017
          %v1020 = vmul.f32 %v1013, %v1018
          %1022 = vrot.lane.b32.xlu0 %v1020, 32
          %v1023 = vpop.permute.xlu0 %1022
          %v1025 = vadd.f32 %v1015, %v1023
          %v1026 = vtanh.pop %v1025
          %1028 = vrot.lane.b32.xlu0 %v1026, 32
          %v1029 = vpop.permute.xlu0 %1028
          %v1031 = vmul.f32 %v1013, %v1029
          %s1032 = sadd.s32 %s671, 3
          %v1033 = vstv %s1032
          %vm1034 = vcmp.gt.s32.totalorder %v665, %v1033
          %v1035 = vsel %vm1034, 1, 0
          %1036 = vset.pattern.permute.xlu0 0
          %1037 = vperm.xlu0 %1036, %v1035
          %v1038 = vpop.permute.xlu0 %1037
          %vm1039 = vcmp.eq.s32.totalorder %v1038, 1
          %v1040 = vsel %vm1039, %v1031, 0.0
          %1042 = vrot.lane.b32.xlu0 %v1040, 64
          %v1043 = vpop.permute.xlu0 %1042
          %s1045 = scalar_lea.vmem %s471, 24
          %1046 = vst.msk [vmem:[%s1045] sm:$0xff] %vm527, %v1043
          %v1047 = vsel %vm1039, %v1031, %v958
          %v1048 = vsel %vm1039, %v1025, %v959
          %1050 = vrot.lane.b32.xlu0 %v1047, 64
          %v1051 = vpop.permute.xlu0 %1050
          %1053 = vst.msk [vmem:[#allocation2] sm:$0xff] %vm527, %v1051
          %1055 = vrot.lane.b32.xlu0 %v1048, 96
          %v1056 = vpop.permute.xlu0 %1055
          %1058 = vst.msk [vmem:[#allocation3] sm:$0xff] %vm527, %v1056
        $region86: #{encoder_forward.3} parent=73 // pred_fallthru
          _
        %p1059 = scmp.eq.s32.totalorder %s23, 1
        // Predicated region
        $region87: #{encoder_forward.3} parent=73 // pred_check
          %p1060 = pneg %p1059
        $region88: #{encoder_forward.3} parent=73 // pred_check_branch
          %1062 = sbr.rel (%p1060) target = $region90
        $region89: #{encoder_forward.3} parent=73 // pred_region
          %v1063 = vld [vmem:[#allocation2] sm:$0xff]
          %v1064 = vld [vmem:[#allocation3] sm:$0xff]
          %v1065 = vpack.c.bf16 %v1063, %v1063
          %v1070 = vunpack.c.l.b16 %v661
          %v1071 = vunpack.c.l.b16 %v662
          %v1072 = vunpack.c.l.b16 %v663
          %v1073 = vunpack.c.l.b16 %v664
          %v1074 = vpack.c.b16 %v1071, %v1070
          %v1075 = vpack.c.b16 %v1073, %v1072
          %v1079 = vsel %vm527, %v1065, 0
          %1081 = vmatprep.subr.bf16.mxu0 0
          %1082 = vmatpush1.bf16.msra.mxu0 %v1074
          %1083 = vmatprep.subr.bf16.mxu0 0
          %1084 = vmatpush1.bf16.msra.mxu0 %v1075
          %1085 = vmatprep.subr.bf16.mxu0 0
          %1086 = vmatpush1.bf16.msra.mxu0 0
          %1087 = vmatprep.subr.bf16.mxu0 0
          %1088 = vmatpush1.bf16.msra.mxu0 0
          %1089 = vmatprep.subr.bf16.mxu0 0
          %1090 = vmatpush1.bf16.msra.mxu0 0
          %1091 = vmatprep.subr.bf16.mxu0 0
          %1092 = vmatpush1.bf16.msra.mxu0 0
          %1093 = vmatprep.subr.bf16.mxu0 0
          %1094 = vmatpush1.bf16.msra.mxu0 0
          %1095 = vmatprep.subr.bf16.mxu0 0
          %1096 = vmatpush1.bf16.msra.mxu0 0
          %1097 = vmatprep.subr.bf16.mxu0 0
          %1098 = vmatpush1.bf16.msra.mxu0 0
          %1099 = vmatprep.subr.bf16.mxu0 0
          %1100 = vmatpush1.bf16.msra.mxu0 0
          %1101 = vmatprep.subr.bf16.mxu0 0
          %1102 = vmatpush1.bf16.msra.mxu0 0
          %1103 = vmatprep.subr.bf16.mxu0 0
          %1104 = vmatpush1.bf16.msra.mxu0 0
          %1105 = vmatprep.subr.bf16.mxu0 0
          %1106 = vmatpush1.bf16.msra.mxu0 0
          %1107 = vmatprep.subr.bf16.mxu0 0
          %1108 = vmatpush1.bf16.msra.mxu0 0
          %1109 = vmatprep.subr.bf16.mxu0 0
          %1110 = vmatpush1.bf16.msra.mxu0 0
          %1111 = vmatprep.subr.bf16.mxu0 0
          %1112 = vmatpush1.bf16.msra.mxu0 0
          %1113 = vmatprep.mubr.bf16.mxu0 0
          %1114 = vmatmul.mubr.bf16.gmra.mrb[0].mxu0 %v1079
          %v1115 = vpop.f32.mrb[0].mxu0
          %v1116 = vadd.f32 0.0, %v1115
          %v1117 = vpop.f32.mrb[0].mxu0
          %v1118 = vpop.f32.mrb[0].mxu0
          %v1119 = vpop.f32.mrb[0].mxu0
          %1120 = vdwg.mxu0
          %v1121 = vadd.f32 %v660, %v1116
          %v1122 = vxor.u32 %v1121, 2147483648
          %v1123 = vmul.f32 %v1122, 1.442695
          %v1124 = vpow.pop %v1123
          %v1125 = vadd.f32 %v1124, 1.0
          %v1126 = vrcp.pop %v1125
          %v1127 = vmul.f32 1.0, %v1126
          %v1128 = vtanh.pop %v1121
          %1130 = vrot.lane.b32.xlu0 %v1064, 32
          %v1131 = vpop.permute.xlu0 %1130
          %v1133 = vmul.f32 %v1127, %v1131
          %1135 = vrot.lane.b32.xlu0 %v1128, 32
          %v1136 = vpop.permute.xlu0 %1135
          %v1138 = vmul.f32 %v1127, %v1136
          %1140 = vrot.lane.b32.xlu0 %v1138, 32
          %v1141 = vpop.permute.xlu0 %1140
          %v1143 = vadd.f32 %v1133, %v1141
          %v1144 = vtanh.pop %v1143
          %1146 = vrot.lane.b32.xlu0 %v1144, 32
          %v1147 = vpop.permute.xlu0 %1146
          %v1149 = vmul.f32 %v1127, %v1147
          %s1150 = sadd.s32 %s671, 3
          %v1151 = vstv %s1150
          %vm1152 = vcmp.gt.s32.totalorder %v665, %v1151
          %v1153 = vsel %vm1152, 1, 0
          %1154 = vset.pattern.permute.xlu0 0
          %1155 = vperm.xlu0 %1154, %v1153
          %v1156 = vpop.permute.xlu0 %1155
          %vm1157 = vcmp.eq.s32.totalorder %v1156, 1
          %v1158 = vsel %vm1157, %v1149, 0.0
          %1160 = vrot.lane.b32.xlu0 %v1158, 64
          %v1161 = vpop.permute.xlu0 %1160
          %s1163 = scalar_lea.vmem %s471, 24
          %1164 = vst.msk [vmem:[%s1163] sm:$0xff] %vm527, %v1161
          %1166 = vrot.lane.b32.xlu0 %v1063, 64
          %v1167 = vpop.permute.xlu0 %1166
          %v1169 = vsel %vm1157, %v1149, %v1167
          %v1170 = vsel %vm1157, %v1143, %v1131
          %v1171 = vpack.c.bf16 %v1169, %v1169
          %1173 = vrot.lane.b32.xlu0 %v1171, 64
          %v1174 = vpop.permute.xlu0 %1173
          %v1176 = vsel %vm527, %v1174, 0
          %1178 = vmatprep.subr.bf16.mxu0 0
          %1179 = vmatpush1.bf16.msra.mxu0 %v1074
          %1180 = vmatprep.subr.bf16.mxu0 0
          %1181 = vmatpush1.bf16.msra.mxu0 %v1075
          %1182 = vmatprep.subr.bf16.mxu0 0
          %1183 = vmatpush1.bf16.msra.mxu0 0
          %1184 = vmatprep.subr.bf16.mxu0 0
          %1185 = vmatpush1.bf16.msra.mxu0 0
          %1186 = vmatprep.subr.bf16.mxu0 0
          %1187 = vmatpush1.bf16.msra.mxu0 0
          %1188 = vmatprep.subr.bf16.mxu0 0
          %1189 = vmatpush1.bf16.msra.mxu0 0
          %1190 = vmatprep.subr.bf16.mxu0 0
          %1191 = vmatpush1.bf16.msra.mxu0 0
          %1192 = vmatprep.subr.bf16.mxu0 0
          %1193 = vmatpush1.bf16.msra.mxu0 0
          %1194 = vmatprep.subr.bf16.mxu0 0
          %1195 = vmatpush1.bf16.msra.mxu0 0
          %1196 = vmatprep.subr.bf16.mxu0 0
          %1197 = vmatpush1.bf16.msra.mxu0 0
          %1198 = vmatprep.subr.bf16.mxu0 0
          %1199 = vmatpush1.bf16.msra.mxu0 0
          %1200 = vmatprep.subr.bf16.mxu0 0
          %1201 = vmatpush1.bf16.msra.mxu0 0
          %1202 = vmatprep.subr.bf16.mxu0 0
          %1203 = vmatpush1.bf16.msra.mxu0 0
          %1204 = vmatprep.subr.bf16.mxu0 0
          %1205 = vmatpush1.bf16.msra.mxu0 0
          %1206 = vmatprep.subr.bf16.mxu0 0
          %1207 = vmatpush1.bf16.msra.mxu0 0
          %1208 = vmatprep.subr.bf16.mxu0 0
          %1209 = vmatpush1.bf16.msra.mxu0 0
          %1210 = vmatprep.mubr.bf16.mxu0 0
          %1211 = vmatmul.mubr.bf16.gmra.mrb[0].mxu0 %v1176
          %v1212 = vpop.f32.mrb[0].mxu0
          %v1213 = vadd.f32 0.0, %v1212
          %v1214 = vpop.f32.mrb[0].mxu0
          %v1215 = vpop.f32.mrb[0].mxu0
          %v1216 = vpop.f32.mrb[0].mxu0
          %1217 = vdwg.mxu0
          %v1218 = vadd.f32 %v659, %v1213
          %v1219 = vxor.u32 %v1218, 2147483648
          %v1220 = vmul.f32 %v1219, 1.442695
          %v1221 = vpow.pop %v1220
          %v1222 = vadd.f32 %v1221, 1.0
          %v1223 = vrcp.pop %v1222
          %v1224 = vmul.f32 1.0, %v1223
          %v1225 = vtanh.pop %v1218
          %v1226 = vmul.f32 %v1224, %v1170
          %1228 = vrot.lane.b32.xlu0 %v1225, 32
          %v1229 = vpop.permute.xlu0 %1228
          %v1231 = vmul.f32 %v1224, %v1229
          %1233 = vrot.lane.b32.xlu0 %v1231, 32
          %v1234 = vpop.permute.xlu0 %1233
          %v1236 = vadd.f32 %v1226, %v1234
          %v1237 = vtanh.pop %v1236
          %1239 = vrot.lane.b32.xlu0 %v1237, 32
          %v1240 = vpop.permute.xlu0 %1239
          %v1242 = vmul.f32 %v1224, %v1240
          %s1243 = sadd.s32 %s671, 2
          %v1244 = vstv %s1243
          %vm1245 = vcmp.gt.s32.totalorder %v665, %v1244
          %v1246 = vsel %vm1245, 1, 0
          %1247 = vset.pattern.permute.xlu0 0
          %1248 = vperm.xlu0 %1247, %v1246
          %v1249 = vpop.permute.xlu0 %1248
          %vm1250 = vcmp.eq.s32.totalorder %v1249, 1
          %v1251 = vsel %vm1250, %v1242, 0.0
          %1253 = vrot.lane.b32.xlu0 %v1251, 64
          %v1254 = vpop.permute.xlu0 %1253
          %s1256 = scalar_lea.vmem %s471, 16
          %1257 = vst.msk [vmem:[%s1256] sm:$0xff] %vm527, %v1254
          %v1258 = vsel %vm1250, %v1242, %v1169
          %v1259 = vsel %vm1250, %v1236, %v1170
          %v1260 = vpack.c.bf16 %v1258, %v1258
          %1262 = vrot.lane.b32.xlu0 %v1260, 64
          %v1263 = vpop.permute.xlu0 %1262
          %v1265 = vsel %vm527, %v1263, 0
          %1267 = vmatprep.subr.bf16.mxu0 0
          %1268 = vmatpush1.bf16.msra.mxu0 %v1074
          %1269 = vmatprep.subr.bf16.mxu0 0
          %1270 = vmatpush1.bf16.msra.mxu0 %v1075
          %1271 = vmatprep.subr.bf16.mxu0 0
          %1272 = vmatpush1.bf16.msra.mxu0 0
          %1273 = vmatprep.subr.bf16.mxu0 0
          %1274 = vmatpush1.bf16.msra.mxu0 0
          %1275 = vmatprep.subr.bf16.mxu0 0
          %1276 = vmatpush1.bf16.msra.mxu0 0
          %1277 = vmatprep.subr.bf16.mxu0 0
          %1278 = vmatpush1.bf16.msra.mxu0 0
          %1279 = vmatprep.subr.bf16.mxu0 0
          %1280 = vmatpush1.bf16.msra.mxu0 0
          %1281 = vmatprep.subr.bf16.mxu0 0
          %1282 = vmatpush1.bf16.msra.mxu0 0
          %1283 = vmatprep.subr.bf16.mxu0 0
          %1284 = vmatpush1.bf16.msra.mxu0 0
          %1285 = vmatprep.subr.bf16.mxu0 0
          %1286 = vmatpush1.bf16.msra.mxu0 0
          %1287 = vmatprep.subr.bf16.mxu0 0
          %1288 = vmatpush1.bf16.msra.mxu0 0
          %1289 = vmatprep.subr.bf16.mxu0 0
          %1290 = vmatpush1.bf16.msra.mxu0 0
          %1291 = vmatprep.subr.bf16.mxu0 0
          %1292 = vmatpush1.bf16.msra.mxu0 0
          %1293 = vmatprep.subr.bf16.mxu0 0
          %1294 = vmatpush1.bf16.msra.mxu0 0
          %1295 = vmatprep.subr.bf16.mxu0 0
          %1296 = vmatpush1.bf16.msra.mxu0 0
          %1297 = vmatprep.subr.bf16.mxu0 0
          %1298 = vmatpush1.bf16.msra.mxu0 0
          %1299 = vmatprep.mubr.bf16.mxu0 0
          %1300 = vmatmul.mubr.bf16.gmra.mrb[0].mxu0 %v1265
          %v1301 = vpop.f32.mrb[0].mxu0
          %v1302 = vadd.f32 0.0, %v1301
          %v1303 = vpop.f32.mrb[0].mxu0
          %v1304 = vpop.f32.mrb[0].mxu0
          %v1305 = vpop.f32.mrb[0].mxu0
          %1306 = vdwg.mxu0
          %v1307 = vadd.f32 %v658, %v1302
          %v1308 = vxor.u32 %v1307, 2147483648
          %v1309 = vmul.f32 %v1308, 1.442695
          %v1310 = vpow.pop %v1309
          %v1311 = vadd.f32 %v1310, 1.0
          %v1312 = vrcp.pop %v1311
          %v1313 = vmul.f32 1.0, %v1312
          %v1314 = vtanh.pop %v1307
          %v1315 = vmul.f32 %v1313, %v1259
          %1317 = vrot.lane.b32.xlu0 %v1314, 32
          %v1318 = vpop.permute.xlu0 %1317
          %v1320 = vmul.f32 %v1313, %v1318
          %1322 = vrot.lane.b32.xlu0 %v1320, 32
          %v1323 = vpop.permute.xlu0 %1322
          %v1325 = vadd.f32 %v1315, %v1323
          %v1326 = vtanh.pop %v1325
          %1328 = vrot.lane.b32.xlu0 %v1326, 32
          %v1329 = vpop.permute.xlu0 %1328
          %v1331 = vmul.f32 %v1313, %v1329
          %s1332 = sadd.s32 %s671, 1
          %v1333 = vstv %s1332
          %vm1334 = vcmp.gt.s32.totalorder %v665, %v1333
          %v1335 = vsel %vm1334, 1, 0
          %1336 = vset.pattern.permute.xlu0 0
          %1337 = vperm.xlu0 %1336, %v1335
          %v1338 = vpop.permute.xlu0 %1337
          %vm1339 = vcmp.eq.s32.totalorder %v1338, 1
          %v1340 = vsel %vm1339, %v1331, 0.0
          %1342 = vrot.lane.b32.xlu0 %v1340, 64
          %v1343 = vpop.permute.xlu0 %1342
          %s1345 = scalar_lea.vmem %s471, 8
          %1346 = vst.msk [vmem:[%s1345] sm:$0xff] %vm527, %v1343
          %v1347 = vsel %vm1339, %v1331, %v1258
          %v1348 = vsel %vm1339, %v1325, %v1259
          %v1349 = vpack.c.bf16 %v1347, %v1347
          %1351 = vrot.lane.b32.xlu0 %v1349, 64
          %v1352 = vpop.permute.xlu0 %1351
          %v1354 = vsel %vm527, %v1352, 0
          %1356 = vmatprep.subr.bf16.mxu0 0
          %1357 = vmatpush1.bf16.msra.mxu0 %v1074
          %1358 = vmatprep.subr.bf16.mxu0 0
          %1359 = vmatpush1.bf16.msra.mxu0 %v1075
          %1360 = vmatprep.subr.bf16.mxu0 0
          %1361 = vmatpush1.bf16.msra.mxu0 0
          %1362 = vmatprep.subr.bf16.mxu0 0
          %1363 = vmatpush1.bf16.msra.mxu0 0
          %1364 = vmatprep.subr.bf16.mxu0 0
          %1365 = vmatpush1.bf16.msra.mxu0 0
          %1366 = vmatprep.subr.bf16.mxu0 0
          %1367 = vmatpush1.bf16.msra.mxu0 0
          %1368 = vmatprep.subr.bf16.mxu0 0
          %1369 = vmatpush1.bf16.msra.mxu0 0
          %1370 = vmatprep.subr.bf16.mxu0 0
          %1371 = vmatpush1.bf16.msra.mxu0 0
          %1372 = vmatprep.subr.bf16.mxu0 0
          %1373 = vmatpush1.bf16.msra.mxu0 0
          %1374 = vmatprep.subr.bf16.mxu0 0
          %1375 = vmatpush1.bf16.msra.mxu0 0
          %1376 = vmatprep.subr.bf16.mxu0 0
          %1377 = vmatpush1.bf16.msra.mxu0 0
          %1378 = vmatprep.subr.bf16.mxu0 0
          %1379 = vmatpush1.bf16.msra.mxu0 0
          %1380 = vmatprep.subr.bf16.mxu0 0
          %1381 = vmatpush1.bf16.msra.mxu0 0
          %1382 = vmatprep.subr.bf16.mxu0 0
          %1383 = vmatpush1.bf16.msra.mxu0 0
          %1384 = vmatprep.subr.bf16.mxu0 0
          %1385 = vmatpush1.bf16.msra.mxu0 0
          %1386 = vmatprep.subr.bf16.mxu0 0
          %1387 = vmatpush1.bf16.msra.mxu0 0
          %1388 = vmatprep.mubr.bf16.mxu0 0
          %1389 = vmatmul.mubr.bf16.gmra.mrb[0].mxu0 %v1354
          %v1390 = vpop.f32.mrb[0].mxu0
          %v1391 = vadd.f32 0.0, %v1390
          %v1392 = vpop.f32.mrb[0].mxu0
          %v1393 = vpop.f32.mrb[0].mxu0
          %v1394 = vpop.f32.mrb[0].mxu0
          %1395 = vdwg.mxu0
          %v1396 = vadd.f32 %v657, %v1391
          %v1397 = vxor.u32 %v1396, 2147483648
          %v1398 = vmul.f32 %v1397, 1.442695
          %v1399 = vpow.pop %v1398
          %v1400 = vadd.f32 %v1399, 1.0
          %v1401 = vrcp.pop %v1400
          %v1402 = vmul.f32 1.0, %v1401
          %v1403 = vtanh.pop %v1396
          %v1404 = vmul.f32 %v1402, %v1348
          %1406 = vrot.lane.b32.xlu0 %v1403, 32
          %v1407 = vpop.permute.xlu0 %1406
          %v1409 = vmul.f32 %v1402, %v1407
          %1411 = vrot.lane.b32.xlu0 %v1409, 32
          %v1412 = vpop.permute.xlu0 %1411
          %v1414 = vadd.f32 %v1404, %v1412
          %v1415 = vtanh.pop %v1414
          %1417 = vrot.lane.b32.xlu0 %v1415, 32
          %v1418 = vpop.permute.xlu0 %1417
          %v1420 = vmul.f32 %v1402, %v1418
          %v1421 = vstv %s671
          %vm1422 = vcmp.gt.s32.totalorder %v665, %v1421
          %v1423 = vsel %vm1422, 1, 0
          %1424 = vset.pattern.permute.xlu0 0
          %1425 = vperm.xlu0 %1424, %v1423
          %v1426 = vpop.permute.xlu0 %1425
          %vm1427 = vcmp.eq.s32.totalorder %v1426, 1
          %v1428 = vsel %vm1427, %v1420, 0.0
          %1430 = vrot.lane.b32.xlu0 %v1428, 64
          %v1431 = vpop.permute.xlu0 %1430
          %1433 = vst.msk [vmem:[%s471] sm:$0xff] %vm527, %v1431
          %v1434 = vsel %vm1427, %v1420, %v1347
          %v1435 = vsel %vm1427, %v1414, %v1348
          %1437 = vrot.lane.b32.xlu0 %v1434, 64
          %v1438 = vpop.permute.xlu0 %1437
          %1440 = vst.msk [vmem:[#allocation2] sm:$0xff] %vm527, %v1438
          %1442 = vrot.lane.b32.xlu0 %v1435, 96
          %v1443 = vpop.permute.xlu0 %1442
          %1445 = vst.msk [vmem:[#allocation3] sm:$0xff] %vm527, %v1443
        $region90: #{encoder_forward.3} parent=73 // pred_fallthru
          _
        %p1446 = scmp.eq.s32.totalorder %s24, 1
        // Predicated region
        $region91: #{encoder_forward.3} parent=73 // pred_check
          %p1447 = pneg %p1446
        $region92: #{encoder_forward.3} parent=73 // pred_check_branch
          %1449 = sbr.rel (%p1447) target = $region94
        $region93: #{encoder_forward.3} parent=73 // pred_region
          %v1450 = vld [vmem:[#allocation2] sm:$0xff]
          %1451 = vst.msk [vmem:[%s481] sm:$0xff] %vm527, %v1450
          %v1452 = vld [vmem:[#allocation3] sm:$0xff]
          %1453 = vst.msk [vmem:[%s485] sm:$0xff] %vm527, %v1452
        $region94: #{encoder_forward.3} parent=73 // pred_fallthru
          _
        %s1454 = ssub.s32 1, %s23
        %s1455 = smul.u32 %s1454, %s24
        %s1456 = ssub.s32 1, %s24
        %s1457 = smul.u32 %s23, %s1456
        %s1458 = sadd.s32 %s1455, %s1457
        %s1459 = smul.u32 4, %s1458
        %p1460 = scmp.lt.s32.totalorder %s23, 1
        %s1461 = scalar_select %p1460, %s23, 1
        %p1462 = scmp.lt.s32.totalorder %s1459, 7
        %s1463 = scalar_select %p1462, %s1459, 7
        %s1464 = smul.addr %s1461, 8
        %s1465 = sadd.s32 %s1463, %s1464
        %s1466 = smul.addr %s1465, 8
        %s1467 = scalar_lea.vmem %s5, %s1466
        %p1468 = scmp.lt.s32.totalorder %s23, 1
        %s1469 = scalar_select %p1468, %s23, 1
        %s1470 = smul.addr %s1469, 8
        %s1471 = scalar_lea.vmem %s6, %s1470
        %p1472 = scmp.lt.s32.totalorder %s23, 1
        %s1473 = scalar_select %p1472, %s23, 1
        %s1474 = smul.addr %s1473, 8
        %s1475 = scalar_lea.vmem %s7, %s1474
        // Predicated region
        $region95: #{encoder_forward.3} parent=73 // pred_check
          %p1476 = pneg %p196
        $region96: #{encoder_forward.3} parent=73 // pred_check_branch
          %1478 = sbr.rel (%p1476) target = $region98
        $region97: #{encoder_forward.3} parent=73 // pred_region
          %s1479 = ssub.s32 1, %s23
          %s1480 = smul.u32 %s1479, %s24
          %s1481 = ssub.s32 1, %s24
          %s1482 = smul.u32 %s23, %s1481
          %s1483 = sadd.s32 %s1480, %s1482
          %s1484 = smul.u32 4, %s1483
        $region98: #{encoder_forward.3} parent=73 // pred_fallthru
          _
        // Predicated region
        $region99: #{encoder_forward.3} parent=73 // pred_check
          %p1485 = pneg %p222
        $region100: #{encoder_forward.3} parent=73 // pred_check_branch
          %1487 = sbr.rel (%p1485) target = $region102
        $region101: #{encoder_forward.3} parent=73 // pred_region
          _
        $region102: #{encoder_forward.3} parent=73 // pred_fallthru
          _
        // Predicated region
        $region103: #{encoder_forward.3} parent=73 // pred_check
          %p1488 = pneg %p248
        $region104: #{encoder_forward.3} parent=73 // pred_check_branch
          %1490 = sbr.rel (%p1488) target = $region106
        $region105: #{encoder_forward.3} parent=73 // pred_region
          _
        $region106: #{encoder_forward.3} parent=73 // pred_fallthru
          _
      $region74: #{encoder_forward.3} parent=5 // pred_fallthru
        _
      %p1491 = scmp.le.s32.totalorder 2, %s14
      // Predicated region
      $region107: #{encoder_forward.3} parent=5 // pred_check
        %p1492 = pneg %p1491
      $region108: #{encoder_forward.3} parent=5 // pred_check_branch
        %1494 = sbr.rel (%p1492) target = $region110
      $region109: #{encoder_forward.3} parent=5 // pred_region
        %s1495 = ssub.s32 %s14, 2
        // Predicated region
        $region111: #{encoder_forward.3} parent=109 // pred_check
          %p1496 = pneg %p202
        $region112: #{encoder_forward.3} parent=109 // pred_check_branch
          %1498 = sbr.rel (%p1496) target = $region114
        $region113: #{encoder_forward.3} parent=109 // pred_region
          %s1499 = ssub.s32 1, %s25
          %s1500 = smul.u32 %s1499, %s26
          %s1501 = ssub.s32 1, %s26
          %s1502 = smul.u32 %s25, %s1501
          %s1503 = sadd.s32 %s1500, %s1502
          %s1504 = smul.u32 4, %s1503
          %p1505 = scmp.lt.s32.totalorder %s25, 1
          %s1506 = scalar_select %p1505, %s25, 1
          %p1507 = scmp.lt.s32.totalorder %s1504, 7
          %s1508 = scalar_select %p1507, %s1504, 7
          %s1509 = smul.addr %s1506, 8
          %s1510 = sadd.s32 %s1508, %s1509
          %s1511 = smul.addr %s1510, 8
          %s1512 = scalar_lea.vmem %s5, %s1511
        $region114: #{encoder_forward.3} parent=109 // pred_fallthru
          _
        // Predicated region
        $region115: #{encoder_forward.3} parent=109 // pred_check
          %p1513 = pneg %p228
        $region116: #{encoder_forward.3} parent=109 // pred_check_branch
          %1515 = sbr.rel (%p1513) target = $region118
        $region117: #{encoder_forward.3} parent=109 // pred_region
          %p1516 = scmp.lt.s32.totalorder %s25, 1
          %s1517 = scalar_select %p1516, %s25, 1
          %s1518 = smul.addr %s1517, 8
          %s1519 = scalar_lea.vmem %s6, %s1518
        $region118: #{encoder_forward.3} parent=109 // pred_fallthru
          _
        // Predicated region
        $region119: #{encoder_forward.3} parent=109 // pred_check
          %p1520 = pneg %p254
        $region120: #{encoder_forward.3} parent=109 // pred_check_branch
          %1522 = sbr.rel (%p1520) target = $region122
        $region121: #{encoder_forward.3} parent=109 // pred_region
          %p1523 = scmp.lt.s32.totalorder %s25, 1
          %s1524 = scalar_select %p1523, %s25, 1
          %s1525 = smul.addr %s1524, 8
          %s1526 = scalar_lea.vmem %s7, %s1525
        $region122: #{encoder_forward.3} parent=109 // pred_fallthru
          _
      $region110: #{encoder_forward.3} parent=5 // pred_fallthru
        _
    $region6: #{encoder_forward.3} parent=1 // loop_footer
      %s18 = sadd.s32 1, %s14
    $region7: #{encoder_forward.3} parent=1 // loop_footer_branch
      %13 = sbr.rel target = $region3
    $region8: #{encoder_forward.3} parent=1 // loop_exit
      _

// kernel: encoder_forward.2
$region0: #{encoder_forward.2}
  #allocation0 [shape = 'u32[]', space=smem, size = 0x4, offset = 0x4, fixed_abs, tag = 'smem constant byte address 0x4 - core index']
  #allocation1 [shape = 'u32[144,128]{1,0:T(1,128)}', space=vmem, size = 0x12000, scoped, tag = 'internal scratch']
  #allocation2 [shape = 'f32[8,32]{1,0:T(8,128)}', space=vmem, size = 0x1000, scoped, tag = 'scratch operand']
  #allocation3 [shape = 'f32[8,32]{1,0:T(8,128)}', space=vmem, size = 0x1000, scoped, tag = 'scratch operand']
  %s0 = inlined_call_operand.vmem [shape: s32[8,1], index: 0, kind: input, shape index: {}]
  %s1 = inlined_call_operand.vmem [shape: f32[1,8,8,16], index: 1, kind: input, shape index: {}]
  %s2 = inlined_call_operand.vmem [shape: bf16[2,1,16,128], index: 2, kind: input, shape index: {}]
  %s3 = inlined_call_operand.vmem [shape: bf16[2,32,128], index: 3, kind: input, shape index: {}]
  %s4 = inlined_call_operand.vmem [shape: f32[2,1,128], index: 4, kind: input, shape index: {}]
  %s5 = inlined_call_operand.vmem [shape: f32[2,8,8,32], index: 5, kind: output, shape index: {0}]
  %s6 = inlined_call_operand.vmem [shape: f32[2,8,32], index: 6, kind: output, shape index: {1}]
  %s7 = inlined_call_operand.vmem [shape: f32[2,8,32], index: 7, kind: output, shape index: {2}]
  %8 = xla_tuple %s5, %s6, %s7
  %s9 = sld [smem:[#allocation0]]
  $region85: #{encoder_forward.2} parent=0
    _
  %s11 = ssub.s32 1, %s9
  %s12 = scalar_select 0, %s11, %s9
  loop: start=0, step=1, limit=6
  $region2: #{encoder_forward.2} parent=0 // loop_pre_header
    _
  $region3: #{encoder_forward.2} parent=0 // loop_header
    %s14 = sphi 0, %s18
    %p15 = scmp.ge.s32.totalorder %s14, 6
    %s21 = sphi 0, %s33
    %s22 = sphi 0, %s29
    %s23 = sphi 0, %s21
    %s24 = sphi 0, %s22
    %s25 = sphi 0, %s23
    %s26 = sphi 0, %s24
    %s34 = sphi 0, %s34
    %s36 = sphi 0, %s34
    %s37 = sphi 0, %s36
    %s51 = sphi 0, %s37
    %s67 = sphi 0, %s69
    %s70 = sphi 0, %s67
    %s71 = sphi 0, %s70
    %s87 = sphi 0, %s71
    %s93 = sphi 0, %s95
    %s96 = sphi 0, %s93
    %s97 = sphi 0, %s96
    %s113 = sphi 0, %s97
    %s119 = sphi 0, %s121
    %s122 = sphi 0, %s119
    %s123 = sphi 0, %s122
    %s139 = sphi 0, %s123
    %s145 = sphi 0, %s147
    %s148 = sphi 0, %s145
    %s149 = sphi 0, %s148
    %s165 = sphi 0, %s149
    %s183 = sphi 0, %s185
    %s186 = sphi 0, %s183
    %s187 = sphi 0, %s186
    %s203 = sphi 0, %s187
    %s209 = sphi 0, %s211
    %s212 = sphi 0, %s209
    %s213 = sphi 0, %s212
    %s229 = sphi 0, %s213
    %s235 = sphi 0, %s237
    %s238 = sphi 0, %s235
    %s239 = sphi 0, %s238
    %s255 = sphi 0, %s239
  $region4: #{encoder_forward.2} parent=0 // loop_header_branch
    %17 = sbr.rel (%p15) target = $region8
  $region5: #{encoder_forward.2} parent=0 // loop_body
    %s19 = ssub.s32 %s14, 1
    %s20 = ssub.s32 %s14, 2
    %s27 = sadd.s32 1, %s22
    %p28 = scmp.ge.s32.totalorder %s27, 2
    %s29 = scalar_select %p28, 0, %s27
    %s30 = sadd.s32 1, %s21
    %s31 = scalar_select %p28, %s30, %s21
    %p32 = scmp.ge.s32.totalorder %s31, 2
    %s33 = scalar_select %p32, 0, %s31
    %s35 = sadd.s32 %s34, 1
    %p38 = scmp.eq.s32.totalorder %s14, 3
    %p39 = scmp.ne.s32.totalorder %s34, %s36
    %p40 = scmp.eq.s32.totalorder %s14, 0
    %p41 = por %p39, %p40
    %p42 = scmp.ne.s32.totalorder %s34, %s36
    %p43 = scmp.eq.s32.totalorder %s19, 3
    %p44 = por %p42, %p43
    %p45 = scmp.ne.s32.totalorder %s36, %s37
    %p46 = scmp.eq.s32.totalorder %s19, 0
    %p47 = por %p45, %p46
    %p48 = scmp.ne.s32.totalorder %s36, %s37
    %p49 = scmp.eq.s32.totalorder %s20, 3
    %p50 = por %p48, %p49
    %p52 = scmp.ne.s32.totalorder %s37, %s51
    %p53 = scmp.eq.s32.totalorder %s20, 0
    %p54 = por %p52, %p53
    %s55 = ssub.s32 1, %s21
    %s56 = smul.u32 %s55, %s22
    %s57 = ssub.s32 1, %s22
    %s58 = smul.u32 %s21, %s57
    %s59 = sadd.s32 %s56, %s58
    %s60 = ssub.s32 1, %s33
    %s61 = smul.u32 %s60, %s29
    %s62 = ssub.s32 1, %s29
    %s63 = smul.u32 %s33, %s62
    %s64 = sadd.s32 %s61, %s63
    %s65 = ssub.s32 %s59, %s64
    %p66 = scmp.eq.s32.totalorder %s65, 0
    %s68 = sadd.s32 %s67, 1
    %s69 = scalar_select %p66, %s67, %s68
    %p72 = pneg %p66
    %p73 = scmp.eq.s32.totalorder %s14, 3
    %p74 = por %p72, %p73
    %p75 = scmp.ne.s32.totalorder %s67, %s70
    %p76 = scmp.eq.s32.totalorder %s14, 0
    %p77 = por %p75, %p76
    %p78 = scmp.ne.s32.totalorder %s67, %s70
    %p79 = scmp.eq.s32.totalorder %s19, 3
    %p80 = por %p78, %p79
    %p81 = scmp.ne.s32.totalorder %s70, %s71
    %p82 = scmp.eq.s32.totalorder %s19, 0
    %p83 = por %p81, %p82
    %p84 = scmp.ne.s32.totalorder %s70, %s71
    %p85 = scmp.eq.s32.totalorder %s20, 3
    %p86 = por %p84, %p85
    %p88 = scmp.ne.s32.totalorder %s71, %s87
    %p89 = scmp.eq.s32.totalorder %s20, 0
    %p90 = por %p88, %p89
    %s91 = ssub.s32 %s21, %s33
    %p92 = scmp.eq.s32.totalorder %s91, 0
    %s94 = sadd.s32 %s93, 1
    %s95 = scalar_select %p92, %s93, %s94
    %p98 = pneg %p92
    %p99 = scmp.eq.s32.totalorder %s14, 3
    %p100 = por %p98, %p99
    %p101 = scmp.ne.s32.totalorder %s93, %s96
    %p102 = scmp.eq.s32.totalorder %s14, 0
    %p103 = por %p101, %p102
    %p104 = scmp.ne.s32.totalorder %s93, %s96
    %p105 = scmp.eq.s32.totalorder %s19, 3
    %p106 = por %p104, %p105
    %p107 = scmp.ne.s32.totalorder %s96, %s97
    %p108 = scmp.eq.s32.totalorder %s19, 0
    %p109 = por %p107, %p108
    %p110 = scmp.ne.s32.totalorder %s96, %s97
    %p111 = scmp.eq.s32.totalorder %s20, 3
    %p112 = por %p110, %p111
    %p114 = scmp.ne.s32.totalorder %s97, %s113
    %p115 = scmp.eq.s32.totalorder %s20, 0
    %p116 = por %p114, %p115
    %s117 = ssub.s32 %s21, %s33
    %p118 = scmp.eq.s32.totalorder %s117, 0
    %s120 = sadd.s32 %s119, 1
    %s121 = scalar_select %p118, %s119, %s120
    %p124 = pneg %p118
    %p125 = scmp.eq.s32.totalorder %s14, 3
    %p126 = por %p124, %p125
    %p127 = scmp.ne.s32.totalorder %s119, %s122
    %p128 = scmp.eq.s32.totalorder %s14, 0
    %p129 = por %p127, %p128
    %p130 = scmp.ne.s32.totalorder %s119, %s122
    %p131 = scmp.eq.s32.totalorder %s19, 3
    %p132 = por %p130, %p131
    %p133 = scmp.ne.s32.totalorder %s122, %s123
    %p134 = scmp.eq.s32.totalorder %s19, 0
    %p135 = por %p133, %p134
    %p136 = scmp.ne.s32.totalorder %s122, %s123
    %p137 = scmp.eq.s32.totalorder %s20, 3
    %p138 = por %p136, %p137
    %p140 = scmp.ne.s32.totalorder %s123, %s139
    %p141 = scmp.eq.s32.totalorder %s20, 0
    %p142 = por %p140, %p141
    %s143 = ssub.s32 %s21, %s33
    %p144 = scmp.eq.s32.totalorder %s143, 0
    %s146 = sadd.s32 %s145, 1
    %s147 = scalar_select %p144, %s145, %s146
    %p150 = pneg %p144
    %p151 = scmp.eq.s32.totalorder %s14, 3
    %p152 = por %p150, %p151
    %p153 = scmp.ne.s32.totalorder %s145, %s148
    %p154 = scmp.eq.s32.totalorder %s14, 0
    %p155 = por %p153, %p154
    %p156 = scmp.ne.s32.totalorder %s145, %s148
    %p157 = scmp.eq.s32.totalorder %s19, 3
    %p158 = por %p156, %p157
    %p159 = scmp.ne.s32.totalorder %s148, %s149
    %p160 = scmp.eq.s32.totalorder %s19, 0
    %p161 = por %p159, %p160
    %p162 = scmp.ne.s32.totalorder %s148, %s149
    %p163 = scmp.eq.s32.totalorder %s20, 3
    %p164 = por %p162, %p163
    %p166 = scmp.ne.s32.totalorder %s149, %s165
    %p167 = scmp.eq.s32.totalorder %s20, 0
    %p168 = por %p166, %p167
    %s169 = ssub.s32 1, %s21
    %s170 = smul.u32 %s169, %s22
    %s171 = ssub.s32 1, %s22
    %s172 = smul.u32 %s21, %s171
    %s173 = sadd.s32 %s170, %s172
    %s174 = ssub.s32 1, %s33
    %s175 = smul.u32 %s174, %s29
    %s176 = ssub.s32 1, %s29
    %s177 = smul.u32 %s33, %s176
    %s178 = sadd.s32 %s175, %s177
    %s179 = ssub.s32 %s21, %s33
    %s180 = ssub.s32 %s173, %s178
    %s181 = sor.u32 %s179, %s180
    %p182 = scmp.eq.s32.totalorder %s181, 0
    %s184 = sadd.s32 %s183, 1
    %s185 = scalar_select %p182, %s183, %s184
    %p188 = pneg %p182
    %p189 = scmp.eq.s32.totalorder %s14, 3
    %p190 = por %p188, %p189
    %p191 = scmp.ne.s32.totalorder %s183, %s186
    %p192 = scmp.eq.s32.totalorder %s14, 0
    %p193 = por %p191, %p192
    %p194 = scmp.ne.s32.totalorder %s183, %s186
    %p195 = scmp.eq.s32.totalorder %s19, 3
    %p196 = por %p194, %p195
    %p197 = scmp.ne.s32.totalorder %s186, %s187
    %p198 = scmp.eq.s32.totalorder %s19, 0
    %p199 = por %p197, %p198
    %p200 = scmp.ne.s32.totalorder %s186, %s187
    %p201 = scmp.eq.s32.totalorder %s20, 3
    %p202 = por %p200, %p201
    %p204 = scmp.ne.s32.totalorder %s187, %s203
    %p205 = scmp.eq.s32.totalorder %s20, 0
    %p206 = por %p204, %p205
    %s207 = ssub.s32 %s21, %s33
    %p208 = scmp.eq.s32.totalorder %s207, 0
    %s210 = sadd.s32 %s209, 1
    %s211 = scalar_select %p208, %s209, %s210
    %p214 = pneg %p208
    %p215 = scmp.eq.s32.totalorder %s14, 3
    %p216 = por %p214, %p215
    %p217 = scmp.ne.s32.totalorder %s209, %s212
    %p218 = scmp.eq.s32.totalorder %s14, 0
    %p219 = por %p217, %p218
    %p220 = scmp.ne.s32.totalorder %s209, %s212
    %p221 = scmp.eq.s32.totalorder %s19, 3
    %p222 = por %p220, %p221
    %p223 = scmp.ne.s32.totalorder %s212, %s213
    %p224 = scmp.eq.s32.totalorder %s19, 0
    %p225 = por %p223, %p224
    %p226 = scmp.ne.s32.totalorder %s212, %s213
    %p227 = scmp.eq.s32.totalorder %s20, 3
    %p228 = por %p226, %p227
    %p230 = scmp.ne.s32.totalorder %s213, %s229
    %p231 = scmp.eq.s32.totalorder %s20, 0
    %p232 = por %p230, %p231
    %s233 = ssub.s32 %s21, %s33
    %p234 = scmp.eq.s32.totalorder %s233, 0
    %s236 = sadd.s32 %s235, 1
    %s237 = scalar_select %p234, %s235, %s236
    %p240 = pneg %p234
    %p241 = scmp.eq.s32.totalorder %s14, 3
    %p242 = por %p240, %p241
    %p243 = scmp.ne.s32.totalorder %s235, %s238
    %p244 = scmp.eq.s32.totalorder %s14, 0
    %p245 = por %p243, %p244
    %p246 = scmp.ne.s32.totalorder %s235, %s238
    %p247 = scmp.eq.s32.totalorder %s19, 3
    %p248 = por %p246, %p247
    %p249 = scmp.ne.s32.totalorder %s238, %s239
    %p250 = scmp.eq.s32.totalorder %s19, 0
    %p251 = por %p249, %p250
    %p252 = scmp.ne.s32.totalorder %s238, %s239
    %p253 = scmp.eq.s32.totalorder %s20, 3
    %p254 = por %p252, %p253
    %p256 = scmp.ne.s32.totalorder %s239, %s255
    %p257 = scmp.eq.s32.totalorder %s20, 0
    %p258 = por %p256, %p257
    %p259 = scmp.le.s32.totalorder 1, %s14
    %p260 = scmp.lt.s32.totalorder %s14, 5
    %p261 = pnand %p259, %p260
    %p262 = pneg %p261
    // Predicated region
    $region9: #{encoder_forward.2} parent=5 // pred_check
      _
    $region10: #{encoder_forward.2} parent=5 // pred_check_branch
      %264 = sbr.rel (%p261) target = $region12
    $region11: #{encoder_forward.2} parent=5 // pred_region
      %s265 = ssub.s32 %s14, 1
      // Predicated region
      $region13: #{encoder_forward.2} parent=11 // pred_check
        %p266 = pneg %p47
      $region14: #{encoder_forward.2} parent=11 // pred_check_branch
        %268 = sbr.rel (%p266) target = $region16
      $region15: #{encoder_forward.2} parent=11 // pred_region
        _
      $region16: #{encoder_forward.2} parent=11 // pred_fallthru
        _
    $region12: #{encoder_forward.2} parent=5 // pred_fallthru
      _
    %p269 = scmp.lt.s32.totalorder %s14, 4
    // Predicated region
    $region17: #{encoder_forward.2} parent=5 // pred_check
      %p270 = pneg %p269
    $region18: #{encoder_forward.2} parent=5 // pred_check_branch
      %272 = sbr.rel (%p270) target = $region20
    $region19: #{encoder_forward.2} parent=5 // pred_region
      // Predicated region
      $region21: #{encoder_forward.2} parent=19 // pred_check
        %p273 = pneg %p77
      $region22: #{encoder_forward.2} parent=19 // pred_check_branch
        %275 = sbr.rel (%p273) target = $region24
      $region23: #{encoder_forward.2} parent=19 // pred_region
        %s276 = ssub.s32 1, %s21
        %s277 = smul.u32 %s276, %s22
        %s278 = ssub.s32 1, %s22
        %s279 = smul.u32 %s21, %s278
        %s280 = sadd.s32 %s277, %s279
        %s281 = smul.u32 4, %s280
        %p282 = scmp.lt.s32.totalorder %s281, 7
        %s283 = scalar_select %p282, %s281, 7
        %s284 = smul.addr %s283, 8
        %s285 = scalar_lea.vmem %s1, %s284
        %s286 = ssub.s32 1, %s21
        %s287 = smul.u32 %s286, %s22
        %s288 = ssub.s32 1, %s22
        %s289 = smul.u32 %s21, %s288
        %s290 = sadd.s32 %s287, %s289
        %s291 = smul.u32 4, %s290
      $region24: #{encoder_forward.2} parent=19 // pred_fallthru
        _
      // Predicated region
      $region25: #{encoder_forward.2} parent=19 // pred_check
        %p292 = pneg %p103
      $region26: #{encoder_forward.2} parent=19 // pred_check_branch
        %294 = sbr.rel (%p292) target = $region28
      $region27: #{encoder_forward.2} parent=19 // pred_region
        %p295 = scmp.lt.s32.totalorder %s21, 1
        %s296 = scalar_select %p295, %s21, 1
        %s297 = smul.addr %s296, 2
        %s298 = smul.addr %s297, 4
        %s299 = scalar_lea.vmem %s2, %s298
      $region28: #{encoder_forward.2} parent=19 // pred_fallthru
        _
      // Predicated region
      $region29: #{encoder_forward.2} parent=19 // pred_check
        %p300 = pneg %p129
      $region30: #{encoder_forward.2} parent=19 // pred_check_branch
        %302 = sbr.rel (%p300) target = $region32
      $region31: #{encoder_forward.2} parent=19 // pred_region
        %p303 = scmp.lt.s32.totalorder %s21, 1
        %s304 = scalar_select %p303, %s21, 1
        %s305 = smul.addr %s304, 4
        %s306 = smul.addr %s305, 4
        %s307 = scalar_lea.vmem %s3, %s306
      $region32: #{encoder_forward.2} parent=19 // pred_fallthru
        _
      // Predicated region
      $region33: #{encoder_forward.2} parent=19 // pred_check
        %p308 = pneg %p155
      $region34: #{encoder_forward.2} parent=19 // pred_check_branch
        %310 = sbr.rel (%p308) target = $region36
      $region35: #{encoder_forward.2} parent=19 // pred_region
        %p311 = scmp.lt.s32.totalorder %s21, 1
        %s312 = scalar_select %p311, %s21, 1
        %s313 = scalar_lea.vmem %s4, %s312
      $region36: #{encoder_forward.2} parent=19 // pred_fallthru
        _
    $region20: #{encoder_forward.2} parent=5 // pred_fallthru
      _
    %p314 = scmp.le.s32.totalorder 1, %s14
    %p315 = scmp.lt.s32.totalorder %s14, 5
    %p316 = pnand %p314, %p315
    %p317 = pneg %p316
    // Predicated region
    $region37: #{encoder_forward.2} parent=5 // pred_check
      _
    $region38: #{encoder_forward.2} parent=5 // pred_check_branch
      %319 = sbr.rel (%p316) target = $region40
    $region39: #{encoder_forward.2} parent=5 // pred_region
      %s320 = ssub.s32 %s14, 1
      %p321 = pneg %p47
      %p322 = pneg %p44
      %s323 = ssub.s32 1, %s23
      %s324 = smul.u32 %s323, %s24
      %s325 = ssub.s32 1, %s24
      %s326 = smul.u32 %s23, %s325
      %s327 = sadd.s32 %s324, %s326
      %s328 = smul.u32 4, %s327
      %p329 = scmp.lt.s32.totalorder %s328, 7
      %s330 = scalar_select %p329, %s328, 7
      %s331 = smul.addr %s330, 8
      %s332 = scalar_lea.vmem %s1, %s331
      %p333 = pneg %p83
      %p334 = pneg %p80
      %p335 = scmp.lt.s32.totalorder %s23, 1
      %s336 = scalar_select %p335, %s23, 1
      %s337 = smul.addr %s336, 2
      %s338 = smul.addr %s337, 4
      %s339 = scalar_lea.vmem %s2, %s338
      %p340 = pneg %p109
      %p341 = pneg %p106
      %p342 = scmp.lt.s32.totalorder %s23, 1
      %s343 = scalar_select %p342, %s23, 1
      %s344 = smul.addr %s343, 4
      %s345 = smul.addr %s344, 4
      %s346 = scalar_lea.vmem %s3, %s345
      %p347 = pneg %p135
      %p348 = pneg %p132
      %p349 = scmp.lt.s32.totalorder %s23, 1
      %s350 = scalar_select %p349, %s23, 1
      %s351 = scalar_lea.vmem %s4, %s350
      %p352 = pneg %p161
      %p353 = pneg %p158
      %p354 = pneg %p199
      %p355 = pneg %p196
      %s356 = ssub.s32 1, %s23
      %s357 = smul.u32 %s356, %s24
      %s358 = ssub.s32 1, %s24
      %s359 = smul.u32 %s23, %s358
      %s360 = sadd.s32 %s357, %s359
      %s361 = smul.u32 4, %s360
      %p362 = scmp.lt.s32.totalorder %s23, 1
      %s363 = scalar_select %p362, %s23, 1
      %p364 = scmp.lt.s32.totalorder %s361, 7
      %s365 = scalar_select %p364, %s361, 7
      %s366 = smul.addr %s363, 8
      %s367 = sadd.s32 %s365, %s366
      %s368 = smul.addr %s367, 8
      %s369 = scalar_lea.vmem %s5, %s368
      %p370 = pneg %p225
      %p371 = pneg %p222
      %p372 = scmp.lt.s32.totalorder %s23, 1
      %s373 = scalar_select %p372, %s23, 1
      %s374 = smul.addr %s373, 8
      %s375 = scalar_lea.vmem %s6, %s374
      %p376 = pneg %p251
      %p377 = pneg %p248
      %p378 = scmp.lt.s32.totalorder %s23, 1
      %s379 = scalar_select %p378, %s23, 1
      %s380 = smul.addr %s379, 8
      %s381 = scalar_lea.vmem %s7, %s380
      %s382 = ssub.s32 1, %s23
      %s383 = smul.u32 %s382, %s24
      %s384 = ssub.s32 1, %s24
      %s385 = smul.u32 %s23, %s384
      %s386 = sadd.s32 %s383, %s385
      %s387 = smul.u32 4, %s386
      %p388 = scmp.lt.s32.totalorder %s387, 7
      %s389 = scalar_select %p388, %s387, 7
      %s390 = smul.addr %s389, 8
      %s391 = scalar_lea.vmem %s1, %s390
      %s392 = ssub.s32 1, %s23
      %s393 = smul.u32 %s392, %s24
      %s394 = ssub.s32 1, %s24
      %s395 = smul.u32 %s23, %s394
      %s396 = sadd.s32 %s393, %s395
      %s397 = smul.u32 4, %s396
      %p398 = scmp.lt.s32.totalorder %s23, 1
      %s399 = scalar_select %p398, %s23, 1
      %s400 = smul.addr %s399, 2
      %s401 = smul.addr %s400, 4
      %s402 = scalar_lea.vmem %s2, %s401
      %p403 = scmp.lt.s32.totalorder %s23, 1
      %s404 = scalar_select %p403, %s23, 1
      %s405 = smul.addr %s404, 4
      %s406 = smul.addr %s405, 4
      %s407 = scalar_lea.vmem %s3, %s406
      %p408 = scmp.lt.s32.totalorder %s23, 1
      %s409 = scalar_select %p408, %s23, 1
      %s410 = scalar_lea.vmem %s4, %s409
      %s411 = ssub.s32 1, %s23
      %s412 = smul.u32 %s411, %s24
      %s413 = ssub.s32 1, %s24
      %s414 = smul.u32 %s23, %s413
      %s415 = sadd.s32 %s412, %s414
      %s416 = smul.u32 4, %s415
      %p417 = scmp.lt.s32.totalorder %s23, 1
      %s418 = scalar_select %p417, %s23, 1
      %p419 = scmp.lt.s32.totalorder %s416, 7
      %s420 = scalar_select %p419, %s416, 7
      %s421 = smul.addr %s418, 8
      %s422 = sadd.s32 %s420, %s421
      %s423 = smul.addr %s422, 8
      %s424 = scalar_lea.vmem %s5, %s423
      %s425 = ssub.s32 1, %s23
      %s426 = smul.u32 %s425, %s24
      %s427 = ssub.s32 1, %s24
      %s428 = smul.u32 %s23, %s427
      %s429 = sadd.s32 %s426, %s428
      %s430 = smul.u32 4, %s429
      %p431 = scmp.lt.s32.totalorder %s23, 1
      %s432 = scalar_select %p431, %s23, 1
      %s433 = smul.addr %s432, 8
      %s434 = scalar_lea.vmem %s6, %s433
      %p435 = scmp.lt.s32.totalorder %s23, 1
      %s436 = scalar_select %p435, %s23, 1
      %s437 = smul.addr %s436, 8
      %s438 = scalar_lea.vmem %s7, %s437
      %p440 = scmp.eq.s32.totalorder %s24, 0
      // Predicated region
      $region41: #{encoder_forward.2} parent=39 // pred_check
        %p441 = pneg %p440
      $region42: #{encoder_forward.2} parent=39 // pred_check_branch
        %443 = sbr.rel (%p441) target = $region44
      $region43: #{encoder_forward.2} parent=39 // pred_region
        %vm444 = vcmask 261120
        %445 = vst.msk [vmem:[#allocation2] sm:$0xff] %vm444, 0.0
        %446 = vst.msk [vmem:[#allocation3] sm:$0xff] %vm444, 0.0
      $region44: #{encoder_forward.2} parent=39 // pred_fallthru
        _
      %v447 = vld [vmem:[%s391] sm:$0xff]
      %v448 = vld [vmem:[%s391 + $0x8] sm:$0xff]
      %v449 = vld [vmem:[%s391 + $0x10] sm:$0xff]
      %v450 = vld [vmem:[%s391 + $0x18] sm:$0xff]
      %v451 = vpack.c.bf16 %v448, %v447
      %v452 = vpack.c.bf16 %v450, %v449
      %v453 = vld [vmem:[%s402] sm:$0xf]
      %v454 = vld [vmem:[%s402 + $0x4] sm:$0xf]
      %v455 = vld [vmem:[%s410] sm:$0x1]
      %v457 = vlaneseq
      %v458 = vshrl.u32 %v457, 7
      %v459 = vsub.s32 0, %v458
      %v460 = vrot.slane %v455, %v459
      %v464 = vunpack.c.l.b16 %v453
      %v465 = vunpack.c.l.b16 %v454
      %v466 = vpack.c.b16 %v465, %v464
      %vm468 = vcmask 130048
      %v470 = vsel %vm468, %v451, 0
      %v473 = vsel %vm468, %v452, 0
      %475 = vmatprep.subr.bf16.mxu0 0
      %476 = vmatpush1.bf16.msra.mxu0 %v466
      %477 = vmatprep.subr.bf16.mxu0 0
      %478 = vmatpush1.bf16.msra.mxu0 0
      %479 = vmatprep.subr.bf16.mxu0 0
      %480 = vmatpush1.bf16.msra.mxu0 0
      %481 = vmatprep.subr.bf16.mxu0 0
      %482 = vmatpush1.bf16.msra.mxu0 0
      %483 = vmatprep.subr.bf16.mxu0 0
      %484 = vmatpush1.bf16.msra.mxu0 0
      %485 = vmatprep.subr.bf16.mxu0 0
      %486 = vmatpush1.bf16.msra.mxu0 0
      %487 = vmatprep.subr.bf16.mxu0 0
      %488 = vmatpush1.bf16.msra.mxu0 0
      %489 = vmatprep.subr.bf16.mxu0 0
      %490 = vmatpush1.bf16.msra.mxu0 0
      %491 = vmatprep.subr.bf16.mxu0 0
      %492 = vmatpush1.bf16.msra.mxu0 0
      %493 = vmatprep.subr.bf16.mxu0 0
      %494 = vmatpush1.bf16.msra.mxu0 0
      %495 = vmatprep.subr.bf16.mxu0 0
      %496 = vmatpush1.bf16.msra.mxu0 0
      %497 = vmatprep.subr.bf16.mxu0 0
      %498 = vmatpush1.bf16.msra.mxu0 0
      %499 = vmatprep.subr.bf16.mxu0 0
      %500 = vmatpush1.bf16.msra.mxu0 0
      %501 = vmatprep.subr.bf16.mxu0 0
      %502 = vmatpush1.bf16.msra.mxu0 0
      %503 = vmatprep.subr.bf16.mxu0 0
      %504 = vmatpush1.bf16.msra.mxu0 0
      %505 = vmatprep.subr.bf16.mxu0 0
      %506 = vmatpush1.bf16.msra.mxu0 0
      %507 = vmatprep.mubr.bf16.mxu0 0
      %508 = vmatmul.mubr.bf16.gmra.mrb[0].mxu0 %v470
      %v509 = vpop.f32.mrb[0].mxu0
      %v510 = vadd.f32 %v460, %v509
      %v511 = vpop.f32.mrb[0].mxu0
      %v512 = vpop.f32.mrb[0].mxu0
      %v513 = vadd.f32 %v460, %v512
      %v514 = vpop.f32.mrb[0].mxu0
      %515 = vmatprep.mubr.bf16.mxu0 0
      %516 = vmatmul.mubr.bf16.gmra.mrb[0].mxu0 %v473
      %v517 = vpop.f32.mrb[0].mxu0
      %v518 = vadd.f32 %v460, %v517
      %v519 = vpop.f32.mrb[0].mxu0
      %v520 = vpop.f32.mrb[0].mxu0
      %v521 = vadd.f32 %v460, %v520
      %v522 = vpop.f32.mrb[0].mxu0
      %523 = vdwg.mxu0
      %v524 = vld [vmem:[%s407] sm:$0xf]
      %v525 = vld [vmem:[%s407 + $0x4] sm:$0xf]
      %v526 = vld [vmem:[%s407 + $0x8] sm:$0xf]
      %v527 = vld [vmem:[%s407 + $0xc] sm:$0xf]
      %v528 = vld [vmem:[%s0] sm:$0xff]
      %s529 = ssub.s32 1, %s23
      %s530 = smul.u32 %s529, %s24
      %s531 = ssub.s32 1, %s24
      %s532 = smul.u32 %s23, %s531
      %s533 = sadd.s32 %s530, %s532
      %s534 = smul.u32 %s533, 4
      %p535 = scmp.eq.s32.totalorder %s23, 0
      // Predicated region
      $region45: #{encoder_forward.2} parent=39 // pred_check
        %p536 = pneg %p535
      $region46: #{encoder_forward.2} parent=39 // pred_check_branch
        %538 = sbr.rel (%p536) target = $region48
      $region47: #{encoder_forward.2} parent=39 // pred_region
        %v539 = vld [vmem:[#allocation2] sm:$0xff]
        %v540 = vld [vmem:[#allocation3] sm:$0xff]
        %v541 = vpack.c.bf16 %v539, %v539
        %v546 = vunpack.c.l.b16 %v524
        %v547 = vunpack.c.l.b16 %v525
        %v548 = vunpack.c.l.b16 %v526
        %v549 = vunpack.c.l.b16 %v527
        %v550 = vpack.c.b16 %v547, %v546
        %v551 = vpack.c.b16 %v549, %v548
        %vm554 = vcmask 261120
        %v556 = vsel %vm554, %v541, 0
        %558 = vmatprep.subr.bf16.mxu0 0
        %559 = vmatpush1.bf16.msra.mxu0 %v550
        %560 = vmatprep.subr.bf16.mxu0 0
        %561 = vmatpush1.bf16.msra.mxu0 %v551
        %562 = vmatprep.subr.bf16.mxu0 0
        %563 = vmatpush1.bf16.msra.mxu0 0
        %564 = vmatprep.subr.bf16.mxu0 0
        %565 = vmatpush1.bf16.msra.mxu0 0
        %566 = vmatprep.subr.bf16.mxu0 0
        %567 = vmatpush1.bf16.msra.mxu0 0
        %568 = vmatprep.subr.bf16.mxu0 0
        %569 = vmatpush1.bf16.msra.mxu0 0
        %570 = vmatprep.subr.bf16.mxu0 0
        %571 = vmatpush1.bf16.msra.mxu0 0
        %572 = vmatprep.subr.bf16.mxu0 0
        %573 = vmatpush1.bf16.msra.mxu0 0
        %574 = vmatprep.subr.bf16.mxu0 0
        %575 = vmatpush1.bf16.msra.mxu0 0
        %576 = vmatprep.subr.bf16.mxu0 0
        %577 = vmatpush1.bf16.msra.mxu0 0
        %578 = vmatprep.subr.bf16.mxu0 0
        %579 = vmatpush1.bf16.msra.mxu0 0
        %580 = vmatprep.subr.bf16.mxu0 0
        %581 = vmatpush1.bf16.msra.mxu0 0
        %582 = vmatprep.subr.bf16.mxu0 0
        %583 = vmatpush1.bf16.msra.mxu0 0
        %584 = vmatprep.subr.bf16.mxu0 0
        %585 = vmatpush1.bf16.msra.mxu0 0
        %586 = vmatprep.subr.bf16.mxu0 0
        %587 = vmatpush1.bf16.msra.mxu0 0
        %588 = vmatprep.subr.bf16.mxu0 0
        %589 = vmatpush1.bf16.msra.mxu0 0
        %590 = vmatprep.mubr.bf16.mxu0 0
        %591 = vmatmul.mubr.bf16.gmra.mrb[0].mxu0 %v556
        %v592 = vpop.f32.mrb[0].mxu0
        %v593 = vadd.f32 0.0, %v592
        %v594 = vpop.f32.mrb[0].mxu0
        %v595 = vpop.f32.mrb[0].mxu0
        %v596 = vpop.f32.mrb[0].mxu0
        %597 = vdwg.mxu0
        %v598 = vadd.f32 %v510, %v593
        %v599 = vxor.u32 %v598, 2147483648
        %v600 = vmul.f32 %v599, 1.442695
        %v601 = vpow.pop %v600
        %v602 = vadd.f32 %v601, 1.0
        %v603 = vrcp.pop %v602
        %v604 = vmul.f32 1.0, %v603
        %v605 = vtanh.pop %v598
        %607 = vrot.lane.b32.xlu0 %v540, 32
        %v608 = vpop.permute.xlu0 %607
        %v610 = vmul.f32 %v604, %v608
        %612 = vrot.lane.b32.xlu0 %v605, 32
        %v613 = vpop.permute.xlu0 %612
        %v615 = vmul.f32 %v604, %v613
        %617 = vrot.lane.b32.xlu0 %v615, 32
        %v618 = vpop.permute.xlu0 %617
        %v620 = vadd.f32 %v610, %v618
        %v621 = vtanh.pop %v620
        %623 = vrot.lane.b32.xlu0 %v621, 32
        %v624 = vpop.permute.xlu0 %623
        %v626 = vmul.f32 %v604, %v624
        %v627 = vstv %s534
        %vm628 = vcmp.gt.s32.totalorder %v528, %v627
        %v629 = vsel %vm628, 1, 0
        %630 = vset.pattern.permute.xlu0 0
        %631 = vperm.xlu0 %630, %v629
        %v632 = vpop.permute.xlu0 %631
        %vm633 = vcmp.eq.s32.totalorder %v632, 1
        %v634 = vsel %vm633, %v626, 0.0
        %636 = vrot.lane.b32.xlu0 %v634, 64
        %v637 = vpop.permute.xlu0 %636
        %639 = vst.msk [vmem:[%s424] sm:$0xff] %vm554, %v637
        %641 = vrot.lane.b32.xlu0 %v539, 64
        %v642 = vpop.permute.xlu0 %641
        %v644 = vsel %vm633, %v626, %v642
        %v645 = vsel %vm633, %v620, %v608
        %v646 = vpack.c.bf16 %v644, %v644
        %648 = vrot.lane.b32.xlu0 %v646, 64
        %v649 = vpop.permute.xlu0 %648
        %v651 = vsel %vm554, %v649, 0
        %653 = vmatprep.subr.bf16.mxu0 0
        %654 = vmatpush1.bf16.msra.mxu0 %v550
        %655 = vmatprep.subr.bf16.mxu0 0
        %656 = vmatpush1.bf16.msra.mxu0 %v551
        %657 = vmatprep.subr.bf16.mxu0 0
        %658 = vmatpush1.bf16.msra.mxu0 0
        %659 = vmatprep.subr.bf16.mxu0 0
        %660 = vmatpush1.bf16.msra.mxu0 0
        %661 = vmatprep.subr.bf16.mxu0 0
        %662 = vmatpush1.bf16.msra.mxu0 0
        %663 = vmatprep.subr.bf16.mxu0 0
        %664 = vmatpush1.bf16.msra.mxu0 0
        %665 = vmatprep.subr.bf16.mxu0 0
        %666 = vmatpush1.bf16.msra.mxu0 0
        %667 = vmatprep.subr.bf16.mxu0 0
        %668 = vmatpush1.bf16.msra.mxu0 0
        %669 = vmatprep.subr.bf16.mxu0 0
        %670 = vmatpush1.bf16.msra.mxu0 0
        %671 = vmatprep.subr.bf16.mxu0 0
        %672 = vmatpush1.bf16.msra.mxu0 0
        %673 = vmatprep.subr.bf16.mxu0 0
        %674 = vmatpush1.bf16.msra.mxu0 0
        %675 = vmatprep.subr.bf16.mxu0 0
        %676 = vmatpush1.bf16.msra.mxu0 0
        %677 = vmatprep.subr.bf16.mxu0 0
        %678 = vmatpush1.bf16.msra.mxu0 0
        %679 = vmatprep.subr.bf16.mxu0 0
        %680 = vmatpush1.bf16.msra.mxu0 0
        %681 = vmatprep.subr.bf16.mxu0 0
        %682 = vmatpush1.bf16.msra.mxu0 0
        %683 = vmatprep.subr.bf16.mxu0 0
        %684 = vmatpush1.bf16.msra.mxu0 0
        %685 = vmatprep.mubr.bf16.mxu0 0
        %686 = vmatmul.mubr.bf16.gmra.mrb[0].mxu0 %v651
        %v687 = vpop.f32.mrb[0].mxu0
        %v688 = vadd.f32 0.0, %v687
        %v689 = vpop.f32.mrb[0].mxu0
        %v690 = vpop.f32.mrb[0].mxu0
        %v691 = vpop.f32.mrb[0].mxu0
        %692 = vdwg.mxu0
        %v693 = vadd.f32 %v513, %v688
        %v694 = vxor.u32 %v693, 2147483648
        %v695 = vmul.f32 %v694, 1.442695
        %v696 = vpow.pop %v695
        %v697 = vadd.f32 %v696, 1.0
        %v698 = vrcp.pop %v697
        %v699 = vmul.f32 1.0, %v698
        %v700 = vtanh.pop %v693
        %v701 = vmul.f32 %v699, %v645
        %703 = vrot.lane.b32.xlu0 %v700, 32
        %v704 = vpop.permute.xlu0 %703
        %v706 = vmul.f32 %v699, %v704
        %708 = vrot.lane.b32.xlu0 %v706, 32
        %v709 = vpop.permute.xlu0 %708
        %v711 = vadd.f32 %v701, %v709
        %v712 = vtanh.pop %v711
        %714 = vrot.lane.b32.xlu0 %v712, 32
        %v715 = vpop.permute.xlu0 %714
        %v717 = vmul.f32 %v699, %v715
        %s718 = sadd.s32 %s534, 1
        %v719 = vstv %s718
        %vm720 = vcmp.gt.s32.totalorder %v528, %v719
        %v721 = vsel %vm720, 1, 0
        %722 = vset.pattern.permute.xlu0 0
        %723 = vperm.xlu0 %722, %v721
        %v724 = vpop.permute.xlu0 %723
        %vm725 = vcmp.eq.s32.totalorder %v724, 1
        %v726 = vsel %vm725, %v717, 0.0
        %728 = vrot.lane.b32.xlu0 %v726, 64
        %v729 = vpop.permute.xlu0 %728
        %s731 = scalar_lea.vmem %s424, 8
        %732 = vst.msk [vmem:[%s731] sm:$0xff] %vm554, %v729
        %v733 = vsel %vm725, %v717, %v644
        %v734 = vsel %vm725, %v711, %v645
        %v735 = vpack.c.bf16 %v733, %v733
        %737 = vrot.lane.b32.xlu0 %v735, 64
        %v738 = vpop.permute.xlu0 %737
        %v740 = vsel %vm554, %v738, 0
        %742 = vmatprep.subr.bf16.mxu0 0
        %743 = vmatpush1.bf16.msra.mxu0 %v550
        %744 = vmatprep.subr.bf16.mxu0 0
        %745 = vmatpush1.bf16.msra.mxu0 %v551
        %746 = vmatprep.subr.bf16.mxu0 0
        %747 = vmatpush1.bf16.msra.mxu0 0
        %748 = vmatprep.subr.bf16.mxu0 0
        %749 = vmatpush1.bf16.msra.mxu0 0
        %750 = vmatprep.subr.bf16.mxu0 0
        %751 = vmatpush1.bf16.msra.mxu0 0
        %752 = vmatprep.subr.bf16.mxu0 0
        %753 = vmatpush1.bf16.msra.mxu0 0
        %754 = vmatprep.subr.bf16.mxu0 0
        %755 = vmatpush1.bf16.msra.mxu0 0
        %756 = vmatprep.subr.bf16.mxu0 0
        %757 = vmatpush1.bf16.msra.mxu0 0
        %758 = vmatprep.subr.bf16.mxu0 0
        %759 = vmatpush1.bf16.msra.mxu0 0
        %760 = vmatprep.subr.bf16.mxu0 0
        %761 = vmatpush1.bf16.msra.mxu0 0
        %762 = vmatprep.subr.bf16.mxu0 0
        %763 = vmatpush1.bf16.msra.mxu0 0
        %764 = vmatprep.subr.bf16.mxu0 0
        %765 = vmatpush1.bf16.msra.mxu0 0
        %766 = vmatprep.subr.bf16.mxu0 0
        %767 = vmatpush1.bf16.msra.mxu0 0
        %768 = vmatprep.subr.bf16.mxu0 0
        %769 = vmatpush1.bf16.msra.mxu0 0
        %770 = vmatprep.subr.bf16.mxu0 0
        %771 = vmatpush1.bf16.msra.mxu0 0
        %772 = vmatprep.subr.bf16.mxu0 0
        %773 = vmatpush1.bf16.msra.mxu0 0
        %774 = vmatprep.mubr.bf16.mxu0 0
        %775 = vmatmul.mubr.bf16.gmra.mrb[0].mxu0 %v740
        %v776 = vpop.f32.mrb[0].mxu0
        %v777 = vadd.f32 0.0, %v776
        %v778 = vpop.f32.mrb[0].mxu0
        %v779 = vpop.f32.mrb[0].mxu0
        %v780 = vpop.f32.mrb[0].mxu0
        %781 = vdwg.mxu0
        %v782 = vadd.f32 %v518, %v777
        %v783 = vxor.u32 %v782, 2147483648
        %v784 = vmul.f32 %v783, 1.442695
        %v785 = vpow.pop %v784
        %v786 = vadd.f32 %v785, 1.0
        %v787 = vrcp.pop %v786
        %v788 = vmul.f32 1.0, %v787
        %v789 = vtanh.pop %v782
        %v790 = vmul.f32 %v788, %v734
        %792 = vrot.lane.b32.xlu0 %v789, 32
        %v793 = vpop.permute.xlu0 %792
        %v795 = vmul.f32 %v788, %v793
        %797 = vrot.lane.b32.xlu0 %v795, 32
        %v798 = vpop.permute.xlu0 %797
        %v800 = vadd.f32 %v790, %v798
        %v801 = vtanh.pop %v800
        %803 = vrot.lane.b32.xlu0 %v801, 32
        %v804 = vpop.permute.xlu0 %803
        %v806 = vmul.f32 %v788, %v804
        %s807 = sadd.s32 %s534, 2
        %v808 = vstv %s807
        %vm809 = vcmp.gt.s32.totalorder %v528, %v808
        %v810 = vsel %vm809, 1, 0
        %811 = vset.pattern.permute.xlu0 0
        %812 = vperm.xlu0 %811, %v810
        %v813 = vpop.permute.xlu0 %812
        %vm814 = vcmp.eq.s32.totalorder %v813, 1
        %v815 = vsel %vm814, %v806, 0.0
        %817 = vrot.lane.b32.xlu0 %v815, 64
        %v818 = vpop.permute.xlu0 %817
        %s820 = scalar_lea.vmem %s424, 16
        %821 = vst.msk [vmem:[%s820] sm:$0xff] %vm554, %v818
        %v822 = vsel %vm814, %v806, %v733
        %v823 = vsel %vm814, %v800, %v734
        %v824 = vpack.c.bf16 %v822, %v822
        %826 = vrot.lane.b32.xlu0 %v824, 64
        %v827 = vpop.permute.xlu0 %826
        %v829 = vsel %vm554, %v827, 0
        %831 = vmatprep.subr.bf16.mxu0 0
        %832 = vmatpush1.bf16.msra.mxu0 %v550
        %833 = vmatprep.subr.bf16.mxu0 0
        %834 = vmatpush1.bf16.msra.mxu0 %v551
        %835 = vmatprep.subr.bf16.mxu0 0
        %836 = vmatpush1.bf16.msra.mxu0 0
        %837 = vmatprep.subr.bf16.mxu0 0
        %838 = vmatpush1.bf16.msra.mxu0 0
        %839 = vmatprep.subr.bf16.mxu0 0
        %840 = vmatpush1.bf16.msra.mxu0 0
        %841 = vmatprep.subr.bf16.mxu0 0
        %842 = vmatpush1.bf16.msra.mxu0 0
        %843 = vmatprep.subr.bf16.mxu0 0
        %844 = vmatpush1.bf16.msra.mxu0 0
        %845 = vmatprep.subr.bf16.mxu0 0
        %846 = vmatpush1.bf16.msra.mxu0 0
        %847 = vmatprep.subr.bf16.mxu0 0
        %848 = vmatpush1.bf16.msra.mxu0 0
        %849 = vmatprep.subr.bf16.mxu0 0
        %850 = vmatpush1.bf16.msra.mxu0 0
        %851 = vmatprep.subr.bf16.mxu0 0
        %852 = vmatpush1.bf16.msra.mxu0 0
        %853 = vmatprep.subr.bf16.mxu0 0
        %854 = vmatpush1.bf16.msra.mxu0 0
        %855 = vmatprep.subr.bf16.mxu0 0
        %856 = vmatpush1.bf16.msra.mxu0 0
        %857 = vmatprep.subr.bf16.mxu0 0
        %858 = vmatpush1.bf16.msra.mxu0 0
        %859 = vmatprep.subr.bf16.mxu0 0
        %860 = vmatpush1.bf16.msra.mxu0 0
        %861 = vmatprep.subr.bf16.mxu0 0
        %862 = vmatpush1.bf16.msra.mxu0 0
        %863 = vmatprep.mubr.bf16.mxu0 0
        %864 = vmatmul.mubr.bf16.gmra.mrb[0].mxu0 %v829
        %v865 = vpop.f32.mrb[0].mxu0
        %v866 = vadd.f32 0.0, %v865
        %v867 = vpop.f32.mrb[0].mxu0
        %v868 = vpop.f32.mrb[0].mxu0
        %v869 = vpop.f32.mrb[0].mxu0
        %870 = vdwg.mxu0
        %v871 = vadd.f32 %v521, %v866
        %v872 = vxor.u32 %v871, 2147483648
        %v873 = vmul.f32 %v872, 1.442695
        %v874 = vpow.pop %v873
        %v875 = vadd.f32 %v874, 1.0
        %v876 = vrcp.pop %v875
        %v877 = vmul.f32 1.0, %v876
        %v878 = vtanh.pop %v871
        %v879 = vmul.f32 %v877, %v823
        %881 = vrot.lane.b32.xlu0 %v878, 32
        %v882 = vpop.permute.xlu0 %881
        %v884 = vmul.f32 %v877, %v882
        %886 = vrot.lane.b32.xlu0 %v884, 32
        %v887 = vpop.permute.xlu0 %886
        %v889 = vadd.f32 %v879, %v887
        %v890 = vtanh.pop %v889
        %892 = vrot.lane.b32.xlu0 %v890, 32
        %v893 = vpop.permute.xlu0 %892
        %v895 = vmul.f32 %v877, %v893
        %s896 = sadd.s32 %s534, 3
        %v897 = vstv %s896
        %vm898 = vcmp.gt.s32.totalorder %v528, %v897
        %v899 = vsel %vm898, 1, 0
        %900 = vset.pattern.permute.xlu0 0
        %901 = vperm.xlu0 %900, %v899
        %v902 = vpop.permute.xlu0 %901
        %vm903 = vcmp.eq.s32.totalorder %v902, 1
        %v904 = vsel %vm903, %v895, 0.0
        %906 = vrot.lane.b32.xlu0 %v904, 64
        %v907 = vpop.permute.xlu0 %906
        %s909 = scalar_lea.vmem %s424, 24
        %910 = vst.msk [vmem:[%s909] sm:$0xff] %vm554, %v907
        %v911 = vsel %vm903, %v895, %v822
        %v912 = vsel %vm903, %v889, %v823
        %914 = vrot.lane.b32.xlu0 %v911, 64
        %v915 = vpop.permute.xlu0 %914
        %917 = vst.msk [vmem:[#allocation2] sm:$0xff] %vm554, %v915
        %919 = vrot.lane.b32.xlu0 %v912, 96
        %v920 = vpop.permute.xlu0 %919
        %922 = vst.msk [vmem:[#allocation3] sm:$0xff] %vm554, %v920
      $region48: #{encoder_forward.2} parent=39 // pred_fallthru
        _
      %p923 = scmp.eq.s32.totalorder %s23, 1
      // Predicated region
      $region49: #{encoder_forward.2} parent=39 // pred_check
        %p924 = pneg %p923
      $region50: #{encoder_forward.2} parent=39 // pred_check_branch
        %926 = sbr.rel (%p924) target = $region52
      $region51: #{encoder_forward.2} parent=39 // pred_region
        %v927 = vld [vmem:[#allocation2] sm:$0xff]
        %v928 = vld [vmem:[#allocation3] sm:$0xff]
        %v929 = vpack.c.bf16 %v927, %v927
        %v934 = vunpack.c.l.b16 %v524
        %v935 = vunpack.c.l.b16 %v525
        %v936 = vunpack.c.l.b16 %v526
        %v937 = vunpack.c.l.b16 %v527
        %v938 = vpack.c.b16 %v935, %v934
        %v939 = vpack.c.b16 %v937, %v936
        %vm942 = vcmask 261120
        %v944 = vsel %vm942, %v929, 0
        %946 = vmatprep.subr.bf16.mxu0 0
        %947 = vmatpush1.bf16.msra.mxu0 %v938
        %948 = vmatprep.subr.bf16.mxu0 0
        %949 = vmatpush1.bf16.msra.mxu0 %v939
        %950 = vmatprep.subr.bf16.mxu0 0
        %951 = vmatpush1.bf16.msra.mxu0 0
        %952 = vmatprep.subr.bf16.mxu0 0
        %953 = vmatpush1.bf16.msra.mxu0 0
        %954 = vmatprep.subr.bf16.mxu0 0
        %955 = vmatpush1.bf16.msra.mxu0 0
        %956 = vmatprep.subr.bf16.mxu0 0
        %957 = vmatpush1.bf16.msra.mxu0 0
        %958 = vmatprep.subr.bf16.mxu0 0
        %959 = vmatpush1.bf16.msra.mxu0 0
        %960 = vmatprep.subr.bf16.mxu0 0
        %961 = vmatpush1.bf16.msra.mxu0 0
        %962 = vmatprep.subr.bf16.mxu0 0
        %963 = vmatpush1.bf16.msra.mxu0 0
        %964 = vmatprep.subr.bf16.mxu0 0
        %965 = vmatpush1.bf16.msra.mxu0 0
        %966 = vmatprep.subr.bf16.mxu0 0
        %967 = vmatpush1.bf16.msra.mxu0 0
        %968 = vmatprep.subr.bf16.mxu0 0
        %969 = vmatpush1.bf16.msra.mxu0 0
        %970 = vmatprep.subr.bf16.mxu0 0
        %971 = vmatpush1.bf16.msra.mxu0 0
        %972 = vmatprep.subr.bf16.mxu0 0
        %973 = vmatpush1.bf16.msra.mxu0 0
        %974 = vmatprep.subr.bf16.mxu0 0
        %975 = vmatpush1.bf16.msra.mxu0 0
        %976 = vmatprep.subr.bf16.mxu0 0
        %977 = vmatpush1.bf16.msra.mxu0 0
        %978 = vmatprep.mubr.bf16.mxu0 0
        %979 = vmatmul.mubr.bf16.gmra.mrb[0].mxu0 %v944
        %v980 = vpop.f32.mrb[0].mxu0
        %v981 = vadd.f32 0.0, %v980
        %v982 = vpop.f32.mrb[0].mxu0
        %v983 = vpop.f32.mrb[0].mxu0
        %v984 = vpop.f32.mrb[0].mxu0
        %985 = vdwg.mxu0
        %v986 = vadd.f32 %v521, %v981
        %v987 = vxor.u32 %v986, 2147483648
        %v988 = vmul.f32 %v987, 1.442695
        %v989 = vpow.pop %v988
        %v990 = vadd.f32 %v989, 1.0
        %v991 = vrcp.pop %v990
        %v992 = vmul.f32 1.0, %v991
        %v993 = vtanh.pop %v986
        %995 = vrot.lane.b32.xlu0 %v928, 32
        %v996 = vpop.permute.xlu0 %995
        %v998 = vmul.f32 %v992, %v996
        %1000 = vrot.lane.b32.xlu0 %v993, 32
        %v1001 = vpop.permute.xlu0 %1000
        %v1003 = vmul.f32 %v992, %v1001
        %1005 = vrot.lane.b32.xlu0 %v1003, 32
        %v1006 = vpop.permute.xlu0 %1005
        %v1008 = vadd.f32 %v998, %v1006
        %v1009 = vtanh.pop %v1008
        %1011 = vrot.lane.b32.xlu0 %v1009, 32
        %v1012 = vpop.permute.xlu0 %1011
        %v1014 = vmul.f32 %v992, %v1012
        %s1015 = sadd.s32 %s534, 3
        %v1016 = vstv %s1015
        %vm1017 = vcmp.gt.s32.totalorder %v528, %v1016
        %v1018 = vsel %vm1017, 1, 0
        %1019 = vset.pattern.permute.xlu0 0
        %1020 = vperm.xlu0 %1019, %v1018
        %v1021 = vpop.permute.xlu0 %1020
        %vm1022 = vcmp.eq.s32.totalorder %v1021, 1
        %v1023 = vsel %vm1022, %v1014, 0.0
        %1025 = vrot.lane.b32.xlu0 %v1023, 64
        %v1026 = vpop.permute.xlu0 %1025
        %s1028 = scalar_lea.vmem %s424, 24
        %1029 = vst.msk [vmem:[%s1028] sm:$0xff] %vm942, %v1026
        %1031 = vrot.lane.b32.xlu0 %v927, 64
        %v1032 = vpop.permute.xlu0 %1031
        %v1034 = vsel %vm1022, %v1014, %v1032
        %v1035 = vsel %vm1022, %v1008, %v996
        %v1036 = vpack.c.bf16 %v1034, %v1034
        %1038 = vrot.lane.b32.xlu0 %v1036, 64
        %v1039 = vpop.permute.xlu0 %1038
        %v1041 = vsel %vm942, %v1039, 0
        %1043 = vmatprep.subr.bf16.mxu0 0
        %1044 = vmatpush1.bf16.msra.mxu0 %v938
        %1045 = vmatprep.subr.bf16.mxu0 0
        %1046 = vmatpush1.bf16.msra.mxu0 %v939
        %1047 = vmatprep.subr.bf16.mxu0 0
        %1048 = vmatpush1.bf16.msra.mxu0 0
        %1049 = vmatprep.subr.bf16.mxu0 0
        %1050 = vmatpush1.bf16.msra.mxu0 0
        %1051 = vmatprep.subr.bf16.mxu0 0
        %1052 = vmatpush1.bf16.msra.mxu0 0
        %1053 = vmatprep.subr.bf16.mxu0 0
        %1054 = vmatpush1.bf16.msra.mxu0 0
        %1055 = vmatprep.subr.bf16.mxu0 0
        %1056 = vmatpush1.bf16.msra.mxu0 0
        %1057 = vmatprep.subr.bf16.mxu0 0
        %1058 = vmatpush1.bf16.msra.mxu0 0
        %1059 = vmatprep.subr.bf16.mxu0 0
        %1060 = vmatpush1.bf16.msra.mxu0 0
        %1061 = vmatprep.subr.bf16.mxu0 0
        %1062 = vmatpush1.bf16.msra.mxu0 0
        %1063 = vmatprep.subr.bf16.mxu0 0
        %1064 = vmatpush1.bf16.msra.mxu0 0
        %1065 = vmatprep.subr.bf16.mxu0 0
        %1066 = vmatpush1.bf16.msra.mxu0 0
        %1067 = vmatprep.subr.bf16.mxu0 0
        %1068 = vmatpush1.bf16.msra.mxu0 0
        %1069 = vmatprep.subr.bf16.mxu0 0
        %1070 = vmatpush1.bf16.msra.mxu0 0
        %1071 = vmatprep.subr.bf16.mxu0 0
        %1072 = vmatpush1.bf16.msra.mxu0 0
        %1073 = vmatprep.subr.bf16.mxu0 0
        %1074 = vmatpush1.bf16.msra.mxu0 0
        %1075 = vmatprep.mubr.bf16.mxu0 0
        %1076 = vmatmul.mubr.bf16.gmra.mrb[0].mxu0 %v1041
        %v1077 = vpop.f32.mrb[0].mxu0
        %v1078 = vadd.f32 0.0, %v1077
        %v1079 = vpop.f32.mrb[0].mxu0
        %v1080 = vpop.f32.mrb[0].mxu0
        %v1081 = vpop.f32.mrb[0].mxu0
        %1082 = vdwg.mxu0
        %v1083 = vadd.f32 %v518, %v1078
        %v1084 = vxor.u32 %v1083, 2147483648
        %v1085 = vmul.f32 %v1084, 1.442695
        %v1086 = vpow.pop %v1085
        %v1087 = vadd.f32 %v1086, 1.0
        %v1088 = vrcp.pop %v1087
        %v1089 = vmul.f32 1.0, %v1088
        %v1090 = vtanh.pop %v1083
        %v1091 = vmul.f32 %v1089, %v1035
        %1093 = vrot.lane.b32.xlu0 %v1090, 32
        %v1094 = vpop.permute.xlu0 %1093
        %v1096 = vmul.f32 %v1089, %v1094
        %1098 = vrot.lane.b32.xlu0 %v1096, 32
        %v1099 = vpop.permute.xlu0 %1098
        %v1101 = vadd.f32 %v1091, %v1099
        %v1102 = vtanh.pop %v1101
        %1104 = vrot.lane.b32.xlu0 %v1102, 32
        %v1105 = vpop.permute.xlu0 %1104
        %v1107 = vmul.f32 %v1089, %v1105
        %s1108 = sadd.s32 %s534, 2
        %v1109 = vstv %s1108
        %vm1110 = vcmp.gt.s32.totalorder %v528, %v1109
        %v1111 = vsel %vm1110, 1, 0
        %1112 = vset.pattern.permute.xlu0 0
        %1113 = vperm.xlu0 %1112, %v1111
        %v1114 = vpop.permute.xlu0 %1113
        %vm1115 = vcmp.eq.s32.totalorder %v1114, 1
        %v1116 = vsel %vm1115, %v1107, 0.0
        %1118 = vrot.lane.b32.xlu0 %v1116, 64
        %v1119 = vpop.permute.xlu0 %1118
        %s1121 = scalar_lea.vmem %s424, 16
        %1122 = vst.msk [vmem:[%s1121] sm:$0xff] %vm942, %v1119
        %v1123 = vsel %vm1115, %v1107, %v1034
        %v1124 = vsel %vm1115, %v1101, %v1035
        %v1125 = vpack.c.bf16 %v1123, %v1123
        %1127 = vrot.lane.b32.xlu0 %v1125, 64
        %v1128 = vpop.permute.xlu0 %1127
        %v1130 = vsel %vm942, %v1128, 0
        %1132 = vmatprep.subr.bf16.mxu0 0
        %1133 = vmatpush1.bf16.msra.mxu0 %v938
        %1134 = vmatprep.subr.bf16.mxu0 0
        %1135 = vmatpush1.bf16.msra.mxu0 %v939
        %1136 = vmatprep.subr.bf16.mxu0 0
        %1137 = vmatpush1.bf16.msra.mxu0 0
        %1138 = vmatprep.subr.bf16.mxu0 0
        %1139 = vmatpush1.bf16.msra.mxu0 0
        %1140 = vmatprep.subr.bf16.mxu0 0
        %1141 = vmatpush1.bf16.msra.mxu0 0
        %1142 = vmatprep.subr.bf16.mxu0 0
        %1143 = vmatpush1.bf16.msra.mxu0 0
        %1144 = vmatprep.subr.bf16.mxu0 0
        %1145 = vmatpush1.bf16.msra.mxu0 0
        %1146 = vmatprep.subr.bf16.mxu0 0
        %1147 = vmatpush1.bf16.msra.mxu0 0
        %1148 = vmatprep.subr.bf16.mxu0 0
        %1149 = vmatpush1.bf16.msra.mxu0 0
        %1150 = vmatprep.subr.bf16.mxu0 0
        %1151 = vmatpush1.bf16.msra.mxu0 0
        %1152 = vmatprep.subr.bf16.mxu0 0
        %1153 = vmatpush1.bf16.msra.mxu0 0
        %1154 = vmatprep.subr.bf16.mxu0 0
        %1155 = vmatpush1.bf16.msra.mxu0 0
        %1156 = vmatprep.subr.bf16.mxu0 0
        %1157 = vmatpush1.bf16.msra.mxu0 0
        %1158 = vmatprep.subr.bf16.mxu0 0
        %1159 = vmatpush1.bf16.msra.mxu0 0
        %1160 = vmatprep.subr.bf16.mxu0 0
        %1161 = vmatpush1.bf16.msra.mxu0 0
        %1162 = vmatprep.subr.bf16.mxu0 0
        %1163 = vmatpush1.bf16.msra.mxu0 0
        %1164 = vmatprep.mubr.bf16.mxu0 0
        %1165 = vmatmul.mubr.bf16.gmra.mrb[0].mxu0 %v1130
        %v1166 = vpop.f32.mrb[0].mxu0
        %v1167 = vadd.f32 0.0, %v1166
        %v1168 = vpop.f32.mrb[0].mxu0
        %v1169 = vpop.f32.mrb[0].mxu0
        %v1170 = vpop.f32.mrb[0].mxu0
        %1171 = vdwg.mxu0
        %v1172 = vadd.f32 %v513, %v1167
        %v1173 = vxor.u32 %v1172, 2147483648
        %v1174 = vmul.f32 %v1173, 1.442695
        %v1175 = vpow.pop %v1174
        %v1176 = vadd.f32 %v1175, 1.0
        %v1177 = vrcp.pop %v1176
        %v1178 = vmul.f32 1.0, %v1177
        %v1179 = vtanh.pop %v1172
        %v1180 = vmul.f32 %v1178, %v1124
        %1182 = vrot.lane.b32.xlu0 %v1179, 32
        %v1183 = vpop.permute.xlu0 %1182
        %v1185 = vmul.f32 %v1178, %v1183
        %1187 = vrot.lane.b32.xlu0 %v1185, 32
        %v1188 = vpop.permute.xlu0 %1187
        %v1190 = vadd.f32 %v1180, %v1188
        %v1191 = vtanh.pop %v1190
        %1193 = vrot.lane.b32.xlu0 %v1191, 32
        %v1194 = vpop.permute.xlu0 %1193
        %v1196 = vmul.f32 %v1178, %v1194
        %s1197 = sadd.s32 %s534, 1
        %v1198 = vstv %s1197
        %vm1199 = vcmp.gt.s32.totalorder %v528, %v1198
        %v1200 = vsel %vm1199, 1, 0
        %1201 = vset.pattern.permute.xlu0 0
        %1202 = vperm.xlu0 %1201, %v1200
        %v1203 = vpop.permute.xlu0 %1202
        %vm1204 = vcmp.eq.s32.totalorder %v1203, 1
        %v1205 = vsel %vm1204, %v1196, 0.0
        %1207 = vrot.lane.b32.xlu0 %v1205, 64
        %v1208 = vpop.permute.xlu0 %1207
        %s1210 = scalar_lea.vmem %s424, 8
        %1211 = vst.msk [vmem:[%s1210] sm:$0xff] %vm942, %v1208
        %v1212 = vsel %vm1204, %v1196, %v1123
        %v1213 = vsel %vm1204, %v1190, %v1124
        %v1214 = vpack.c.bf16 %v1212, %v1212
        %1216 = vrot.lane.b32.xlu0 %v1214, 64
        %v1217 = vpop.permute.xlu0 %1216
        %v1219 = vsel %vm942, %v1217, 0
        %1221 = vmatprep.subr.bf16.mxu0 0
        %1222 = vmatpush1.bf16.msra.mxu0 %v938
        %1223 = vmatprep.subr.bf16.mxu0 0
        %1224 = vmatpush1.bf16.msra.mxu0 %v939
        %1225 = vmatprep.subr.bf16.mxu0 0
        %1226 = vmatpush1.bf16.msra.mxu0 0
        %1227 = vmatprep.subr.bf16.mxu0 0
        %1228 = vmatpush1.bf16.msra.mxu0 0
        %1229 = vmatprep.subr.bf16.mxu0 0
        %1230 = vmatpush1.bf16.msra.mxu0 0
        %1231 = vmatprep.subr.bf16.mxu0 0
        %1232 = vmatpush1.bf16.msra.mxu0 0
        %1233 = vmatprep.subr.bf16.mxu0 0
        %1234 = vmatpush1.bf16.msra.mxu0 0
        %1235 = vmatprep.subr.bf16.mxu0 0
        %1236 = vmatpush1.bf16.msra.mxu0 0
        %1237 = vmatprep.subr.bf16.mxu0 0
        %1238 = vmatpush1.bf16.msra.mxu0 0
        %1239 = vmatprep.subr.bf16.mxu0 0
        %1240 = vmatpush1.bf16.msra.mxu0 0
        %1241 = vmatprep.subr.bf16.mxu0 0
        %1242 = vmatpush1.bf16.msra.mxu0 0
        %1243 = vmatprep.subr.bf16.mxu0 0
        %1244 = vmatpush1.bf16.msra.mxu0 0
        %1245 = vmatprep.subr.bf16.mxu0 0
        %1246 = vmatpush1.bf16.msra.mxu0 0
        %1247 = vmatprep.subr.bf16.mxu0 0
        %1248 = vmatpush1.bf16.msra.mxu0 0
        %1249 = vmatprep.subr.bf16.mxu0 0
        %1250 = vmatpush1.bf16.msra.mxu0 0
        %1251 = vmatprep.subr.bf16.mxu0 0
        %1252 = vmatpush1.bf16.msra.mxu0 0
        %1253 = vmatprep.mubr.bf16.mxu0 0
        %1254 = vmatmul.mubr.bf16.gmra.mrb[0].mxu0 %v1219
        %v1255 = vpop.f32.mrb[0].mxu0
        %v1256 = vadd.f32 0.0, %v1255
        %v1257 = vpop.f32.mrb[0].mxu0
        %v1258 = vpop.f32.mrb[0].mxu0
        %v1259 = vpop.f32.mrb[0].mxu0
        %1260 = vdwg.mxu0
        %v1261 = vadd.f32 %v510, %v1256
        %v1262 = vxor.u32 %v1261, 2147483648
        %v1263 = vmul.f32 %v1262, 1.442695
        %v1264 = vpow.pop %v1263
        %v1265 = vadd.f32 %v1264, 1.0
        %v1266 = vrcp.pop %v1265
        %v1267 = vmul.f32 1.0, %v1266
        %v1268 = vtanh.pop %v1261
        %v1269 = vmul.f32 %v1267, %v1213
        %1271 = vrot.lane.b32.xlu0 %v1268, 32
        %v1272 = vpop.permute.xlu0 %1271
        %v1274 = vmul.f32 %v1267, %v1272
        %1276 = vrot.lane.b32.xlu0 %v1274, 32
        %v1277 = vpop.permute.xlu0 %1276
        %v1279 = vadd.f32 %v1269, %v1277
        %v1280 = vtanh.pop %v1279
        %1282 = vrot.lane.b32.xlu0 %v1280, 32
        %v1283 = vpop.permute.xlu0 %1282
        %v1285 = vmul.f32 %v1267, %v1283
        %v1286 = vstv %s534
        %vm1287 = vcmp.gt.s32.totalorder %v528, %v1286
        %v1288 = vsel %vm1287, 1, 0
        %1289 = vset.pattern.permute.xlu0 0
        %1290 = vperm.xlu0 %1289, %v1288
        %v1291 = vpop.permute.xlu0 %1290
        %vm1292 = vcmp.eq.s32.totalorder %v1291, 1
        %v1293 = vsel %vm1292, %v1285, 0.0
        %1295 = vrot.lane.b32.xlu0 %v1293, 64
        %v1296 = vpop.permute.xlu0 %1295
        %1298 = vst.msk [vmem:[%s424] sm:$0xff] %vm942, %v1296
        %v1299 = vsel %vm1292, %v1285, %v1212
        %v1300 = vsel %vm1292, %v1279, %v1213
        %1302 = vrot.lane.b32.xlu0 %v1299, 64
        %v1303 = vpop.permute.xlu0 %1302
        %1305 = vst.msk [vmem:[#allocation2] sm:$0xff] %vm942, %v1303
        %1307 = vrot.lane.b32.xlu0 %v1300, 96
        %v1308 = vpop.permute.xlu0 %1307
        %1310 = vst.msk [vmem:[#allocation3] sm:$0xff] %vm942, %v1308
      $region52: #{encoder_forward.2} parent=39 // pred_fallthru
        _
      %p1311 = scmp.eq.s32.totalorder %s24, 1
      // Predicated region
      $region53: #{encoder_forward.2} parent=39 // pred_check
        %p1312 = pneg %p1311
      $region54: #{encoder_forward.2} parent=39 // pred_check_branch
        %1314 = sbr.rel (%p1312) target = $region56
      $region55: #{encoder_forward.2} parent=39 // pred_region
        %v1315 = vld [vmem:[#allocation2] sm:$0xff]
        %vm1316 = vcmask 261120
        %1317 = vst.msk [vmem:[%s434] sm:$0xff] %vm1316, %v1315
        %v1318 = vld [vmem:[#allocation3] sm:$0xff]
        %1319 = vst.msk [vmem:[%s438] sm:$0xff] %vm1316, %v1318
      $region56: #{encoder_forward.2} parent=39 // pred_fallthru
        _
      %s1320 = ssub.s32 1, %s23
      %s1321 = smul.u32 %s1320, %s24
      %s1322 = ssub.s32 1, %s24
      %s1323 = smul.u32 %s23, %s1322
      %s1324 = sadd.s32 %s1321, %s1323
      %s1325 = smul.u32 4, %s1324
      %p1326 = scmp.lt.s32.totalorder %s23, 1
      %s1327 = scalar_select %p1326, %s23, 1
      %p1328 = scmp.lt.s32.totalorder %s1325, 7
      %s1329 = scalar_select %p1328, %s1325, 7
      %s1330 = smul.addr %s1327, 8
      %s1331 = sadd.s32 %s1329, %s1330
      %s1332 = smul.addr %s1331, 8
      %s1333 = scalar_lea.vmem %s5, %s1332
      %p1334 = scmp.lt.s32.totalorder %s23, 1
      %s1335 = scalar_select %p1334, %s23, 1
      %s1336 = smul.addr %s1335, 8
      %s1337 = scalar_lea.vmem %s6, %s1336
      %p1338 = scmp.lt.s32.totalorder %s23, 1
      %s1339 = scalar_select %p1338, %s23, 1
      %s1340 = smul.addr %s1339, 8
      %s1341 = scalar_lea.vmem %s7, %s1340
      // Predicated region
      $region57: #{encoder_forward.2} parent=39 // pred_check
        %p1342 = pneg %p196
      $region58: #{encoder_forward.2} parent=39 // pred_check_branch
        %1344 = sbr.rel (%p1342) target = $region60
      $region59: #{encoder_forward.2} parent=39 // pred_region
        %s1345 = ssub.s32 1, %s23
        %s1346 = smul.u32 %s1345, %s24
        %s1347 = ssub.s32 1, %s24
        %s1348 = smul.u32 %s23, %s1347
        %s1349 = sadd.s32 %s1346, %s1348
        %s1350 = smul.u32 4, %s1349
      $region60: #{encoder_forward.2} parent=39 // pred_fallthru
        _
      // Predicated region
      $region61: #{encoder_forward.2} parent=39 // pred_check
        %p1351 = pneg %p222
      $region62: #{encoder_forward.2} parent=39 // pred_check_branch
        %1353 = sbr.rel (%p1351) target = $region64
      $region63: #{encoder_forward.2} parent=39 // pred_region
        _
      $region64: #{encoder_forward.2} parent=39 // pred_fallthru
        _
      // Predicated region
      $region65: #{encoder_forward.2} parent=39 // pred_check
        %p1354 = pneg %p248
      $region66: #{encoder_forward.2} parent=39 // pred_check_branch
        %1356 = sbr.rel (%p1354) target = $region68
      $region67: #{encoder_forward.2} parent=39 // pred_region
        _
      $region68: #{encoder_forward.2} parent=39 // pred_fallthru
        _
    $region40: #{encoder_forward.2} parent=5 // pred_fallthru
      _
    %p1357 = scmp.le.s32.totalorder 2, %s14
    // Predicated region
    $region69: #{encoder_forward.2} parent=5 // pred_check
      %p1358 = pneg %p1357
    $region70: #{encoder_forward.2} parent=5 // pred_check_branch
      %1360 = sbr.rel (%p1358) target = $region72
    $region71: #{encoder_forward.2} parent=5 // pred_region
      %s1361 = ssub.s32 %s14, 2
      // Predicated region
      $region73: #{encoder_forward.2} parent=71 // pred_check
        %p1362 = pneg %p202
      $region74: #{encoder_forward.2} parent=71 // pred_check_branch
        %1364 = sbr.rel (%p1362) target = $region76
      $region75: #{encoder_forward.2} parent=71 // pred_region
        %s1365 = ssub.s32 1, %s25
        %s1366 = smul.u32 %s1365, %s26
        %s1367 = ssub.s32 1, %s26
        %s1368 = smul.u32 %s25, %s1367
        %s1369 = sadd.s32 %s1366, %s1368
        %s1370 = smul.u32 4, %s1369
        %p1371 = scmp.lt.s32.totalorder %s25, 1
        %s1372 = scalar_select %p1371, %s25, 1
        %p1373 = scmp.lt.s32.totalorder %s1370, 7
        %s1374 = scalar_select %p1373, %s1370, 7
        %s1375 = smul.addr %s1372, 8
        %s1376 = sadd.s32 %s1374, %s1375
        %s1377 = smul.addr %s1376, 8
        %s1378 = scalar_lea.vmem %s5, %s1377
      $region76: #{encoder_forward.2} parent=71 // pred_fallthru
        _
      // Predicated region
      $region77: #{encoder_forward.2} parent=71 // pred_check
        %p1379 = pneg %p228
      $region78: #{encoder_forward.2} parent=71 // pred_check_branch
        %1381 = sbr.rel (%p1379) target = $region80
      $region79: #{encoder_forward.2} parent=71 // pred_region
        %p1382 = scmp.lt.s32.totalorder %s25, 1
        %s1383 = scalar_select %p1382, %s25, 1
        %s1384 = smul.addr %s1383, 8
        %s1385 = scalar_lea.vmem %s6, %s1384
      $region80: #{encoder_forward.2} parent=71 // pred_fallthru
        _
      // Predicated region
      $region81: #{encoder_forward.2} parent=71 // pred_check
        %p1386 = pneg %p254
      $region82: #{encoder_forward.2} parent=71 // pred_check_branch
        %1388 = sbr.rel (%p1386) target = $region84
      $region83: #{encoder_forward.2} parent=71 // pred_region
        %p1389 = scmp.lt.s32.totalorder %s25, 1
        %s1390 = scalar_select %p1389, %s25, 1
        %s1391 = smul.addr %s1390, 8
        %s1392 = scalar_lea.vmem %s7, %s1391
      $region84: #{encoder_forward.2} parent=71 // pred_fallthru
        _
    $region72: #{encoder_forward.2} parent=5 // pred_fallthru
      _
  $region6: #{encoder_forward.2} parent=0 // loop_footer
    %s18 = sadd.s32 1, %s14
  $region7: #{encoder_forward.2} parent=0 // loop_footer_branch
    %13 = sbr.rel target = $region3
  $region8: #{encoder_forward.2} parent=0 // loop_exit
    _

</llo_original>
